<compile_context>
chip_gen: v7x
topology: tpu7x:2x2x1
jax: 0.10.0
libtpu: 0.0.40
codegen_flags: <defaults>
</compile_context>

<pallas_src>
import jax
import jax.numpy as jnp
from jax.experimental import pallas as pl
from jax.experimental.pallas import tpu as pltpu  # noqa: F401  (kept for TPU-specific params if needed)

# ---------------- config (small synthetic shapes) ----------------
B, S, D = 2, 16, 32          # batch, seq, hidden
H, DH = 4, 8                 # heads, head dim
L = 2                        # encoder layers
D_FF = 64                    # intermediate size
VOCAB = 50
MAX_POS = S + 4
NUM_LABELS = 2
LN_EPS = 1e-5
N = B * S                    # flattened token count


# ---------------- fused forward kernel (single invocation, whole batch) ----------------
def _fused_forward_kernel(
    blend_ref, bias_ref,                          # (B,S,S) blend matrix, (B,S,S) additive attn bias
    emb_ref, posemb_ref, type_ref,                # (B,S,D) word emb, (N,D) pos emb, (1,D) token-type
    embln_g_ref, embln_b_ref,                     # embedding LayerNorm
    wqkv_ref, bqkv_ref, wo_ref, bo_ref,           # attention weights (stacked over layers)
    ln1_g_ref, ln1_b_ref,
    wi_ref, bi_ref, wf_ref, bf_ref,               # FFN weights
    ln2_g_ref, ln2_b_ref,
    cls_w1_ref, cls_b1_ref, cls_w2_ref, cls_b2_ref,
    prob_ref, hidden_ref, atten_ref,              # outputs: (B,2), (N,(L+1)*D), (B,S,L*H*S)
):
    f32 = jnp.float32

    def layer_norm(h, g, b):
        mu = jnp.mean(h, axis=-1, keepdims=True)
        d = h - mu
        var = jnp.mean(d * d, axis=-1, keepdims=True)
        return d * jax.lax.rsqrt(var + LN_EPS) * g + b

    # ---- node -> token masked-average blend: one batched matmul over the whole batch ----
    # blend[b] = diag(~nodes_mask[b]) + normalized nodes_to_token_mask[b]  (built in wrapper)
    blended = jax.lax.dot_general(
        blend_ref[...], emb_ref[...],
        dimension_numbers=(((2,), (1,)), ((0,), (0,))),
        preferred_element_type=f32)                               # (B,S,D)

    # ---- RoBERTa-style embeddings: blended + position + token_type, LayerNorm ----
    x = blended.reshape(N, D) + posemb_ref[...] + type_ref[...]   # (N,D)
    x = layer_norm(x, embln_g_ref[...], embln_b_ref[...])
    hidden_ref[:, 0:D] = x

    bias = bias_ref[...]                                          # (B,S,S), (1-mask)*-1e4
    scale = 1.0 / (DH ** 0.5)

    # ---- transformer layers (statically unrolled) ----
    for li in range(L):
        # fused QKV projection for all B*S tokens: one (N,D)x(D,3D) matmul
        qkv = (jnp.dot(x, wqkv_ref[li], preferred_element_type=f32)
               + bqkv_ref[li]).reshape(B, S, 3 * D)               # (B,S,3D)

        ctx_heads = []
        for h in range(H):
            qh = qkv[:, :, h * DH:(h + 1) * DH]                   # (B,S,DH)
            kh = qkv[:, :, D + h * DH:D + (h + 1) * DH]           # (B,S,DH)
            vh = qkv[:, :, 2 * D + h * DH:2 * D + (h + 1) * DH]   # (B,S,DH)
            # batched over B: 'bqd,bkd->bqk'
            scores = jax.lax.dot_general(
                qh, kh, dimension_numbers=(((2,), (2,)), ((0,), (0,))),
                preferred_element_type=f32) * scale + bias        # (B,S,S)
            m = jnp.max(scores, axis=-1, keepdims=True)
            e = jnp.exp(scores - m)
            p = e / jnp.sum(e, axis=-1, keepdims=True)            # exact softmax
            idx = li * H + h
            atten_ref[:, :, idx * S:(idx + 1) * S] = p            # lane-dense packed store
            # 'bqk,bkd->bqd'
            ctx_heads.append(jax.lax.dot_general(
                p, vh, dimension_numbers=(((2,), (1,)), ((0,), (0,))),
                preferred_element_type=f32))                      # (B,S,DH)
        ctx = jnp.concatenate(ctx_heads, axis=-1).reshape(N, D)   # (N,D)

        attn_out = jnp.dot(ctx, wo_ref[li], preferred_element_type=f32) + bo_ref[li]
        x1 = layer_norm(attn_out + x, ln1_g_ref[li], ln1_b_ref[li])

        inter = jax.nn.gelu(
            jnp.dot(x1, wi_ref[li], preferred_element_type=f32) + bi_ref[li],
            approximate=True)                                     # TODO(synk): HF RoBERTa uses exact erf GELU
        ffn_out = jnp.dot(inter, wf_ref[li], preferred_element_type=f32) + bf_ref[li]
        x = layer_norm(ffn_out + x1, ln2_g_ref[li], ln2_b_ref[li])
        hidden_ref[:, (li + 1) * D:(li + 2) * D] = x

    # ---- classification head on CLS token of each example, logits -> sigmoid ----
    cls = jnp.concatenate([x[b * S:b * S + 1, :] for b in range(B)], axis=0)   # (B,D)
    hcls = jnp.tanh(jnp.dot(cls, cls_w1_ref[...], preferred_element_type=f32) + cls_b1_ref[...])
    logits = jnp.dot(hcls, cls_w2_ref[...], preferred_element_type=f32) + cls_b2_ref[...]
    prob_ref[...] = jax.nn.sigmoid(logits)


def fused_forward(blend, attn_bias, word_emb, pos_emb_flat, p):
    type_row = p["type_emb"][0:1]                                 # (1, D) — token_type_ids == 0

    out_shape = (
        jax.ShapeDtypeStruct((B, NUM_LABELS), jnp.float32),
        jax.ShapeDtypeStruct((N, (L + 1) * D), jnp.float32),      # hidden states, lane-packed
        jax.ShapeDtypeStruct((B, S, L * H * S), jnp.float32),     # attention probs, 128-lane dense
    )

    # Single invocation: no grid, every operand fully resident in VMEM (default specs).
    prob, hidden_packed, atten_packed = pl.pallas_call(
        _fused_forward_kernel,
        out_shape=out_shape,
    )(blend, attn_bias, word_emb, pos_emb_flat, type_row,
      p["emb_ln_g"], p["emb_ln_b"],
      p["wqkv"], p["bqkv"], p["wo"], p["bo"],
      p["ln1_g"], p["ln1_b"], p["wi"], p["bi"], p["wf"], p["bf"],
      p["ln2_g"], p["ln2_b"],
      p["cls_w1"], p["cls_b1"], p["cls_w2"], p["cls_b2"])

    # layout plumbing only (lane-dense kernel outputs -> module's logical shapes)
    hidden = hidden_packed.reshape(B, S, L + 1, D).transpose(0, 2, 1, 3)       # (B, L+1, S, D)
    atten = atten_packed.reshape(B, S, L, H, S).transpose(0, 2, 3, 1, 4)       # (B, L, H, S, S)
    return prob, hidden, atten


# ---------------- forward orchestration (gathers, mask folding + loss stay in JAX) ----------------
def model_forward(params, inputs_ids, attn_mask, position_idx, labels=None):
    attn_mask = attn_mask.astype(jnp.float32)

    # embedding lookups (gather = glue in JAX)
    word_emb = jnp.take(params["word_emb"], inputs_ids, axis=0)                # (B,S,D)
    pos_emb_flat = jnp.take(params["pos_emb"], position_idx, axis=0).reshape(N, D)

    # fold node/token masks + normalisation into a single (B,S,S) blend matrix:
    #   blended = blend @ emb  ==  emb*(~nodes) + (normalized nodes_to_token_mask)@emb
    nodes = (position_idx == 0)
    tokens = (position_idx >= 2)
    nt = (nodes[:, :, None] & tokens[:, None, :]).astype(jnp.float32) * attn_mask
    ntn = nt / (nt.sum(-1, keepdims=True) + 1e-10)
    blend = ntn + jnp.eye(S, dtype=jnp.float32)[None] * (1.0 - nodes.astype(jnp.float32))[:, :, None]

    attn_bias = (1.0 - attn_mask) * -10000.0                                   # additive attention bias

    prob, hidden_outs, atten_outs = fused_forward(blend, attn_bias, word_emb, pos_emb_flat, params)

    if labels is not None:
        labels = labels.astype(jnp.float32)
        p0 = prob[:, 0]
        loss = jnp.log(p0 + 1e-10) * labels + jnp.log(1.0 - p0 + 1e-10) * (1.0 - labels)
        loss = -jnp.mean(loss)
        return loss, prob, hidden_outs, atten_outs
    return prob


# ---------------- deterministic parameter init (packed for the fused kernel) ----------------
def init_params(key):
    def nrm(k, shape, scale=0.02):
        return scale * jax.random.normal(k, shape, dtype=jnp.float32)

    keys = jax.random.split(key, 8 + L)
    wqkv, wo, wi, wf = [], [], [], []
    for li in range(L):
        lk = jax.random.split(keys[8 + li], 6)
        wq, wk, wv = nrm(lk[0], (D, D)), nrm(lk[1], (D, D)), nrm(lk[2], (D, D))
        wqkv.append(jnp.concatenate([wq, wk, wv], axis=1))                     # (D, 3D)
        wo.append(nrm(lk[3], (D, D)))
        wi.append(nrm(lk[4], (D, D_FF)))
        wf.append(nrm(lk[5], (D_FF, D)))

    params = {
        "word_emb": nrm(keys[0], (VOCAB, D)),
        "pos_emb": nrm(keys[1], (MAX_POS, D)),
        "type_emb": nrm(keys[2], (2, D)),
        "emb_ln_g": jnp.ones((1, D), jnp.float32),
        "emb_ln_b": jnp.zeros((1, D), jnp.float32),
        "wqkv": jnp.stack(wqkv),                                               # (L, D, 3D)
        "bqkv": jnp.zeros((L, 1, 3 * D), jnp.float32),
        "wo": jnp.stack(wo), "bo": jnp.zeros((L, 1, D), jnp.float32),
        "ln1_g": jnp.ones((L, 1, D), jnp.float32),
        "ln1_b": jnp.zeros((L, 1, D), jnp.float32),
        "wi": jnp.stack(wi), "bi": jnp.zeros((L, 1, D_FF), jnp.float32),
        "wf": jnp.stack(wf), "bf": jnp.zeros((L, 1, D), jnp.float32),
        "ln2_g": jnp.ones((L, 1, D), jnp.float32),
        "ln2_b": jnp.zeros((L, 1, D), jnp.float32),
        "cls_w1": nrm(keys[3], (D, D)),
        "cls_b1": jnp.zeros((1, D), jnp.float32),
        "cls_w2": nrm(keys[4], (D, NUM_LABELS)),
        "cls_b2": jnp.zeros((1, NUM_LABELS), jnp.float32),
    }
    return params


if __name__ == "__main__":
    root = jax.random.PRNGKey(0)
    k_par, k_ids, k_mask = jax.random.split(root, 3)

    params = init_params(k_par)

    # inputs: token ids, graph-guided attention mask, GraphCodeBERT position idx
    inputs_ids = jax.random.randint(k_ids, (B, S), 0, VOCAB, dtype=jnp.int32)
    # position_idx: tokens get pos+2, DFG nodes get 0, padding gets 1
    pos_row = jnp.concatenate([
        jnp.arange(10, dtype=jnp.int32) + 2,          # 10 code tokens
        jnp.zeros((3,), jnp.int32),                   # 3 graph nodes
        jnp.ones((3,), jnp.int32),                    # 3 padding
    ])
    position_idx = jnp.tile(pos_row[None, :], (B, 1))
    attn_mask = (jax.random.uniform(k_mask, (B, S, S)) > 0.3).astype(jnp.float32)
    attn_mask = jnp.maximum(attn_mask, jnp.eye(S, dtype=jnp.float32)[None])   # self-connections
    labels = jnp.array([1, 0], dtype=jnp.int32)

    fwd = jax.jit(lambda ids, am, pi, lb: model_forward(params, ids, am, pi, lb))
    loss, prob, hidden_outs, atten_outs = fwd(inputs_ids, attn_mask, position_idx, labels)
    jax.block_until_ready((loss, prob, hidden_outs, atten_outs))

    assert prob.shape == (B, NUM_LABELS)
    assert hidden_outs.shape == (B, L + 1, S, D)
    assert atten_outs.shape == (B, L, H, S, S)
    assert jnp.isfinite(loss)
    print("KERNEL_OK")
</pallas_src>

<mosaic_0001>
module attributes {stable_mosaic.version = 11 : i64} {
  func.func @_fused_forward_kernel(%arg0: memref<2x16x16xf32, #tpu.memory_space<vmem>>, %arg1: memref<2x16x16xf32, #tpu.memory_space<vmem>>, %arg2: memref<2x16x32xf32, #tpu.memory_space<vmem>>, %arg3: memref<32x32xf32, #tpu.memory_space<vmem>>, %arg4: memref<1x32xf32, #tpu.memory_space<vmem>>, %arg5: memref<1x32xf32, #tpu.memory_space<vmem>>, %arg6: memref<1x32xf32, #tpu.memory_space<vmem>>, %arg7: memref<2x32x96xf32, #tpu.memory_space<vmem>>, %arg8: memref<2x1x96xf32, #tpu.memory_space<vmem>>, %arg9: memref<2x32x32xf32, #tpu.memory_space<vmem>>, %arg10: memref<2x1x32xf32, #tpu.memory_space<vmem>>, %arg11: memref<2x1x32xf32, #tpu.memory_space<vmem>>, %arg12: memref<2x1x32xf32, #tpu.memory_space<vmem>>, %arg13: memref<2x32x64xf32, #tpu.memory_space<vmem>>, %arg14: memref<2x1x64xf32, #tpu.memory_space<vmem>>, %arg15: memref<2x64x32xf32, #tpu.memory_space<vmem>>, %arg16: memref<2x1x32xf32, #tpu.memory_space<vmem>>, %arg17: memref<2x1x32xf32, #tpu.memory_space<vmem>>, %arg18: memref<2x1x32xf32, #tpu.memory_space<vmem>>, %arg19: memref<32x32xf32, #tpu.memory_space<vmem>>, %arg20: memref<1x32xf32, #tpu.memory_space<vmem>>, %arg21: memref<32x2xf32, #tpu.memory_space<vmem>>, %arg22: memref<1x2xf32, #tpu.memory_space<vmem>>, %arg23: memref<2x2xf32, #tpu.memory_space<vmem>>, %arg24: memref<32x96xf32, #tpu.memory_space<vmem>>, %arg25: memref<2x16x128xf32, #tpu.memory_space<vmem>>) attributes {dimension_semantics = [], scalar_prefetch = 0 : i64, scratch_operands = 0 : i64, tpu.core_type = #tpu.core_type<tc>} {
    %c0 = arith.constant 0 : index
    %c0_0 = arith.constant 0 : index
    %c0_1 = arith.constant 0 : index
    %0 = vector.load %arg0[%c0, %c0_0, %c0_1] : memref<2x16x16xf32, #tpu.memory_space<vmem>>, vector<2x16x16xf32>
    %c0_2 = arith.constant 0 : index
    %c0_3 = arith.constant 0 : index
    %c0_4 = arith.constant 0 : index
    %1 = vector.load %arg2[%c0_2, %c0_3, %c0_4] : memref<2x16x32xf32, #tpu.memory_space<vmem>>, vector<2x16x32xf32>
    %cst = arith.constant dense<0.000000e+00> : vector<2x16x32xf32>
    %2 = tpu.matmul %0, %1, %cst {dimension_numbers = #tpu.dot_dimension_numbers<[2], [1], [1], [2], [0, 0, 0, 1, 1, 2], [0], [0]>} : vector<2x16x16xf32>, vector<2x16x32xf32>, vector<2x16x32xf32> -> vector<2x16x32xf32>
    %3 = vector.shape_cast %2 : vector<2x16x32xf32> to vector<32x32xf32>
    %c0_5 = arith.constant 0 : index
    %c0_6 = arith.constant 0 : index
    %4 = vector.load %arg3[%c0_5, %c0_6] : memref<32x32xf32, #tpu.memory_space<vmem>>, vector<32x32xf32>
    %5 = arith.addf %3, %4 : vector<32x32xf32>
    %c0_7 = arith.constant 0 : index
    %c0_8 = arith.constant 0 : index
    %6 = vector.load %arg4[%c0_7, %c0_8] : memref<1x32xf32, #tpu.memory_space<vmem>>, vector<1x32xf32>
    %7 = vector.broadcast %6 : vector<1x32xf32> to vector<32x32xf32>
    %8 = arith.addf %5, %7 : vector<32x32xf32>
    %c0_9 = arith.constant 0 : index
    %c0_10 = arith.constant 0 : index
    %9 = vector.load %arg5[%c0_9, %c0_10] : memref<1x32xf32, #tpu.memory_space<vmem>>, vector<1x32xf32>
    %c0_11 = arith.constant 0 : index
    %c0_12 = arith.constant 0 : index
    %10 = vector.load %arg6[%c0_11, %c0_12] : memref<1x32xf32, #tpu.memory_space<vmem>>, vector<1x32xf32>
    %cst_13 = arith.constant dense<0.000000e+00> : vector<32xf32>
    %11 = vector.multi_reduction <add>, %8, %cst_13 [1] : vector<32x32xf32> to vector<32xf32>
    %12 = vector.shape_cast %11 : vector<32xf32> to vector<32x1xf32>
    %cst_14 = arith.constant 3.200000e+01 : f32
    %13 = vector.broadcast %cst_14 : f32 to vector<32x1xf32>
    %14 = arith.divf %12, %13 : vector<32x1xf32>
    %15 = vector.broadcast %14 : vector<32x1xf32> to vector<32x32xf32>
    %16 = arith.subf %8, %15 : vector<32x32xf32>
    %17 = arith.mulf %16, %16 : vector<32x32xf32>
    %cst_15 = arith.constant dense<0.000000e+00> : vector<32xf32>
    %18 = vector.multi_reduction <add>, %17, %cst_15 [1] : vector<32x32xf32> to vector<32xf32>
    %19 = vector.shape_cast %18 : vector<32xf32> to vector<32x1xf32>
    %cst_16 = arith.constant 3.200000e+01 : f32
    %20 = vector.broadcast %cst_16 : f32 to vector<32x1xf32>
    %21 = arith.divf %19, %20 : vector<32x1xf32>
    %cst_17 = arith.constant 9.99999974E-6 : f32
    %22 = vector.broadcast %cst_17 : f32 to vector<32x1xf32>
    %23 = arith.addf %21, %22 : vector<32x1xf32>
    %24 = math.rsqrt %23 : vector<32x1xf32>
    %25 = vector.broadcast %24 : vector<32x1xf32> to vector<32x32xf32>
    %26 = arith.mulf %16, %25 : vector<32x32xf32>
    %27 = vector.broadcast %9 : vector<1x32xf32> to vector<32x32xf32>
    %28 = arith.mulf %26, %27 : vector<32x32xf32>
    %29 = vector.broadcast %10 : vector<1x32xf32> to vector<32x32xf32>
    %30 = arith.addf %28, %29 : vector<32x32xf32>
    %c0_18 = arith.constant 0 : index
    %c0_19 = arith.constant 0 : index
    %31 = vector.load %arg24[%c0_18, %c0_19] : memref<32x96xf32, #tpu.memory_space<vmem>>, vector<32x32xf32>
    tpu.vector_store %arg24[%c0_18, %c0_19], %30 {strides = array<i32>} : memref<32x96xf32, #tpu.memory_space<vmem>>, vector<32x32xf32>,
    %c0_20 = arith.constant 0 : index
    %c0_21 = arith.constant 0 : index
    %c0_22 = arith.constant 0 : index
    %32 = vector.load %arg1[%c0_20, %c0_21, %c0_22] : memref<2x16x16xf32, #tpu.memory_space<vmem>>, vector<2x16x16xf32>
    %c0_23 = arith.constant 0 : index
    %c0_24 = arith.constant 0 : index
    %c0_25 = arith.constant 0 : index
    %33 = vector.load %arg7[%c0_23, %c0_24, %c0_25] : memref<2x32x96xf32, #tpu.memory_space<vmem>>, vector<1x32x96xf32>
    %34 = vector.shape_cast %33 : vector<1x32x96xf32> to vector<32x96xf32>
    %cst_26 = arith.constant dense<0.000000e+00> : vector<32x96xf32>
    %35 = tpu.matmul %30, %34, %cst_26 {dimension_numbers = #tpu.dot_dimension_numbers<[1], [0], [0], [1], [0, 0, 1, 1], [], []>} : vector<32x32xf32>, vector<32x96xf32>, vector<32x96xf32> -> vector<32x96xf32>
    %c0_27 = arith.constant 0 : index
    %c0_28 = arith.constant 0 : index
    %c0_29 = arith.constant 0 : index
    %36 = vector.load %arg8[%c0_27, %c0_28, %c0_29] : memref<2x1x96xf32, #tpu.memory_space<vmem>>, vector<1x1x96xf32>
    %37 = vector.shape_cast %36 : vector<1x1x96xf32> to vector<1x96xf32>
    %38 = vector.broadcast %37 : vector<1x96xf32> to vector<32x96xf32>
    %39 = arith.addf %35, %38 : vector<32x96xf32>
    %40 = vector.shape_cast %39 : vector<32x96xf32> to vector<2x16x96xf32>
    %41 = vector.extract_strided_slice %40 {offsets = [0, 0, 0], sizes = [2, 16, 8], strides = [1, 1, 1]} : vector<2x16x96xf32> to vector<2x16x8xf32>
    %42 = vector.extract_strided_slice %40 {offsets = [0, 0, 32], sizes = [2, 16, 8], strides = [1, 1, 1]} : vector<2x16x96xf32> to vector<2x16x8xf32>
    %43 = vector.extract_strided_slice %40 {offsets = [0, 0, 64], sizes = [2, 16, 8], strides = [1, 1, 1]} : vector<2x16x96xf32> to vector<2x16x8xf32>
    %cst_30 = arith.constant dense<0.000000e+00> : vector<2x16x16xf32>
    %44 = tpu.matmul %41, %42, %cst_30 {dimension_numbers = #tpu.dot_dimension_numbers<[2], [2], [1], [1], [0, 0, 0, 1, 1, 1], [0], [0]>} : vector<2x16x8xf32>, vector<2x16x8xf32>, vector<2x16x16xf32> -> vector<2x16x16xf32>
    %cst_31 = arith.constant 0.353553385 : f32
    %45 = vector.broadcast %cst_31 : f32 to vector<2x16x16xf32>
    %46 = arith.mulf %44, %45 : vector<2x16x16xf32>
    %47 = arith.addf %46, %32 : vector<2x16x16xf32>
    %cst_32 = arith.constant dense<0xFF800000> : vector<2x16xf32>
    %48 = vector.multi_reduction <maximumf>, %47, %cst_32 [2] : vector<2x16x16xf32> to vector<2x16xf32>
    %49 = vector.shape_cast %48 : vector<2x16xf32> to vector<2x16x1xf32>
    %50 = vector.broadcast %49 : vector<2x16x1xf32> to vector<2x16x16xf32>
    %51 = arith.subf %47, %50 : vector<2x16x16xf32>
    %52 = math.exp %51 : vector<2x16x16xf32>
    %cst_33 = arith.constant dense<0.000000e+00> : vector<2x16xf32>
    %53 = vector.multi_reduction <add>, %52, %cst_33 [2] : vector<2x16x16xf32> to vector<2x16xf32>
    %54 = vector.shape_cast %53 : vector<2x16xf32> to vector<2x16x1xf32>
    %55 = vector.broadcast %54 : vector<2x16x1xf32> to vector<2x16x16xf32>
    %56 = arith.divf %52, %55 : vector<2x16x16xf32>
    %c0_34 = arith.constant 0 : index
    %c0_35 = arith.constant 0 : index
    %c0_36 = arith.constant 0 : index
    %57 = vector.load %arg25[%c0_34, %c0_35, %c0_36] : memref<2x16x128xf32, #tpu.memory_space<vmem>>, vector<2x16x16xf32>
    tpu.vector_store %arg25[%c0_34, %c0_35, %c0_36], %56 {strides = array<i32>} : memref<2x16x128xf32, #tpu.memory_space<vmem>>, vector<2x16x16xf32>,
    %cst_37 = arith.constant dense<0.000000e+00> : vector<2x16x8xf32>
    %58 = tpu.matmul %56, %43, %cst_37 {dimension_numbers = #tpu.dot_dimension_numbers<[2], [1], [1], [2], [0, 0, 0, 1, 1, 2], [0], [0]>} : vector<2x16x16xf32>, vector<2x16x8xf32>, vector<2x16x8xf32> -> vector<2x16x8xf32>
    %59 = vector.extract_strided_slice %40 {offsets = [0, 0, 8], sizes = [2, 16, 8], strides = [1, 1, 1]} : vector<2x16x96xf32> to vector<2x16x8xf32>
    %60 = vector.extract_strided_slice %40 {offsets = [0, 0, 40], sizes = [2, 16, 8], strides = [1, 1, 1]} : vector<2x16x96xf32> to vector<2x16x8xf32>
    %61 = vector.extract_strided_slice %40 {offsets = [0, 0, 72], sizes = [2, 16, 8], strides = [1, 1, 1]} : vector<2x16x96xf32> to vector<2x16x8xf32>
    %cst_38 = arith.constant dense<0.000000e+00> : vector<2x16x16xf32>
    %62 = tpu.matmul %59, %60, %cst_38 {dimension_numbers = #tpu.dot_dimension_numbers<[2], [2], [1], [1], [0, 0, 0, 1, 1, 1], [0], [0]>} : vector<2x16x8xf32>, vector<2x16x8xf32>, vector<2x16x16xf32> -> vector<2x16x16xf32>
    %cst_39 = arith.constant 0.353553385 : f32
    %63 = vector.broadcast %cst_39 : f32 to vector<2x16x16xf32>
    %64 = arith.mulf %62, %63 : vector<2x16x16xf32>
    %65 = arith.addf %64, %32 : vector<2x16x16xf32>
    %cst_40 = arith.constant dense<0xFF800000> : vector<2x16xf32>
    %66 = vector.multi_reduction <maximumf>, %65, %cst_40 [2] : vector<2x16x16xf32> to vector<2x16xf32>
    %67 = vector.shape_cast %66 : vector<2x16xf32> to vector<2x16x1xf32>
    %68 = vector.broadcast %67 : vector<2x16x1xf32> to vector<2x16x16xf32>
    %69 = arith.subf %65, %68 : vector<2x16x16xf32>
    %70 = math.exp %69 : vector<2x16x16xf32>
    %cst_41 = arith.constant dense<0.000000e+00> : vector<2x16xf32>
    %71 = vector.multi_reduction <add>, %70, %cst_41 [2] : vector<2x16x16xf32> to vector<2x16xf32>
    %72 = vector.shape_cast %71 : vector<2x16xf32> to vector<2x16x1xf32>
    %73 = vector.broadcast %72 : vector<2x16x1xf32> to vector<2x16x16xf32>
    %74 = arith.divf %70, %73 : vector<2x16x16xf32>
    %c0_42 = arith.constant 0 : index
    %c0_43 = arith.constant 0 : index
    %c16 = arith.constant 16 : index
    %75 = vector.load %arg25[%c0_42, %c0_43, %c16] : memref<2x16x128xf32, #tpu.memory_space<vmem>>, vector<2x16x16xf32>
    tpu.vector_store %arg25[%c0_42, %c0_43, %c16], %74 {strides = array<i32>} : memref<2x16x128xf32, #tpu.memory_space<vmem>>, vector<2x16x16xf32>,
    %cst_44 = arith.constant dense<0.000000e+00> : vector<2x16x8xf32>
    %76 = tpu.matmul %74, %61, %cst_44 {dimension_numbers = #tpu.dot_dimension_numbers<[2], [1], [1], [2], [0, 0, 0, 1, 1, 2], [0], [0]>} : vector<2x16x16xf32>, vector<2x16x8xf32>, vector<2x16x8xf32> -> vector<2x16x8xf32>
    %77 = vector.extract_strided_slice %40 {offsets = [0, 0, 16], sizes = [2, 16, 8], strides = [1, 1, 1]} : vector<2x16x96xf32> to vector<2x16x8xf32>
    %78 = vector.extract_strided_slice %40 {offsets = [0, 0, 48], sizes = [2, 16, 8], strides = [1, 1, 1]} : vector<2x16x96xf32> to vector<2x16x8xf32>
    %79 = vector.extract_strided_slice %40 {offsets = [0, 0, 80], sizes = [2, 16, 8], strides = [1, 1, 1]} : vector<2x16x96xf32> to vector<2x16x8xf32>
    %cst_45 = arith.constant dense<0.000000e+00> : vector<2x16x16xf32>
    %80 = tpu.matmul %77, %78, %cst_45 {dimension_numbers = #tpu.dot_dimension_numbers<[2], [2], [1], [1], [0, 0, 0, 1, 1, 1], [0], [0]>} : vector<2x16x8xf32>, vector<2x16x8xf32>, vector<2x16x16xf32> -> vector<2x16x16xf32>
    %cst_46 = arith.constant 0.353553385 : f32
    %81 = vector.broadcast %cst_46 : f32 to vector<2x16x16xf32>
    %82 = arith.mulf %80, %81 : vector<2x16x16xf32>
    %83 = arith.addf %82, %32 : vector<2x16x16xf32>
    %cst_47 = arith.constant dense<0xFF800000> : vector<2x16xf32>
    %84 = vector.multi_reduction <maximumf>, %83, %cst_47 [2] : vector<2x16x16xf32> to vector<2x16xf32>
    %85 = vector.shape_cast %84 : vector<2x16xf32> to vector<2x16x1xf32>
    %86 = vector.broadcast %85 : vector<2x16x1xf32> to vector<2x16x16xf32>
    %87 = arith.subf %83, %86 : vector<2x16x16xf32>
    %88 = math.exp %87 : vector<2x16x16xf32>
    %cst_48 = arith.constant dense<0.000000e+00> : vector<2x16xf32>
    %89 = vector.multi_reduction <add>, %88, %cst_48 [2] : vector<2x16x16xf32> to vector<2x16xf32>
    %90 = vector.shape_cast %89 : vector<2x16xf32> to vector<2x16x1xf32>
    %91 = vector.broadcast %90 : vector<2x16x1xf32> to vector<2x16x16xf32>
    %92 = arith.divf %88, %91 : vector<2x16x16xf32>
    %c0_49 = arith.constant 0 : index
    %c0_50 = arith.constant 0 : index
    %c32 = arith.constant 32 : index
    %93 = vector.load %arg25[%c0_49, %c0_50, %c32] : memref<2x16x128xf32, #tpu.memory_space<vmem>>, vector<2x16x16xf32>
    tpu.vector_store %arg25[%c0_49, %c0_50, %c32], %92 {strides = array<i32>} : memref<2x16x128xf32, #tpu.memory_space<vmem>>, vector<2x16x16xf32>,
    %cst_51 = arith.constant dense<0.000000e+00> : vector<2x16x8xf32>
    %94 = tpu.matmul %92, %79, %cst_51 {dimension_numbers = #tpu.dot_dimension_numbers<[2], [1], [1], [2], [0, 0, 0, 1, 1, 2], [0], [0]>} : vector<2x16x16xf32>, vector<2x16x8xf32>, vector<2x16x8xf32> -> vector<2x16x8xf32>
    %95 = vector.extract_strided_slice %40 {offsets = [0, 0, 24], sizes = [2, 16, 8], strides = [1, 1, 1]} : vector<2x16x96xf32> to vector<2x16x8xf32>
    %96 = vector.extract_strided_slice %40 {offsets = [0, 0, 56], sizes = [2, 16, 8], strides = [1, 1, 1]} : vector<2x16x96xf32> to vector<2x16x8xf32>
    %97 = vector.extract_strided_slice %40 {offsets = [0, 0, 88], sizes = [2, 16, 8], strides = [1, 1, 1]} : vector<2x16x96xf32> to vector<2x16x8xf32>
    %cst_52 = arith.constant dense<0.000000e+00> : vector<2x16x16xf32>
    %98 = tpu.matmul %95, %96, %cst_52 {dimension_numbers = #tpu.dot_dimension_numbers<[2], [2], [1], [1], [0, 0, 0, 1, 1, 1], [0], [0]>} : vector<2x16x8xf32>, vector<2x16x8xf32>, vector<2x16x16xf32> -> vector<2x16x16xf32>
    %cst_53 = arith.constant 0.353553385 : f32
    %99 = vector.broadcast %cst_53 : f32 to vector<2x16x16xf32>
    %100 = arith.mulf %98, %99 : vector<2x16x16xf32>
    %101 = arith.addf %100, %32 : vector<2x16x16xf32>
    %cst_54 = arith.constant dense<0xFF800000> : vector<2x16xf32>
    %102 = vector.multi_reduction <maximumf>, %101, %cst_54 [2] : vector<2x16x16xf32> to vector<2x16xf32>
    %103 = vector.shape_cast %102 : vector<2x16xf32> to vector<2x16x1xf32>
    %104 = vector.broadcast %103 : vector<2x16x1xf32> to vector<2x16x16xf32>
    %105 = arith.subf %101, %104 : vector<2x16x16xf32>
    %106 = math.exp %105 : vector<2x16x16xf32>
    %cst_55 = arith.constant dense<0.000000e+00> : vector<2x16xf32>
    %107 = vector.multi_reduction <add>, %106, %cst_55 [2] : vector<2x16x16xf32> to vector<2x16xf32>
    %108 = vector.shape_cast %107 : vector<2x16xf32> to vector<2x16x1xf32>
    %109 = vector.broadcast %108 : vector<2x16x1xf32> to vector<2x16x16xf32>
    %110 = arith.divf %106, %109 : vector<2x16x16xf32>
    %c0_56 = arith.constant 0 : index
    %c0_57 = arith.constant 0 : index
    %c48 = arith.constant 48 : index
    %111 = vector.load %arg25[%c0_56, %c0_57, %c48] : memref<2x16x128xf32, #tpu.memory_space<vmem>>, vector<2x16x16xf32>
    tpu.vector_store %arg25[%c0_56, %c0_57, %c48], %110 {strides = array<i32>} : memref<2x16x128xf32, #tpu.memory_space<vmem>>, vector<2x16x16xf32>,
    %cst_58 = arith.constant dense<0.000000e+00> : vector<2x16x8xf32>
    %112 = tpu.matmul %110, %97, %cst_58 {dimension_numbers = #tpu.dot_dimension_numbers<[2], [1], [1], [2], [0, 0, 0, 1, 1, 2], [0], [0]>} : vector<2x16x16xf32>, vector<2x16x8xf32>, vector<2x16x8xf32> -> vector<2x16x8xf32>
    %113 = tpu.concatenate %58, %76, %94, %112 in 2 : vector<2x16x8xf32>, vector<2x16x8xf32>, vector<2x16x8xf32>, vector<2x16x8xf32> -> vector<2x16x32xf32>
    %114 = vector.shape_cast %113 : vector<2x16x32xf32> to vector<32x32xf32>
    %c0_59 = arith.constant 0 : index
    %c0_60 = arith.constant 0 : index
    %c0_61 = arith.constant 0 : index
    %115 = vector.load %arg9[%c0_59, %c0_60, %c0_61] : memref<2x32x32xf32, #tpu.memory_space<vmem>>, vector<1x32x32xf32>
    %116 = vector.shape_cast %115 : vector<1x32x32xf32> to vector<32x32xf32>
    %cst_62 = arith.constant dense<0.000000e+00> : vector<32x32xf32>
    %117 = tpu.matmul %114, %116, %cst_62 {dimension_numbers = #tpu.dot_dimension_numbers<[1], [0], [0], [1], [0, 0, 1, 1], [], []>} : vector<32x32xf32>, vector<32x32xf32>, vector<32x32xf32> -> vector<32x32xf32>
    %c0_63 = arith.constant 0 : index
    %c0_64 = arith.constant 0 : index
    %c0_65 = arith.constant 0 : index
    %118 = vector.load %arg10[%c0_63, %c0_64, %c0_65] : memref<2x1x32xf32, #tpu.memory_space<vmem>>, vector<1x1x32xf32>
    %119 = vector.shape_cast %118 : vector<1x1x32xf32> to vector<1x32xf32>
    %120 = vector.broadcast %119 : vector<1x32xf32> to vector<32x32xf32>
    %121 = arith.addf %117, %120 : vector<32x32xf32>
    %122 = arith.addf %121, %30 : vector<32x32xf32>
    %c0_66 = arith.constant 0 : index
    %c0_67 = arith.constant 0 : index
    %c0_68 = arith.constant 0 : index
    %123 = vector.load %arg11[%c0_66, %c0_67, %c0_68] : memref<2x1x32xf32, #tpu.memory_space<vmem>>, vector<1x1x32xf32>
    %124 = vector.shape_cast %123 : vector<1x1x32xf32> to vector<1x32xf32>
    %c0_69 = arith.constant 0 : index
    %c0_70 = arith.constant 0 : index
    %c0_71 = arith.constant 0 : index
    %125 = vector.load %arg12[%c0_69, %c0_70, %c0_71] : memref<2x1x32xf32, #tpu.memory_space<vmem>>, vector<1x1x32xf32>
    %126 = vector.shape_cast %125 : vector<1x1x32xf32> to vector<1x32xf32>
    %cst_72 = arith.constant dense<0.000000e+00> : vector<32xf32>
    %127 = vector.multi_reduction <add>, %122, %cst_72 [1] : vector<32x32xf32> to vector<32xf32>
    %128 = vector.shape_cast %127 : vector<32xf32> to vector<32x1xf32>
    %cst_73 = arith.constant 3.200000e+01 : f32
    %129 = vector.broadcast %cst_73 : f32 to vector<32x1xf32>
    %130 = arith.divf %128, %129 : vector<32x1xf32>
    %131 = vector.broadcast %130 : vector<32x1xf32> to vector<32x32xf32>
    %132 = arith.subf %122, %131 : vector<32x32xf32>
    %133 = arith.mulf %132, %132 : vector<32x32xf32>
    %cst_74 = arith.constant dense<0.000000e+00> : vector<32xf32>
    %134 = vector.multi_reduction <add>, %133, %cst_74 [1] : vector<32x32xf32> to vector<32xf32>
    %135 = vector.shape_cast %134 : vector<32xf32> to vector<32x1xf32>
    %cst_75 = arith.constant 3.200000e+01 : f32
    %136 = vector.broadcast %cst_75 : f32 to vector<32x1xf32>
    %137 = arith.divf %135, %136 : vector<32x1xf32>
    %cst_76 = arith.constant 9.99999974E-6 : f32
    %138 = vector.broadcast %cst_76 : f32 to vector<32x1xf32>
    %139 = arith.addf %137, %138 : vector<32x1xf32>
    %140 = math.rsqrt %139 : vector<32x1xf32>
    %141 = vector.broadcast %140 : vector<32x1xf32> to vector<32x32xf32>
    %142 = arith.mulf %132, %141 : vector<32x32xf32>
    %143 = vector.broadcast %124 : vector<1x32xf32> to vector<32x32xf32>
    %144 = arith.mulf %142, %143 : vector<32x32xf32>
    %145 = vector.broadcast %126 : vector<1x32xf32> to vector<32x32xf32>
    %146 = arith.addf %144, %145 : vector<32x32xf32>
    %c0_77 = arith.constant 0 : index
    %c0_78 = arith.constant 0 : index
    %c0_79 = arith.constant 0 : index
    %147 = vector.load %arg13[%c0_77, %c0_78, %c0_79] : memref<2x32x64xf32, #tpu.memory_space<vmem>>, vector<1x32x64xf32>
    %148 = vector.shape_cast %147 : vector<1x32x64xf32> to vector<32x64xf32>
    %cst_80 = arith.constant dense<0.000000e+00> : vector<32x64xf32>
    %149 = tpu.matmul %146, %148, %cst_80 {dimension_numbers = #tpu.dot_dimension_numbers<[1], [0], [0], [1], [0, 0, 1, 1], [], []>} : vector<32x32xf32>, vector<32x64xf32>, vector<32x64xf32> -> vector<32x64xf32>
    %c0_81 = arith.constant 0 : index
    %c0_82 = arith.constant 0 : index
    %c0_83 = arith.constant 0 : index
    %150 = vector.load %arg14[%c0_81, %c0_82, %c0_83] : memref<2x1x64xf32, #tpu.memory_space<vmem>>, vector<1x1x64xf32>
    %151 = vector.shape_cast %150 : vector<1x1x64xf32> to vector<1x64xf32>
    %152 = vector.broadcast %151 : vector<1x64xf32> to vector<32x64xf32>
    %153 = arith.addf %149, %152 : vector<32x64xf32>
    %154 = arith.mulf %153, %153 : vector<32x64xf32>
    %155 = arith.mulf %153, %154 : vector<32x64xf32>
    %cst_84 = arith.constant 4.471500e-02 : f32
    %156 = vector.broadcast %cst_84 : f32 to vector<32x64xf32>
    %157 = arith.mulf %156, %155 : vector<32x64xf32>
    %158 = arith.addf %153, %157 : vector<32x64xf32>
    %cst_85 = arith.constant 0.797884583 : f32
    %159 = vector.broadcast %cst_85 : f32 to vector<32x64xf32>
    %160 = arith.mulf %159, %158 : vector<32x64xf32>
    %161 = math.tanh %160 : vector<32x64xf32>
    %cst_86 = arith.constant 1.000000e+00 : f32
    %162 = vector.broadcast %cst_86 : f32 to vector<32x64xf32>
    %163 = arith.addf %162, %161 : vector<32x64xf32>
    %cst_87 = arith.constant 5.000000e-01 : f32
    %164 = vector.broadcast %cst_87 : f32 to vector<32x64xf32>
    %165 = arith.mulf %164, %163 : vector<32x64xf32>
    %166 = arith.mulf %153, %165 : vector<32x64xf32>
    %c0_88 = arith.constant 0 : index
    %c0_89 = arith.constant 0 : index
    %c0_90 = arith.constant 0 : index
    %167 = vector.load %arg15[%c0_88, %c0_89, %c0_90] : memref<2x64x32xf32, #tpu.memory_space<vmem>>, vector<1x64x32xf32>
    %168 = vector.shape_cast %167 : vector<1x64x32xf32> to vector<64x32xf32>
    %cst_91 = arith.constant dense<0.000000e+00> : vector<32x32xf32>
    %169 = tpu.matmul %166, %168, %cst_91 {dimension_numbers = #tpu.dot_dimension_numbers<[1], [0], [0], [1], [0, 0, 1, 1], [], []>} : vector<32x64xf32>, vector<64x32xf32>, vector<32x32xf32> -> vector<32x32xf32>
    %c0_92 = arith.constant 0 : index
    %c0_93 = arith.constant 0 : index
    %c0_94 = arith.constant 0 : index
    %170 = vector.load %arg16[%c0_92, %c0_93, %c0_94] : memref<2x1x32xf32, #tpu.memory_space<vmem>>, vector<1x1x32xf32>
    %171 = vector.shape_cast %170 : vector<1x1x32xf32> to vector<1x32xf32>
    %172 = vector.broadcast %171 : vector<1x32xf32> to vector<32x32xf32>
    %173 = arith.addf %169, %172 : vector<32x32xf32>
    %174 = arith.addf %173, %146 : vector<32x32xf32>
    %c0_95 = arith.constant 0 : index
    %c0_96 = arith.constant 0 : index
    %c0_97 = arith.constant 0 : index
    %175 = vector.load %arg17[%c0_95, %c0_96, %c0_97] : memref<2x1x32xf32, #tpu.memory_space<vmem>>, vector<1x1x32xf32>
    %176 = vector.shape_cast %175 : vector<1x1x32xf32> to vector<1x32xf32>
    %c0_98 = arith.constant 0 : index
    %c0_99 = arith.constant 0 : index
    %c0_100 = arith.constant 0 : index
    %177 = vector.load %arg18[%c0_98, %c0_99, %c0_100] : memref<2x1x32xf32, #tpu.memory_space<vmem>>, vector<1x1x32xf32>
    %178 = vector.shape_cast %177 : vector<1x1x32xf32> to vector<1x32xf32>
    %cst_101 = arith.constant dense<0.000000e+00> : vector<32xf32>
    %179 = vector.multi_reduction <add>, %174, %cst_101 [1] : vector<32x32xf32> to vector<32xf32>
    %180 = vector.shape_cast %179 : vector<32xf32> to vector<32x1xf32>
    %cst_102 = arith.constant 3.200000e+01 : f32
    %181 = vector.broadcast %cst_102 : f32 to vector<32x1xf32>
    %182 = arith.divf %180, %181 : vector<32x1xf32>
    %183 = vector.broadcast %182 : vector<32x1xf32> to vector<32x32xf32>
    %184 = arith.subf %174, %183 : vector<32x32xf32>
    %185 = arith.mulf %184, %184 : vector<32x32xf32>
    %cst_103 = arith.constant dense<0.000000e+00> : vector<32xf32>
    %186 = vector.multi_reduction <add>, %185, %cst_103 [1] : vector<32x32xf32> to vector<32xf32>
    %187 = vector.shape_cast %186 : vector<32xf32> to vector<32x1xf32>
    %cst_104 = arith.constant 3.200000e+01 : f32
    %188 = vector.broadcast %cst_104 : f32 to vector<32x1xf32>
    %189 = arith.divf %187, %188 : vector<32x1xf32>
    %cst_105 = arith.constant 9.99999974E-6 : f32
    %190 = vector.broadcast %cst_105 : f32 to vector<32x1xf32>
    %191 = arith.addf %189, %190 : vector<32x1xf32>
    %192 = math.rsqrt %191 : vector<32x1xf32>
    %193 = vector.broadcast %192 : vector<32x1xf32> to vector<32x32xf32>
    %194 = arith.mulf %184, %193 : vector<32x32xf32>
    %195 = vector.broadcast %176 : vector<1x32xf32> to vector<32x32xf32>
    %196 = arith.mulf %194, %195 : vector<32x32xf32>
    %197 = vector.broadcast %178 : vector<1x32xf32> to vector<32x32xf32>
    %198 = arith.addf %196, %197 : vector<32x32xf32>
    %c0_106 = arith.constant 0 : index
    %c32_107 = arith.constant 32 : index
    %199 = vector.load %arg24[%c0_106, %c32_107] : memref<32x96xf32, #tpu.memory_space<vmem>>, vector<32x32xf32>
    tpu.vector_store %arg24[%c0_106, %c32_107], %198 {strides = array<i32>} : memref<32x96xf32, #tpu.memory_space<vmem>>, vector<32x32xf32>,
    %c1 = arith.constant 1 : index
    %c0_108 = arith.constant 0 : index
    %c0_109 = arith.constant 0 : index
    %200 = vector.load %arg7[%c1, %c0_108, %c0_109] : memref<2x32x96xf32, #tpu.memory_space<vmem>>, vector<1x32x96xf32>
    %201 = vector.shape_cast %200 : vector<1x32x96xf32> to vector<32x96xf32>
    %cst_110 = arith.constant dense<0.000000e+00> : vector<32x96xf32>
    %202 = tpu.matmul %198, %201, %cst_110 {dimension_numbers = #tpu.dot_dimension_numbers<[1], [0], [0], [1], [0, 0, 1, 1], [], []>} : vector<32x32xf32>, vector<32x96xf32>, vector<32x96xf32> -> vector<32x96xf32>
    %c1_111 = arith.constant 1 : index
    %c0_112 = arith.constant 0 : index
    %c0_113 = arith.constant 0 : index
    %203 = vector.load %arg8[%c1_111, %c0_112, %c0_113] : memref<2x1x96xf32, #tpu.memory_space<vmem>>, vector<1x1x96xf32>
    %204 = vector.shape_cast %203 : vector<1x1x96xf32> to vector<1x96xf32>
    %205 = vector.broadcast %204 : vector<1x96xf32> to vector<32x96xf32>
    %206 = arith.addf %202, %205 : vector<32x96xf32>
    %207 = vector.shape_cast %206 : vector<32x96xf32> to vector<2x16x96xf32>
    %208 = vector.extract_strided_slice %207 {offsets = [0, 0, 0], sizes = [2, 16, 8], strides = [1, 1, 1]} : vector<2x16x96xf32> to vector<2x16x8xf32>
    %209 = vector.extract_strided_slice %207 {offsets = [0, 0, 32], sizes = [2, 16, 8], strides = [1, 1, 1]} : vector<2x16x96xf32> to vector<2x16x8xf32>
    %210 = vector.extract_strided_slice %207 {offsets = [0, 0, 64], sizes = [2, 16, 8], strides = [1, 1, 1]} : vector<2x16x96xf32> to vector<2x16x8xf32>
    %cst_114 = arith.constant dense<0.000000e+00> : vector<2x16x16xf32>
    %211 = tpu.matmul %208, %209, %cst_114 {dimension_numbers = #tpu.dot_dimension_numbers<[2], [2], [1], [1], [0, 0, 0, 1, 1, 1], [0], [0]>} : vector<2x16x8xf32>, vector<2x16x8xf32>, vector<2x16x16xf32> -> vector<2x16x16xf32>
    %cst_115 = arith.constant 0.353553385 : f32
    %212 = vector.broadcast %cst_115 : f32 to vector<2x16x16xf32>
    %213 = arith.mulf %211, %212 : vector<2x16x16xf32>
    %214 = arith.addf %213, %32 : vector<2x16x16xf32>
    %cst_116 = arith.constant dense<0xFF800000> : vector<2x16xf32>
    %215 = vector.multi_reduction <maximumf>, %214, %cst_116 [2] : vector<2x16x16xf32> to vector<2x16xf32>
    %216 = vector.shape_cast %215 : vector<2x16xf32> to vector<2x16x1xf32>
    %217 = vector.broadcast %216 : vector<2x16x1xf32> to vector<2x16x16xf32>
    %218 = arith.subf %214, %217 : vector<2x16x16xf32>
    %219 = math.exp %218 : vector<2x16x16xf32>
    %cst_117 = arith.constant dense<0.000000e+00> : vector<2x16xf32>
    %220 = vector.multi_reduction <add>, %219, %cst_117 [2] : vector<2x16x16xf32> to vector<2x16xf32>
    %221 = vector.shape_cast %220 : vector<2x16xf32> to vector<2x16x1xf32>
    %222 = vector.broadcast %221 : vector<2x16x1xf32> to vector<2x16x16xf32>
    %223 = arith.divf %219, %222 : vector<2x16x16xf32>
    %c0_118 = arith.constant 0 : index
    %c0_119 = arith.constant 0 : index
    %c64 = arith.constant 64 : index
    %224 = vector.load %arg25[%c0_118, %c0_119, %c64] : memref<2x16x128xf32, #tpu.memory_space<vmem>>, vector<2x16x16xf32>
    tpu.vector_store %arg25[%c0_118, %c0_119, %c64], %223 {strides = array<i32>} : memref<2x16x128xf32, #tpu.memory_space<vmem>>, vector<2x16x16xf32>,
    %cst_120 = arith.constant dense<0.000000e+00> : vector<2x16x8xf32>
    %225 = tpu.matmul %223, %210, %cst_120 {dimension_numbers = #tpu.dot_dimension_numbers<[2], [1], [1], [2], [0, 0, 0, 1, 1, 2], [0], [0]>} : vector<2x16x16xf32>, vector<2x16x8xf32>, vector<2x16x8xf32> -> vector<2x16x8xf32>
    %226 = vector.extract_strided_slice %207 {offsets = [0, 0, 8], sizes = [2, 16, 8], strides = [1, 1, 1]} : vector<2x16x96xf32> to vector<2x16x8xf32>
    %227 = vector.extract_strided_slice %207 {offsets = [0, 0, 40], sizes = [2, 16, 8], strides = [1, 1, 1]} : vector<2x16x96xf32> to vector<2x16x8xf32>
    %228 = vector.extract_strided_slice %207 {offsets = [0, 0, 72], sizes = [2, 16, 8], strides = [1, 1, 1]} : vector<2x16x96xf32> to vector<2x16x8xf32>
    %cst_121 = arith.constant dense<0.000000e+00> : vector<2x16x16xf32>
    %229 = tpu.matmul %226, %227, %cst_121 {dimension_numbers = #tpu.dot_dimension_numbers<[2], [2], [1], [1], [0, 0, 0, 1, 1, 1], [0], [0]>} : vector<2x16x8xf32>, vector<2x16x8xf32>, vector<2x16x16xf32> -> vector<2x16x16xf32>
    %cst_122 = arith.constant 0.353553385 : f32
    %230 = vector.broadcast %cst_122 : f32 to vector<2x16x16xf32>
    %231 = arith.mulf %229, %230 : vector<2x16x16xf32>
    %232 = arith.addf %231, %32 : vector<2x16x16xf32>
    %cst_123 = arith.constant dense<0xFF800000> : vector<2x16xf32>
    %233 = vector.multi_reduction <maximumf>, %232, %cst_123 [2] : vector<2x16x16xf32> to vector<2x16xf32>
    %234 = vector.shape_cast %233 : vector<2x16xf32> to vector<2x16x1xf32>
    %235 = vector.broadcast %234 : vector<2x16x1xf32> to vector<2x16x16xf32>
    %236 = arith.subf %232, %235 : vector<2x16x16xf32>
    %237 = math.exp %236 : vector<2x16x16xf32>
    %cst_124 = arith.constant dense<0.000000e+00> : vector<2x16xf32>
    %238 = vector.multi_reduction <add>, %237, %cst_124 [2] : vector<2x16x16xf32> to vector<2x16xf32>
    %239 = vector.shape_cast %238 : vector<2x16xf32> to vector<2x16x1xf32>
    %240 = vector.broadcast %239 : vector<2x16x1xf32> to vector<2x16x16xf32>
    %241 = arith.divf %237, %240 : vector<2x16x16xf32>
    %c0_125 = arith.constant 0 : index
    %c0_126 = arith.constant 0 : index
    %c80 = arith.constant 80 : index
    %242 = vector.load %arg25[%c0_125, %c0_126, %c80] : memref<2x16x128xf32, #tpu.memory_space<vmem>>, vector<2x16x16xf32>
    tpu.vector_store %arg25[%c0_125, %c0_126, %c80], %241 {strides = array<i32>} : memref<2x16x128xf32, #tpu.memory_space<vmem>>, vector<2x16x16xf32>,
    %cst_127 = arith.constant dense<0.000000e+00> : vector<2x16x8xf32>
    %243 = tpu.matmul %241, %228, %cst_127 {dimension_numbers = #tpu.dot_dimension_numbers<[2], [1], [1], [2], [0, 0, 0, 1, 1, 2], [0], [0]>} : vector<2x16x16xf32>, vector<2x16x8xf32>, vector<2x16x8xf32> -> vector<2x16x8xf32>
    %244 = vector.extract_strided_slice %207 {offsets = [0, 0, 16], sizes = [2, 16, 8], strides = [1, 1, 1]} : vector<2x16x96xf32> to vector<2x16x8xf32>
    %245 = vector.extract_strided_slice %207 {offsets = [0, 0, 48], sizes = [2, 16, 8], strides = [1, 1, 1]} : vector<2x16x96xf32> to vector<2x16x8xf32>
    %246 = vector.extract_strided_slice %207 {offsets = [0, 0, 80], sizes = [2, 16, 8], strides = [1, 1, 1]} : vector<2x16x96xf32> to vector<2x16x8xf32>
    %cst_128 = arith.constant dense<0.000000e+00> : vector<2x16x16xf32>
    %247 = tpu.matmul %244, %245, %cst_128 {dimension_numbers = #tpu.dot_dimension_numbers<[2], [2], [1], [1], [0, 0, 0, 1, 1, 1], [0], [0]>} : vector<2x16x8xf32>, vector<2x16x8xf32>, vector<2x16x16xf32> -> vector<2x16x16xf32>
    %cst_129 = arith.constant 0.353553385 : f32
    %248 = vector.broadcast %cst_129 : f32 to vector<2x16x16xf32>
    %249 = arith.mulf %247, %248 : vector<2x16x16xf32>
    %250 = arith.addf %249, %32 : vector<2x16x16xf32>
    %cst_130 = arith.constant dense<0xFF800000> : vector<2x16xf32>
    %251 = vector.multi_reduction <maximumf>, %250, %cst_130 [2] : vector<2x16x16xf32> to vector<2x16xf32>
    %252 = vector.shape_cast %251 : vector<2x16xf32> to vector<2x16x1xf32>
    %253 = vector.broadcast %252 : vector<2x16x1xf32> to vector<2x16x16xf32>
    %254 = arith.subf %250, %253 : vector<2x16x16xf32>
    %255 = math.exp %254 : vector<2x16x16xf32>
    %cst_131 = arith.constant dense<0.000000e+00> : vector<2x16xf32>
    %256 = vector.multi_reduction <add>, %255, %cst_131 [2] : vector<2x16x16xf32> to vector<2x16xf32>
    %257 = vector.shape_cast %256 : vector<2x16xf32> to vector<2x16x1xf32>
    %258 = vector.broadcast %257 : vector<2x16x1xf32> to vector<2x16x16xf32>
    %259 = arith.divf %255, %258 : vector<2x16x16xf32>
    %c0_132 = arith.constant 0 : index
    %c0_133 = arith.constant 0 : index
    %c96 = arith.constant 96 : index
    %260 = vector.load %arg25[%c0_132, %c0_133, %c96] : memref<2x16x128xf32, #tpu.memory_space<vmem>>, vector<2x16x16xf32>
    tpu.vector_store %arg25[%c0_132, %c0_133, %c96], %259 {strides = array<i32>} : memref<2x16x128xf32, #tpu.memory_space<vmem>>, vector<2x16x16xf32>,
    %cst_134 = arith.constant dense<0.000000e+00> : vector<2x16x8xf32>
    %261 = tpu.matmul %259, %246, %cst_134 {dimension_numbers = #tpu.dot_dimension_numbers<[2], [1], [1], [2], [0, 0, 0, 1, 1, 2], [0], [0]>} : vector<2x16x16xf32>, vector<2x16x8xf32>, vector<2x16x8xf32> -> vector<2x16x8xf32>
    %262 = vector.extract_strided_slice %207 {offsets = [0, 0, 24], sizes = [2, 16, 8], strides = [1, 1, 1]} : vector<2x16x96xf32> to vector<2x16x8xf32>
    %263 = vector.extract_strided_slice %207 {offsets = [0, 0, 56], sizes = [2, 16, 8], strides = [1, 1, 1]} : vector<2x16x96xf32> to vector<2x16x8xf32>
    %264 = vector.extract_strided_slice %207 {offsets = [0, 0, 88], sizes = [2, 16, 8], strides = [1, 1, 1]} : vector<2x16x96xf32> to vector<2x16x8xf32>
    %cst_135 = arith.constant dense<0.000000e+00> : vector<2x16x16xf32>
    %265 = tpu.matmul %262, %263, %cst_135 {dimension_numbers = #tpu.dot_dimension_numbers<[2], [2], [1], [1], [0, 0, 0, 1, 1, 1], [0], [0]>} : vector<2x16x8xf32>, vector<2x16x8xf32>, vector<2x16x16xf32> -> vector<2x16x16xf32>
    %cst_136 = arith.constant 0.353553385 : f32
    %266 = vector.broadcast %cst_136 : f32 to vector<2x16x16xf32>
    %267 = arith.mulf %265, %266 : vector<2x16x16xf32>
    %268 = arith.addf %267, %32 : vector<2x16x16xf32>
    %cst_137 = arith.constant dense<0xFF800000> : vector<2x16xf32>
    %269 = vector.multi_reduction <maximumf>, %268, %cst_137 [2] : vector<2x16x16xf32> to vector<2x16xf32>
    %270 = vector.shape_cast %269 : vector<2x16xf32> to vector<2x16x1xf32>
    %271 = vector.broadcast %270 : vector<2x16x1xf32> to vector<2x16x16xf32>
    %272 = arith.subf %268, %271 : vector<2x16x16xf32>
    %273 = math.exp %272 : vector<2x16x16xf32>
    %cst_138 = arith.constant dense<0.000000e+00> : vector<2x16xf32>
    %274 = vector.multi_reduction <add>, %273, %cst_138 [2] : vector<2x16x16xf32> to vector<2x16xf32>
    %275 = vector.shape_cast %274 : vector<2x16xf32> to vector<2x16x1xf32>
    %276 = vector.broadcast %275 : vector<2x16x1xf32> to vector<2x16x16xf32>
    %277 = arith.divf %273, %276 : vector<2x16x16xf32>
    %c0_139 = arith.constant 0 : index
    %c0_140 = arith.constant 0 : index
    %c112 = arith.constant 112 : index
    %278 = vector.load %arg25[%c0_139, %c0_140, %c112] : memref<2x16x128xf32, #tpu.memory_space<vmem>>, vector<2x16x16xf32>
    tpu.vector_store %arg25[%c0_139, %c0_140, %c112], %277 {strides = array<i32>} : memref<2x16x128xf32, #tpu.memory_space<vmem>>, vector<2x16x16xf32>,
    %cst_141 = arith.constant dense<0.000000e+00> : vector<2x16x8xf32>
    %279 = tpu.matmul %277, %264, %cst_141 {dimension_numbers = #tpu.dot_dimension_numbers<[2], [1], [1], [2], [0, 0, 0, 1, 1, 2], [0], [0]>} : vector<2x16x16xf32>, vector<2x16x8xf32>, vector<2x16x8xf32> -> vector<2x16x8xf32>
    %280 = tpu.concatenate %225, %243, %261, %279 in 2 : vector<2x16x8xf32>, vector<2x16x8xf32>, vector<2x16x8xf32>, vector<2x16x8xf32> -> vector<2x16x32xf32>
    %281 = vector.shape_cast %280 : vector<2x16x32xf32> to vector<32x32xf32>
    %c1_142 = arith.constant 1 : index
    %c0_143 = arith.constant 0 : index
    %c0_144 = arith.constant 0 : index
    %282 = vector.load %arg9[%c1_142, %c0_143, %c0_144] : memref<2x32x32xf32, #tpu.memory_space<vmem>>, vector<1x32x32xf32>
    %283 = vector.shape_cast %282 : vector<1x32x32xf32> to vector<32x32xf32>
    %cst_145 = arith.constant dense<0.000000e+00> : vector<32x32xf32>
    %284 = tpu.matmul %281, %283, %cst_145 {dimension_numbers = #tpu.dot_dimension_numbers<[1], [0], [0], [1], [0, 0, 1, 1], [], []>} : vector<32x32xf32>, vector<32x32xf32>, vector<32x32xf32> -> vector<32x32xf32>
    %c1_146 = arith.constant 1 : index
    %c0_147 = arith.constant 0 : index
    %c0_148 = arith.constant 0 : index
    %285 = vector.load %arg10[%c1_146, %c0_147, %c0_148] : memref<2x1x32xf32, #tpu.memory_space<vmem>>, vector<1x1x32xf32>
    %286 = vector.shape_cast %285 : vector<1x1x32xf32> to vector<1x32xf32>
    %287 = vector.broadcast %286 : vector<1x32xf32> to vector<32x32xf32>
    %288 = arith.addf %284, %287 : vector<32x32xf32>
    %289 = arith.addf %288, %198 : vector<32x32xf32>
    %c1_149 = arith.constant 1 : index
    %c0_150 = arith.constant 0 : index
    %c0_151 = arith.constant 0 : index
    %290 = vector.load %arg11[%c1_149, %c0_150, %c0_151] : memref<2x1x32xf32, #tpu.memory_space<vmem>>, vector<1x1x32xf32>
    %291 = vector.shape_cast %290 : vector<1x1x32xf32> to vector<1x32xf32>
    %c1_152 = arith.constant 1 : index
    %c0_153 = arith.constant 0 : index
    %c0_154 = arith.constant 0 : index
    %292 = vector.load %arg12[%c1_152, %c0_153, %c0_154] : memref<2x1x32xf32, #tpu.memory_space<vmem>>, vector<1x1x32xf32>
    %293 = vector.shape_cast %292 : vector<1x1x32xf32> to vector<1x32xf32>
    %cst_155 = arith.constant dense<0.000000e+00> : vector<32xf32>
    %294 = vector.multi_reduction <add>, %289, %cst_155 [1] : vector<32x32xf32> to vector<32xf32>
    %295 = vector.shape_cast %294 : vector<32xf32> to vector<32x1xf32>
    %cst_156 = arith.constant 3.200000e+01 : f32
    %296 = vector.broadcast %cst_156 : f32 to vector<32x1xf32>
    %297 = arith.divf %295, %296 : vector<32x1xf32>
    %298 = vector.broadcast %297 : vector<32x1xf32> to vector<32x32xf32>
    %299 = arith.subf %289, %298 : vector<32x32xf32>
    %300 = arith.mulf %299, %299 : vector<32x32xf32>
    %cst_157 = arith.constant dense<0.000000e+00> : vector<32xf32>
    %301 = vector.multi_reduction <add>, %300, %cst_157 [1] : vector<32x32xf32> to vector<32xf32>
    %302 = vector.shape_cast %301 : vector<32xf32> to vector<32x1xf32>
    %cst_158 = arith.constant 3.200000e+01 : f32
    %303 = vector.broadcast %cst_158 : f32 to vector<32x1xf32>
    %304 = arith.divf %302, %303 : vector<32x1xf32>
    %cst_159 = arith.constant 9.99999974E-6 : f32
    %305 = vector.broadcast %cst_159 : f32 to vector<32x1xf32>
    %306 = arith.addf %304, %305 : vector<32x1xf32>
    %307 = math.rsqrt %306 : vector<32x1xf32>
    %308 = vector.broadcast %307 : vector<32x1xf32> to vector<32x32xf32>
    %309 = arith.mulf %299, %308 : vector<32x32xf32>
    %310 = vector.broadcast %291 : vector<1x32xf32> to vector<32x32xf32>
    %311 = arith.mulf %309, %310 : vector<32x32xf32>
    %312 = vector.broadcast %293 : vector<1x32xf32> to vector<32x32xf32>
    %313 = arith.addf %311, %312 : vector<32x32xf32>
    %c1_160 = arith.constant 1 : index
    %c0_161 = arith.constant 0 : index
    %c0_162 = arith.constant 0 : index
    %314 = vector.load %arg13[%c1_160, %c0_161, %c0_162] : memref<2x32x64xf32, #tpu.memory_space<vmem>>, vector<1x32x64xf32>
    %315 = vector.shape_cast %314 : vector<1x32x64xf32> to vector<32x64xf32>
    %cst_163 = arith.constant dense<0.000000e+00> : vector<32x64xf32>
    %316 = tpu.matmul %313, %315, %cst_163 {dimension_numbers = #tpu.dot_dimension_numbers<[1], [0], [0], [1], [0, 0, 1, 1], [], []>} : vector<32x32xf32>, vector<32x64xf32>, vector<32x64xf32> -> vector<32x64xf32>
    %c1_164 = arith.constant 1 : index
    %c0_165 = arith.constant 0 : index
    %c0_166 = arith.constant 0 : index
    %317 = vector.load %arg14[%c1_164, %c0_165, %c0_166] : memref<2x1x64xf32, #tpu.memory_space<vmem>>, vector<1x1x64xf32>
    %318 = vector.shape_cast %317 : vector<1x1x64xf32> to vector<1x64xf32>
    %319 = vector.broadcast %318 : vector<1x64xf32> to vector<32x64xf32>
    %320 = arith.addf %316, %319 : vector<32x64xf32>
    %321 = arith.mulf %320, %320 : vector<32x64xf32>
    %322 = arith.mulf %320, %321 : vector<32x64xf32>
    %cst_167 = arith.constant 4.471500e-02 : f32
    %323 = vector.broadcast %cst_167 : f32 to vector<32x64xf32>
    %324 = arith.mulf %323, %322 : vector<32x64xf32>
    %325 = arith.addf %320, %324 : vector<32x64xf32>
    %cst_168 = arith.constant 0.797884583 : f32
    %326 = vector.broadcast %cst_168 : f32 to vector<32x64xf32>
    %327 = arith.mulf %326, %325 : vector<32x64xf32>
    %328 = math.tanh %327 : vector<32x64xf32>
    %cst_169 = arith.constant 1.000000e+00 : f32
    %329 = vector.broadcast %cst_169 : f32 to vector<32x64xf32>
    %330 = arith.addf %329, %328 : vector<32x64xf32>
    %cst_170 = arith.constant 5.000000e-01 : f32
    %331 = vector.broadcast %cst_170 : f32 to vector<32x64xf32>
    %332 = arith.mulf %331, %330 : vector<32x64xf32>
    %333 = arith.mulf %320, %332 : vector<32x64xf32>
    %c1_171 = arith.constant 1 : index
    %c0_172 = arith.constant 0 : index
    %c0_173 = arith.constant 0 : index
    %334 = vector.load %arg15[%c1_171, %c0_172, %c0_173] : memref<2x64x32xf32, #tpu.memory_space<vmem>>, vector<1x64x32xf32>
    %335 = vector.shape_cast %334 : vector<1x64x32xf32> to vector<64x32xf32>
    %cst_174 = arith.constant dense<0.000000e+00> : vector<32x32xf32>
    %336 = tpu.matmul %333, %335, %cst_174 {dimension_numbers = #tpu.dot_dimension_numbers<[1], [0], [0], [1], [0, 0, 1, 1], [], []>} : vector<32x64xf32>, vector<64x32xf32>, vector<32x32xf32> -> vector<32x32xf32>
    %c1_175 = arith.constant 1 : index
    %c0_176 = arith.constant 0 : index
    %c0_177 = arith.constant 0 : index
    %337 = vector.load %arg16[%c1_175, %c0_176, %c0_177] : memref<2x1x32xf32, #tpu.memory_space<vmem>>, vector<1x1x32xf32>
    %338 = vector.shape_cast %337 : vector<1x1x32xf32> to vector<1x32xf32>
    %339 = vector.broadcast %338 : vector<1x32xf32> to vector<32x32xf32>
    %340 = arith.addf %336, %339 : vector<32x32xf32>
    %341 = arith.addf %340, %313 : vector<32x32xf32>
    %c1_178 = arith.constant 1 : index
    %c0_179 = arith.constant 0 : index
    %c0_180 = arith.constant 0 : index
    %342 = vector.load %arg17[%c1_178, %c0_179, %c0_180] : memref<2x1x32xf32, #tpu.memory_space<vmem>>, vector<1x1x32xf32>
    %343 = vector.shape_cast %342 : vector<1x1x32xf32> to vector<1x32xf32>
    %c1_181 = arith.constant 1 : index
    %c0_182 = arith.constant 0 : index
    %c0_183 = arith.constant 0 : index
    %344 = vector.load %arg18[%c1_181, %c0_182, %c0_183] : memref<2x1x32xf32, #tpu.memory_space<vmem>>, vector<1x1x32xf32>
    %345 = vector.shape_cast %344 : vector<1x1x32xf32> to vector<1x32xf32>
    %cst_184 = arith.constant dense<0.000000e+00> : vector<32xf32>
    %346 = vector.multi_reduction <add>, %341, %cst_184 [1] : vector<32x32xf32> to vector<32xf32>
    %347 = vector.shape_cast %346 : vector<32xf32> to vector<32x1xf32>
    %cst_185 = arith.constant 3.200000e+01 : f32
    %348 = vector.broadcast %cst_185 : f32 to vector<32x1xf32>
    %349 = arith.divf %347, %348 : vector<32x1xf32>
    %350 = vector.broadcast %349 : vector<32x1xf32> to vector<32x32xf32>
    %351 = arith.subf %341, %350 : vector<32x32xf32>
    %352 = arith.mulf %351, %351 : vector<32x32xf32>
    %cst_186 = arith.constant dense<0.000000e+00> : vector<32xf32>
    %353 = vector.multi_reduction <add>, %352, %cst_186 [1] : vector<32x32xf32> to vector<32xf32>
    %354 = vector.shape_cast %353 : vector<32xf32> to vector<32x1xf32>
    %cst_187 = arith.constant 3.200000e+01 : f32
    %355 = vector.broadcast %cst_187 : f32 to vector<32x1xf32>
    %356 = arith.divf %354, %355 : vector<32x1xf32>
    %cst_188 = arith.constant 9.99999974E-6 : f32
    %357 = vector.broadcast %cst_188 : f32 to vector<32x1xf32>
    %358 = arith.addf %356, %357 : vector<32x1xf32>
    %359 = math.rsqrt %358 : vector<32x1xf32>
    %360 = vector.broadcast %359 : vector<32x1xf32> to vector<32x32xf32>
    %361 = arith.mulf %351, %360 : vector<32x32xf32>
    %362 = vector.broadcast %343 : vector<1x32xf32> to vector<32x32xf32>
    %363 = arith.mulf %361, %362 : vector<32x32xf32>
    %364 = vector.broadcast %345 : vector<1x32xf32> to vector<32x32xf32>
    %365 = arith.addf %363, %364 : vector<32x32xf32>
    %c0_189 = arith.constant 0 : index
    %c64_190 = arith.constant 64 : index
    %366 = vector.load %arg24[%c0_189, %c64_190] : memref<32x96xf32, #tpu.memory_space<vmem>>, vector<32x32xf32>
    tpu.vector_store %arg24[%c0_189, %c64_190], %365 {strides = array<i32>} : memref<32x96xf32, #tpu.memory_space<vmem>>, vector<32x32xf32>,
    %367 = vector.extract_strided_slice %365 {offsets = [0, 0], sizes = [1, 32], strides = [1, 1]} : vector<32x32xf32> to vector<1x32xf32>
    %368 = vector.extract_strided_slice %365 {offsets = [16, 0], sizes = [1, 32], strides = [1, 1]} : vector<32x32xf32> to vector<1x32xf32>
    %369 = tpu.concatenate %367, %368 in 0 : vector<1x32xf32>, vector<1x32xf32> -> vector<2x32xf32>
    %c0_191 = arith.constant 0 : index
    %c0_192 = arith.constant 0 : index
    %370 = vector.load %arg19[%c0_191, %c0_192] : memref<32x32xf32, #tpu.memory_space<vmem>>, vector<32x32xf32>
    %cst_193 = arith.constant dense<0.000000e+00> : vector<2x32xf32>
    %371 = tpu.matmul %369, %370, %cst_193 {dimension_numbers = #tpu.dot_dimension_numbers<[1], [0], [0], [1], [0, 0, 1, 1], [], []>} : vector<2x32xf32>, vector<32x32xf32>, vector<2x32xf32> -> vector<2x32xf32>
    %c0_194 = arith.constant 0 : index
    %c0_195 = arith.constant 0 : index
    %372 = vector.load %arg20[%c0_194, %c0_195] : memref<1x32xf32, #tpu.memory_space<vmem>>, vector<1x32xf32>
    %373 = vector.broadcast %372 : vector<1x32xf32> to vector<2x32xf32>
    %374 = arith.addf %371, %373 : vector<2x32xf32>
    %375 = math.tanh %374 : vector<2x32xf32>
    %c0_196 = arith.constant 0 : index
    %c0_197 = arith.constant 0 : index
    %376 = vector.load %arg21[%c0_196, %c0_197] : memref<32x2xf32, #tpu.memory_space<vmem>>, vector<32x2xf32>
    %cst_198 = arith.constant dense<0.000000e+00> : vector<2x2xf32>
    %377 = tpu.matmul %375, %376, %cst_198 {dimension_numbers = #tpu.dot_dimension_numbers<[1], [0], [0], [1], [0, 0, 1, 1], [], []>} : vector<2x32xf32>, vector<32x2xf32>, vector<2x2xf32> -> vector<2x2xf32>
    %c0_199 = arith.constant 0 : index
    %c0_200 = arith.constant 0 : index
    %378 = vector.load %arg22[%c0_199, %c0_200] : memref<1x2xf32, #tpu.memory_space<vmem>>, vector<1x2xf32>
    %379 = vector.broadcast %378 : vector<1x2xf32> to vector<2x2xf32>
    %380 = arith.addf %377, %379 : vector<2x2xf32>
    %381 = arith.negf %380 : vector<2x2xf32>
    %382 = math.exp %381 : vector<2x2xf32>
    %cst_201 = arith.constant 1.000000e+00 : f32
    %383 = vector.broadcast %cst_201 : f32 to vector<2x2xf32>
    %384 = arith.addf %383, %382 : vector<2x2xf32>
    %385 = arith.divf %383, %384 : vector<2x2xf32>
    %c0_202 = arith.constant 0 : index
    %c0_203 = arith.constant 0 : index
    %386 = vector.load %arg23[%c0_202, %c0_203] : memref<2x2xf32, #tpu.memory_space<vmem>>, vector<2x2xf32>
    tpu.vector_store %arg23[%c0_202, %c0_203], %385 {strides = array<i32>} : memref<2x2xf32, #tpu.memory_space<vmem>>, vector<2x2xf32>,
    return
  }
}

</mosaic_0001>

<llo_original>
// kernel: _lambda_.1
$region0: #{_lambda_.1}
  #allocation0 [shape = 'u32[]', space=smem, size = 0x4, offset = 0x4, fixed_abs, tag = 'smem constant byte address 0x4 - core index']
  #allocation1 [shape = 'u32[144,128]{1,0:T(1,128)}', space=vmem, size = 0x12000, scoped, tag = 'internal scratch']
  %s0 = inlined_call_operand.vmem [shape: f32[2,16,16], index: 0, kind: input, shape index: {}]
  %s1 = inlined_call_operand.vmem [shape: f32[2,16,16], index: 1, kind: input, shape index: {}]
  %s2 = inlined_call_operand.vmem [shape: f32[2,16,32], index: 2, kind: input, shape index: {}]
  %s3 = inlined_call_operand.vmem [shape: f32[32,32], index: 3, kind: input, shape index: {}]
  %s4 = inlined_call_operand.vmem [shape: f32[1,32], index: 4, kind: input, shape index: {}]
  %s5 = inlined_call_operand.vmem [shape: f32[1,32], index: 5, kind: input, shape index: {}]
  %s6 = inlined_call_operand.vmem [shape: f32[1,32], index: 6, kind: input, shape index: {}, may-alias: {6,20}]
  %s7 = inlined_call_operand.vmem [shape: f32[2,32,96], index: 7, kind: input, shape index: {}]
  %s8 = inlined_call_operand.vmem [shape: f32[2,1,96], index: 8, kind: input, shape index: {}]
  %s9 = inlined_call_operand.vmem [shape: f32[2,32,32], index: 9, kind: input, shape index: {}]
  %s10 = inlined_call_operand.vmem [shape: f32[2,1,32], index: 10, kind: input, shape index: {}, may-alias: {10,12,16,18}]
  %s11 = inlined_call_operand.vmem [shape: f32[2,1,32], index: 11, kind: input, shape index: {}, may-alias: {11,17}]
  %s12 = inlined_call_operand.vmem [shape: f32[2,1,32], index: 12, kind: input, shape index: {}, may-alias: {10,12,16,18}]
  %s13 = inlined_call_operand.vmem [shape: f32[2,32,64], index: 13, kind: input, shape index: {}]
  %s14 = inlined_call_operand.vmem [shape: f32[2,1,64], index: 14, kind: input, shape index: {}]
  %s15 = inlined_call_operand.vmem [shape: f32[2,64,32], index: 15, kind: input, shape index: {}]
  %s16 = inlined_call_operand.vmem [shape: f32[2,1,32], index: 16, kind: input, shape index: {}, may-alias: {10,12,16,18}]
  %s17 = inlined_call_operand.vmem [shape: f32[2,1,32], index: 17, kind: input, shape index: {}, may-alias: {11,17}]
  %s18 = inlined_call_operand.vmem [shape: f32[2,1,32], index: 18, kind: input, shape index: {}, may-alias: {10,12,16,18}]
  %s19 = inlined_call_operand.vmem [shape: f32[32,32], index: 19, kind: input, shape index: {}]
  %s20 = inlined_call_operand.vmem [shape: f32[1,32], index: 20, kind: input, shape index: {}, may-alias: {6,20}]
  %s21 = inlined_call_operand.vmem [shape: f32[32,2], index: 21, kind: input, shape index: {}]
  %s22 = inlined_call_operand.vmem [shape: f32[1,2], index: 22, kind: input, shape index: {}]
  %s23 = inlined_call_operand.vmem [shape: f32[2,2], index: 23, kind: output, shape index: {0}]
  %s24 = inlined_call_operand.vmem [shape: f32[32,96], index: 24, kind: output, shape index: {1}]
  %s25 = inlined_call_operand.vmem [shape: f32[2,16,128], index: 25, kind: output, shape index: {2}]
  %26 = xla_tuple %s23, %s24, %s25
  %s27 = sld [smem:[#allocation0]]
  $region118: #{_lambda_.1} parent=0
    _
  %s29 = ssub.s32 1, %s27
  %s30 = scalar_select 0, %s29, %s27
  // Predicated region
  $region2: #{_lambda_.1} parent=0 // pred_check
    _
  $region3: #{_lambda_.1} parent=0 // pred_check_branch
    %32 = sbr.rel (0) target = $region5
  $region4: #{_lambda_.1} parent=0 // pred_region
    _
  $region5: #{_lambda_.1} parent=0 // pred_fallthru
    _
  // Predicated region
  $region6: #{_lambda_.1} parent=0 // pred_check
    _
  $region7: #{_lambda_.1} parent=0 // pred_check_branch
    %34 = sbr.rel (0) target = $region9
  $region8: #{_lambda_.1} parent=0 // pred_region
    _
  $region9: #{_lambda_.1} parent=0 // pred_fallthru
    _
  // Predicated region
  $region10: #{_lambda_.1} parent=0 // pred_check
    _
  $region11: #{_lambda_.1} parent=0 // pred_check_branch
    %36 = sbr.rel (0) target = $region13
  $region12: #{_lambda_.1} parent=0 // pred_region
    _
  $region13: #{_lambda_.1} parent=0 // pred_fallthru
    _
  // Predicated region
  $region14: #{_lambda_.1} parent=0 // pred_check
    _
  $region15: #{_lambda_.1} parent=0 // pred_check_branch
    %38 = sbr.rel (0) target = $region17
  $region16: #{_lambda_.1} parent=0 // pred_region
    _
  $region17: #{_lambda_.1} parent=0 // pred_fallthru
    _
  // Predicated region
  $region18: #{_lambda_.1} parent=0 // pred_check
    _
  $region19: #{_lambda_.1} parent=0 // pred_check_branch
    %40 = sbr.rel (0) target = $region21
  $region20: #{_lambda_.1} parent=0 // pred_region
    _
  $region21: #{_lambda_.1} parent=0 // pred_fallthru
    _
  // Predicated region
  $region22: #{_lambda_.1} parent=0 // pred_check
    _
  $region23: #{_lambda_.1} parent=0 // pred_check_branch
    %42 = sbr.rel (0) target = $region25
  $region24: #{_lambda_.1} parent=0 // pred_region
    _
  $region25: #{_lambda_.1} parent=0 // pred_fallthru
    _
  // Predicated region
  $region26: #{_lambda_.1} parent=0 // pred_check
    _
  $region27: #{_lambda_.1} parent=0 // pred_check_branch
    %44 = sbr.rel (0) target = $region29
  $region28: #{_lambda_.1} parent=0 // pred_region
    _
  $region29: #{_lambda_.1} parent=0 // pred_fallthru
    _
  // Predicated region
  $region30: #{_lambda_.1} parent=0 // pred_check
    _
  $region31: #{_lambda_.1} parent=0 // pred_check_branch
    %46 = sbr.rel (0) target = $region33
  $region32: #{_lambda_.1} parent=0 // pred_region
    _
  $region33: #{_lambda_.1} parent=0 // pred_fallthru
    _
  // Predicated region
  $region34: #{_lambda_.1} parent=0 // pred_check
    _
  $region35: #{_lambda_.1} parent=0 // pred_check_branch
    %48 = sbr.rel (0) target = $region37
  $region36: #{_lambda_.1} parent=0 // pred_region
    _
  $region37: #{_lambda_.1} parent=0 // pred_fallthru
    _
  // Predicated region
  $region38: #{_lambda_.1} parent=0 // pred_check
    _
  $region39: #{_lambda_.1} parent=0 // pred_check_branch
    %50 = sbr.rel (0) target = $region41
  $region40: #{_lambda_.1} parent=0 // pred_region
    _
  $region41: #{_lambda_.1} parent=0 // pred_fallthru
    _
  // Predicated region
  $region42: #{_lambda_.1} parent=0 // pred_check
    _
  $region43: #{_lambda_.1} parent=0 // pred_check_branch
    %52 = sbr.rel (0) target = $region45
  $region44: #{_lambda_.1} parent=0 // pred_region
    _
  $region45: #{_lambda_.1} parent=0 // pred_fallthru
    _
  // Predicated region
  $region46: #{_lambda_.1} parent=0 // pred_check
    _
  $region47: #{_lambda_.1} parent=0 // pred_check_branch
    %54 = sbr.rel (0) target = $region49
  $region48: #{_lambda_.1} parent=0 // pred_region
    _
  $region49: #{_lambda_.1} parent=0 // pred_fallthru
    _
  // Predicated region
  $region50: #{_lambda_.1} parent=0 // pred_check
    _
  $region51: #{_lambda_.1} parent=0 // pred_check_branch
    %56 = sbr.rel (0) target = $region53
  $region52: #{_lambda_.1} parent=0 // pred_region
    _
  $region53: #{_lambda_.1} parent=0 // pred_fallthru
    _
  // Predicated region
  $region54: #{_lambda_.1} parent=0 // pred_check
    _
  $region55: #{_lambda_.1} parent=0 // pred_check_branch
    %58 = sbr.rel (0) target = $region57
  $region56: #{_lambda_.1} parent=0 // pred_region
    _
  $region57: #{_lambda_.1} parent=0 // pred_fallthru
    _
  // Predicated region
  $region58: #{_lambda_.1} parent=0 // pred_check
    _
  $region59: #{_lambda_.1} parent=0 // pred_check_branch
    %60 = sbr.rel (0) target = $region61
  $region60: #{_lambda_.1} parent=0 // pred_region
    _
  $region61: #{_lambda_.1} parent=0 // pred_fallthru
    _
  // Predicated region
  $region62: #{_lambda_.1} parent=0 // pred_check
    _
  $region63: #{_lambda_.1} parent=0 // pred_check_branch
    %62 = sbr.rel (0) target = $region65
  $region64: #{_lambda_.1} parent=0 // pred_region
    _
  $region65: #{_lambda_.1} parent=0 // pred_fallthru
    _
  // Predicated region
  $region66: #{_lambda_.1} parent=0 // pred_check
    _
  $region67: #{_lambda_.1} parent=0 // pred_check_branch
    %64 = sbr.rel (0) target = $region69
  $region68: #{_lambda_.1} parent=0 // pred_region
    _
  $region69: #{_lambda_.1} parent=0 // pred_fallthru
    _
  // Predicated region
  $region70: #{_lambda_.1} parent=0 // pred_check
    _
  $region71: #{_lambda_.1} parent=0 // pred_check_branch
    %66 = sbr.rel (0) target = $region73
  $region72: #{_lambda_.1} parent=0 // pred_region
    _
  $region73: #{_lambda_.1} parent=0 // pred_fallthru
    _
  // Predicated region
  $region74: #{_lambda_.1} parent=0 // pred_check
    _
  $region75: #{_lambda_.1} parent=0 // pred_check_branch
    %68 = sbr.rel (0) target = $region77
  $region76: #{_lambda_.1} parent=0 // pred_region
    _
  $region77: #{_lambda_.1} parent=0 // pred_fallthru
    _
  // Predicated region
  $region78: #{_lambda_.1} parent=0 // pred_check
    _
  $region79: #{_lambda_.1} parent=0 // pred_check_branch
    %70 = sbr.rel (0) target = $region81
  $region80: #{_lambda_.1} parent=0 // pred_region
    _
  $region81: #{_lambda_.1} parent=0 // pred_fallthru
    _
  // Predicated region
  $region82: #{_lambda_.1} parent=0 // pred_check
    _
  $region83: #{_lambda_.1} parent=0 // pred_check_branch
    %72 = sbr.rel (0) target = $region85
  $region84: #{_lambda_.1} parent=0 // pred_region
    _
  $region85: #{_lambda_.1} parent=0 // pred_fallthru
    _
  // Predicated region
  $region86: #{_lambda_.1} parent=0 // pred_check
    _
  $region87: #{_lambda_.1} parent=0 // pred_check_branch
    %74 = sbr.rel (0) target = $region89
  $region88: #{_lambda_.1} parent=0 // pred_region
    _
  $region89: #{_lambda_.1} parent=0 // pred_fallthru
    _
  // Predicated region
  $region90: #{_lambda_.1} parent=0 // pred_check
    _
  $region91: #{_lambda_.1} parent=0 // pred_check_branch
    %76 = sbr.rel (0) target = $region93
  $region92: #{_lambda_.1} parent=0 // pred_region
    _
  $region93: #{_lambda_.1} parent=0 // pred_fallthru
    _
  %v77 = vld [vmem:[%s0] sm:$0xff]
  %v78 = vld [vmem:[%s0 + $0x8] sm:$0xff]
  %v79 = vld [vmem:[%s0 + $0x10] sm:$0xff]
  %v80 = vld [vmem:[%s0 + $0x18] sm:$0xff]
  %v81 = vld [vmem:[%s2] sm:$0xff]
  %v82 = vld [vmem:[%s2 + $0x8] sm:$0xff]
  %v83 = vld [vmem:[%s2 + $0x10] sm:$0xff]
  %v84 = vld [vmem:[%s2 + $0x18] sm:$0xff]
  %vm85 = vcmask 130048
  %v87 = vsel %vm85, %v77, 0
  %v90 = vsel %vm85, %v78, 0
  %92 = vmatprep.subr.mxu0 0.0
  %93 = vmatpush1.msra.mxu0 %v81
  %94 = vmatprep.subr.mxu0 0.0
  %95 = vmatpush1.msra.mxu0 %v82
  %96 = vmatprep.subr.mxu0 0.0
  %97 = vmatpush1.msra.mxu0 0.0
  %98 = vmatprep.subr.mxu0 0.0
  %99 = vmatpush1.msra.mxu0 0.0
  %100 = vmatprep.subr.mxu0 0.0
  %101 = vmatpush1.msra.mxu0 0.0
  %102 = vmatprep.subr.mxu0 0.0
  %103 = vmatpush1.msra.mxu0 0.0
  %104 = vmatprep.subr.mxu0 0.0
  %105 = vmatpush1.msra.mxu0 0.0
  %106 = vmatprep.subr.mxu0 0.0
  %107 = vmatpush1.msra.mxu0 0.0
  %108 = vmatprep.subr.mxu0 0.0
  %109 = vmatpush1.msra.mxu0 0.0
  %110 = vmatprep.subr.mxu0 0.0
  %111 = vmatpush1.msra.mxu0 0.0
  %112 = vmatprep.subr.mxu0 0.0
  %113 = vmatpush1.msra.mxu0 0.0
  %114 = vmatprep.subr.mxu0 0.0
  %115 = vmatpush1.msra.mxu0 0.0
  %116 = vmatprep.subr.mxu0 0.0
  %117 = vmatpush1.msra.mxu0 0.0
  %118 = vmatprep.subr.mxu0 0.0
  %119 = vmatpush1.msra.mxu0 0.0
  %120 = vmatprep.subr.mxu0 0.0
  %121 = vmatpush1.msra.mxu0 0.0
  %122 = vmatprep.subr.mxu0 0.0
  %123 = vmatpush1.msra.mxu0 0.0
  %124 = vmatprep.subr.mxu0 0.0
  %125 = vmatpush1.msra.mxu0 0.0
  %126 = vmatprep.subr.mxu0 0.0
  %127 = vmatpush1.msra.mxu0 0.0
  %128 = vmatprep.subr.mxu0 0.0
  %129 = vmatpush1.msra.mxu0 0.0
  %130 = vmatprep.subr.mxu0 0.0
  %131 = vmatpush1.msra.mxu0 0.0
  %132 = vmatprep.subr.mxu0 0.0
  %133 = vmatpush1.msra.mxu0 0.0
  %134 = vmatprep.subr.mxu0 0.0
  %135 = vmatpush1.msra.mxu0 0.0
  %136 = vmatprep.subr.mxu0 0.0
  %137 = vmatpush1.msra.mxu0 0.0
  %138 = vmatprep.subr.mxu0 0.0
  %139 = vmatpush1.msra.mxu0 0.0
  %140 = vmatprep.subr.mxu0 0.0
  %141 = vmatpush1.msra.mxu0 0.0
  %142 = vmatprep.subr.mxu0 0.0
  %143 = vmatpush1.msra.mxu0 0.0
  %144 = vmatprep.subr.mxu0 0.0
  %145 = vmatpush1.msra.mxu0 0.0
  %146 = vmatprep.subr.mxu0 0.0
  %147 = vmatpush1.msra.mxu0 0.0
  %148 = vmatprep.subr.mxu0 0.0
  %149 = vmatpush1.msra.mxu0 0.0
  %150 = vmatprep.subr.mxu0 0.0
  %151 = vmatpush1.msra.mxu0 0.0
  %152 = vmatprep.subr.mxu0 0.0
  %153 = vmatpush1.msra.mxu0 0.0
  %154 = vmatprep.subr.mxu0 0.0
  %155 = vmatpush1.msra.mxu0 0.0
  %156 = vmatprep.mubr.f32.mxu0 0.0
  %157 = vmatmul.mubr.f32.gmra.mrb[0].mxu0 %v87
  %v158 = vpop.f32.mrb[0].mxu0
  %v159 = vadd.f32 0.0, %v158
  %v160 = vpop.f32.mrb[0].mxu0
  %161 = vmatprep.mubr.f32.mxu0 0.0
  %162 = vmatmul.mubr.f32.gmra.mrb[0].mxu0 %v90
  %v163 = vpop.f32.mrb[0].mxu0
  %v164 = vadd.f32 0.0, %v163
  %v165 = vpop.f32.mrb[0].mxu0
  %166 = vdwg.mxu0
  %v168 = vsel %vm85, %v79, 0
  %v171 = vsel %vm85, %v80, 0
  %173 = vmatprep.subr.mxu0 0.0
  %174 = vmatpush1.msra.mxu0 %v83
  %175 = vmatprep.subr.mxu0 0.0
  %176 = vmatpush1.msra.mxu0 %v84
  %177 = vmatprep.subr.mxu0 0.0
  %178 = vmatpush1.msra.mxu0 0.0
  %179 = vmatprep.subr.mxu0 0.0
  %180 = vmatpush1.msra.mxu0 0.0
  %181 = vmatprep.subr.mxu0 0.0
  %182 = vmatpush1.msra.mxu0 0.0
  %183 = vmatprep.subr.mxu0 0.0
  %184 = vmatpush1.msra.mxu0 0.0
  %185 = vmatprep.subr.mxu0 0.0
  %186 = vmatpush1.msra.mxu0 0.0
  %187 = vmatprep.subr.mxu0 0.0
  %188 = vmatpush1.msra.mxu0 0.0
  %189 = vmatprep.subr.mxu0 0.0
  %190 = vmatpush1.msra.mxu0 0.0
  %191 = vmatprep.subr.mxu0 0.0
  %192 = vmatpush1.msra.mxu0 0.0
  %193 = vmatprep.subr.mxu0 0.0
  %194 = vmatpush1.msra.mxu0 0.0
  %195 = vmatprep.subr.mxu0 0.0
  %196 = vmatpush1.msra.mxu0 0.0
  %197 = vmatprep.subr.mxu0 0.0
  %198 = vmatpush1.msra.mxu0 0.0
  %199 = vmatprep.subr.mxu0 0.0
  %200 = vmatpush1.msra.mxu0 0.0
  %201 = vmatprep.subr.mxu0 0.0
  %202 = vmatpush1.msra.mxu0 0.0
  %203 = vmatprep.subr.mxu0 0.0
  %204 = vmatpush1.msra.mxu0 0.0
  %205 = vmatprep.subr.mxu0 0.0
  %206 = vmatpush1.msra.mxu0 0.0
  %207 = vmatprep.subr.mxu0 0.0
  %208 = vmatpush1.msra.mxu0 0.0
  %209 = vmatprep.subr.mxu0 0.0
  %210 = vmatpush1.msra.mxu0 0.0
  %211 = vmatprep.subr.mxu0 0.0
  %212 = vmatpush1.msra.mxu0 0.0
  %213 = vmatprep.subr.mxu0 0.0
  %214 = vmatpush1.msra.mxu0 0.0
  %215 = vmatprep.subr.mxu0 0.0
  %216 = vmatpush1.msra.mxu0 0.0
  %217 = vmatprep.subr.mxu0 0.0
  %218 = vmatpush1.msra.mxu0 0.0
  %219 = vmatprep.subr.mxu0 0.0
  %220 = vmatpush1.msra.mxu0 0.0
  %221 = vmatprep.subr.mxu0 0.0
  %222 = vmatpush1.msra.mxu0 0.0
  %223 = vmatprep.subr.mxu0 0.0
  %224 = vmatpush1.msra.mxu0 0.0
  %225 = vmatprep.subr.mxu0 0.0
  %226 = vmatpush1.msra.mxu0 0.0
  %227 = vmatprep.subr.mxu0 0.0
  %228 = vmatpush1.msra.mxu0 0.0
  %229 = vmatprep.subr.mxu0 0.0
  %230 = vmatpush1.msra.mxu0 0.0
  %231 = vmatprep.subr.mxu0 0.0
  %232 = vmatpush1.msra.mxu0 0.0
  %233 = vmatprep.subr.mxu0 0.0
  %234 = vmatpush1.msra.mxu0 0.0
  %235 = vmatprep.subr.mxu0 0.0
  %236 = vmatpush1.msra.mxu0 0.0
  %237 = vmatprep.mubr.f32.mxu0 0.0
  %238 = vmatmul.mubr.f32.gmra.mrb[0].mxu0 %v168
  %v239 = vpop.f32.mrb[0].mxu0
  %v240 = vadd.f32 0.0, %v239
  %v241 = vpop.f32.mrb[0].mxu0
  %242 = vmatprep.mubr.f32.mxu0 0.0
  %243 = vmatmul.mubr.f32.gmra.mrb[0].mxu0 %v171
  %v244 = vpop.f32.mrb[0].mxu0
  %v245 = vadd.f32 0.0, %v244
  %v246 = vpop.f32.mrb[0].mxu0
  %247 = vdwg.mxu0
  %v248 = vld [vmem:[%s3] sm:$0xff]
  %v249 = vld [vmem:[%s3 + $0x8] sm:$0xff]
  %v250 = vld [vmem:[%s3 + $0x10] sm:$0xff]
  %v251 = vld [vmem:[%s3 + $0x18] sm:$0xff]
  %v252 = vadd.f32 %v159, %v248
  %v253 = vadd.f32 %v164, %v249
  %v254 = vadd.f32 %v240, %v250
  %v255 = vadd.f32 %v245, %v251
  %v256 = vld [vmem:[%s4] sm:$0x1]
  %v258 = vlaneseq
  %v259 = vshrl.u32 %v258, 7
  %v260 = vsub.s32 0, %v259
  %v261 = vrot.slane %v256, %v260
  %v263 = vadd.f32 %v252, %v261
  %v264 = vadd.f32 %v253, %v261
  %v265 = vadd.f32 %v254, %v261
  %v266 = vadd.f32 %v255, %v261
  %v267 = vld [vmem:[%s5] sm:$0x1]
  %v268 = vld [vmem:[%s6] sm:$0x1]
  %vm269 = vcmask 261120
  %v270 = vsel %vm269, %v263, 0.0
  %271 = vadd.xlane.f32.xlu0 %v270
  %v272 = vpop.xlane.xlu0 %271
  %v273 = vsel %vm269, %v264, 0.0
  %274 = vadd.xlane.f32.xlu0 %v273
  %v275 = vpop.xlane.xlu0 %274
  %v276 = vsel %vm269, %v265, 0.0
  %277 = vadd.xlane.f32.xlu0 %v276
  %v278 = vpop.xlane.xlu0 %277
  %v279 = vsel %vm269, %v266, 0.0
  %280 = vadd.xlane.f32.xlu0 %v279
  %v281 = vpop.xlane.xlu0 %280
  %v282 = vrcp.pop 32.0
  %v283 = vmul.f32 %v272, %v282
  %v284 = vmul.f32 %v275, %v282
  %v285 = vmul.f32 %v278, %v282
  %v286 = vmul.f32 %v281, %v282
  %v287 = vsub.f32 %v263, %v283
  %v288 = vsub.f32 %v264, %v284
  %v289 = vsub.f32 %v265, %v285
  %v290 = vsub.f32 %v266, %v286
  %v291 = vmul.f32 %v287, %v287
  %v292 = vmul.f32 %v288, %v288
  %v293 = vmul.f32 %v289, %v289
  %v294 = vmul.f32 %v290, %v290
  %v295 = vsel %vm269, %v291, 0.0
  %296 = vadd.xlane.f32.xlu0 %v295
  %v297 = vpop.xlane.xlu0 %296
  %v298 = vsel %vm269, %v292, 0.0
  %299 = vadd.xlane.f32.xlu0 %v298
  %v300 = vpop.xlane.xlu0 %299
  %v301 = vsel %vm269, %v293, 0.0
  %302 = vadd.xlane.f32.xlu0 %v301
  %v303 = vpop.xlane.xlu0 %302
  %v304 = vsel %vm269, %v294, 0.0
  %305 = vadd.xlane.f32.xlu0 %v304
  %v306 = vpop.xlane.xlu0 %305
  %v307 = vmul.f32 %v297, %v282
  %v308 = vmul.f32 %v300, %v282
  %v309 = vmul.f32 %v303, %v282
  %v310 = vmul.f32 %v306, %v282
  %v311 = vadd.f32 %v307, 1e-05
  %v312 = vadd.f32 %v308, 1e-05
  %v313 = vadd.f32 %v309, 1e-05
  %v314 = vadd.f32 %v310, 1e-05
  %v315 = vrsqrt.pop %v311
  %v316 = vrsqrt.pop %v312
  %v317 = vrsqrt.pop %v313
  %v318 = vrsqrt.pop %v314
  %v319 = vmul.f32 %v287, %v315
  %v320 = vmul.f32 %v288, %v316
  %v321 = vmul.f32 %v289, %v317
  %v322 = vmul.f32 %v290, %v318
  %v324 = vlaneseq
  %v325 = vshrl.u32 %v324, 7
  %v326 = vsub.s32 0, %v325
  %v327 = vrot.slane %v267, %v326
  %v329 = vmul.f32 %v319, %v327
  %v330 = vmul.f32 %v320, %v327
  %v331 = vmul.f32 %v321, %v327
  %v332 = vmul.f32 %v322, %v327
  %v334 = vlaneseq
  %v335 = vshrl.u32 %v334, 7
  %v336 = vsub.s32 0, %v335
  %v337 = vrot.slane %v268, %v336
  %v339 = vadd.f32 %v329, %v337
  %v340 = vadd.f32 %v330, %v337
  %v341 = vadd.f32 %v331, %v337
  %v342 = vadd.f32 %v332, %v337
  %343 = vst.msk [vmem:[%s24] sm:$0xff] %vm269, %v339
  %344 = vst.msk [vmem:[%s24 + $0x8] sm:$0xff] %vm269, %v340
  %345 = vst.msk [vmem:[%s24 + $0x10] sm:$0xff] %vm269, %v341
  %346 = vst.msk [vmem:[%s24 + $0x18] sm:$0xff] %vm269, %v342
  %v347 = vld [vmem:[%s1] sm:$0xff]
  %v348 = vld [vmem:[%s1 + $0x8] sm:$0xff]
  %v349 = vld [vmem:[%s1 + $0x10] sm:$0xff]
  %v350 = vld [vmem:[%s1 + $0x18] sm:$0xff]
  %v351 = vld [vmem:[%s7] sm:$0xff]
  %v352 = vld [vmem:[%s7 + $0x8] sm:$0xff]
  %v353 = vld [vmem:[%s7 + $0x10] sm:$0xff]
  %v354 = vld [vmem:[%s7 + $0x18] sm:$0xff]
  %v355 = vld [vmem:[%s8] sm:$0x1]
  %v357 = vlaneseq
  %v358 = vshrl.u32 %v357, 7
  %v359 = vsub.s32 0, %v358
  %v360 = vrot.slane %v355, %v359
  %v363 = vsel %vm269, %v339, 0
  %v366 = vsel %vm269, %v340, 0
  %v369 = vsel %vm269, %v341, 0
  %v372 = vsel %vm269, %v342, 0
  %374 = vmatprep.subr.mxu0 0.0
  %375 = vmatpush1.msra.mxu0 %v351
  %376 = vmatprep.subr.mxu0 0.0
  %377 = vmatpush1.msra.mxu0 %v352
  %378 = vmatprep.subr.mxu0 0.0
  %379 = vmatpush1.msra.mxu0 %v353
  %380 = vmatprep.subr.mxu0 0.0
  %381 = vmatpush1.msra.mxu0 %v354
  %382 = vmatprep.subr.mxu0 0.0
  %383 = vmatpush1.msra.mxu0 0.0
  %384 = vmatprep.subr.mxu0 0.0
  %385 = vmatpush1.msra.mxu0 0.0
  %386 = vmatprep.subr.mxu0 0.0
  %387 = vmatpush1.msra.mxu0 0.0
  %388 = vmatprep.subr.mxu0 0.0
  %389 = vmatpush1.msra.mxu0 0.0
  %390 = vmatprep.subr.mxu0 0.0
  %391 = vmatpush1.msra.mxu0 0.0
  %392 = vmatprep.subr.mxu0 0.0
  %393 = vmatpush1.msra.mxu0 0.0
  %394 = vmatprep.subr.mxu0 0.0
  %395 = vmatpush1.msra.mxu0 0.0
  %396 = vmatprep.subr.mxu0 0.0
  %397 = vmatpush1.msra.mxu0 0.0
  %398 = vmatprep.subr.mxu0 0.0
  %399 = vmatpush1.msra.mxu0 0.0
  %400 = vmatprep.subr.mxu0 0.0
  %401 = vmatpush1.msra.mxu0 0.0
  %402 = vmatprep.subr.mxu0 0.0
  %403 = vmatpush1.msra.mxu0 0.0
  %404 = vmatprep.subr.mxu0 0.0
  %405 = vmatpush1.msra.mxu0 0.0
  %406 = vmatprep.subr.mxu0 0.0
  %407 = vmatpush1.msra.mxu0 0.0
  %408 = vmatprep.subr.mxu0 0.0
  %409 = vmatpush1.msra.mxu0 0.0
  %410 = vmatprep.subr.mxu0 0.0
  %411 = vmatpush1.msra.mxu0 0.0
  %412 = vmatprep.subr.mxu0 0.0
  %413 = vmatpush1.msra.mxu0 0.0
  %414 = vmatprep.subr.mxu0 0.0
  %415 = vmatpush1.msra.mxu0 0.0
  %416 = vmatprep.subr.mxu0 0.0
  %417 = vmatpush1.msra.mxu0 0.0
  %418 = vmatprep.subr.mxu0 0.0
  %419 = vmatpush1.msra.mxu0 0.0
  %420 = vmatprep.subr.mxu0 0.0
  %421 = vmatpush1.msra.mxu0 0.0
  %422 = vmatprep.subr.mxu0 0.0
  %423 = vmatpush1.msra.mxu0 0.0
  %424 = vmatprep.subr.mxu0 0.0
  %425 = vmatpush1.msra.mxu0 0.0
  %426 = vmatprep.subr.mxu0 0.0
  %427 = vmatpush1.msra.mxu0 0.0
  %428 = vmatprep.subr.mxu0 0.0
  %429 = vmatpush1.msra.mxu0 0.0
  %430 = vmatprep.subr.mxu0 0.0
  %431 = vmatpush1.msra.mxu0 0.0
  %432 = vmatprep.subr.mxu0 0.0
  %433 = vmatpush1.msra.mxu0 0.0
  %434 = vmatprep.subr.mxu0 0.0
  %435 = vmatpush1.msra.mxu0 0.0
  %436 = vmatprep.subr.mxu0 0.0
  %437 = vmatpush1.msra.mxu0 0.0
  %438 = vmatprep.mubr.f32.mxu0 0.0
  %439 = vmatmul.mubr.f32.gmra.mrb[0].mxu0 %v363
  %v440 = vpop.f32.mrb[0].mxu0
  %v441 = vadd.f32 %v360, %v440
  %v442 = vpop.f32.mrb[0].mxu0
  %443 = vmatprep.mubr.f32.mxu0 0.0
  %444 = vmatmul.mubr.f32.gmra.mrb[0].mxu0 %v366
  %v445 = vpop.f32.mrb[0].mxu0
  %v446 = vadd.f32 %v360, %v445
  %v447 = vpop.f32.mrb[0].mxu0
  %448 = vmatprep.mubr.f32.mxu0 0.0
  %449 = vmatmul.mubr.f32.gmra.mrb[0].mxu0 %v369
  %v450 = vpop.f32.mrb[0].mxu0
  %v451 = vadd.f32 %v360, %v450
  %v452 = vpop.f32.mrb[0].mxu0
  %453 = vmatprep.mubr.f32.mxu0 0.0
  %454 = vmatmul.mubr.f32.gmra.mrb[0].mxu0 %v372
  %v455 = vpop.f32.mrb[0].mxu0
  %v456 = vadd.f32 %v360, %v455
  %v457 = vpop.f32.mrb[0].mxu0
  %458 = vdwg.mxu0
  %461 = vrot.lane.b32.xlu0 %v441, 96
  %v462 = vpop.permute.xlu0 %461
  %463 = vrot.lane.b32.xlu0 %v446, 96
  %v464 = vpop.permute.xlu0 %463
  %vm465 = vcmask 64512
  %v466 = vsel %vm465, %v441, 0
  %v468 = vsel %vm465, %v446, 0
  %v470 = vsel %vm465, %v462, 0
  %v472 = vsel %vm465, %v464, 0
  %474 = vmatprep.subr.mxu0 0.0
  %475 = vmatpush1.xpose.msra.mxu0 %v470
  %476 = vmatprep.subr.mxu0 0.0
  %477 = vmatpush1.xpose.msra.mxu0 %v472
  %478 = vmatprep.subr.mxu0 0.0
  %479 = vmatpush1.xpose.msra.mxu0 0.0
  %480 = vmatprep.subr.mxu0 0.0
  %481 = vmatpush1.xpose.msra.mxu0 0.0
  %482 = vmatprep.subr.mxu0 0.0
  %483 = vmatpush1.xpose.msra.mxu0 0.0
  %484 = vmatprep.subr.mxu0 0.0
  %485 = vmatpush1.xpose.msra.mxu0 0.0
  %486 = vmatprep.subr.mxu0 0.0
  %487 = vmatpush1.xpose.msra.mxu0 0.0
  %488 = vmatprep.subr.mxu0 0.0
  %489 = vmatpush1.xpose.msra.mxu0 0.0
  %490 = vmatprep.subr.mxu0 0.0
  %491 = vmatpush1.xpose.msra.mxu0 0.0
  %492 = vmatprep.subr.mxu0 0.0
  %493 = vmatpush1.xpose.msra.mxu0 0.0
  %494 = vmatprep.subr.mxu0 0.0
  %495 = vmatpush1.xpose.msra.mxu0 0.0
  %496 = vmatprep.subr.mxu0 0.0
  %497 = vmatpush1.xpose.msra.mxu0 0.0
  %498 = vmatprep.subr.mxu0 0.0
  %499 = vmatpush1.xpose.msra.mxu0 0.0
  %500 = vmatprep.subr.mxu0 0.0
  %501 = vmatpush1.xpose.msra.mxu0 0.0
  %502 = vmatprep.subr.mxu0 0.0
  %503 = vmatpush1.xpose.msra.mxu0 0.0
  %504 = vmatprep.subr.mxu0 0.0
  %505 = vmatpush1.xpose.msra.mxu0 0.0
  %506 = vmatprep.subr.mxu0 0.0
  %507 = vmatpush1.xpose.msra.mxu0 0.0
  %508 = vmatprep.subr.mxu0 0.0
  %509 = vmatpush1.xpose.msra.mxu0 0.0
  %510 = vmatprep.subr.mxu0 0.0
  %511 = vmatpush1.xpose.msra.mxu0 0.0
  %512 = vmatprep.subr.mxu0 0.0
  %513 = vmatpush1.xpose.msra.mxu0 0.0
  %514 = vmatprep.subr.mxu0 0.0
  %515 = vmatpush1.xpose.msra.mxu0 0.0
  %516 = vmatprep.subr.mxu0 0.0
  %517 = vmatpush1.xpose.msra.mxu0 0.0
  %518 = vmatprep.subr.mxu0 0.0
  %519 = vmatpush1.xpose.msra.mxu0 0.0
  %520 = vmatprep.subr.mxu0 0.0
  %521 = vmatpush1.xpose.msra.mxu0 0.0
  %522 = vmatprep.subr.mxu0 0.0
  %523 = vmatpush1.xpose.msra.mxu0 0.0
  %524 = vmatprep.subr.mxu0 0.0
  %525 = vmatpush1.xpose.msra.mxu0 0.0
  %526 = vmatprep.subr.mxu0 0.0
  %527 = vmatpush1.xpose.msra.mxu0 0.0
  %528 = vmatprep.subr.mxu0 0.0
  %529 = vmatpush1.xpose.msra.mxu0 0.0
  %530 = vmatprep.subr.mxu0 0.0
  %531 = vmatpush1.xpose.msra.mxu0 0.0
  %532 = vmatprep.subr.mxu0 0.0
  %533 = vmatpush1.xpose.msra.mxu0 0.0
  %534 = vmatprep.subr.mxu0 0.0
  %535 = vmatpush1.xpose.msra.mxu0 0.0
  %536 = vmatprep.subr.mxu0 0.0
  %537 = vmatpush1.xpose.msra.mxu0 0.0
  %538 = vmatprep.mubr.f32.mxu0 0.0
  %539 = vmatmul.mubr.f32.gmra.mrb[0].mxu0 %v466
  %v540 = vpop.f32.mrb[0].mxu0
  %v541 = vadd.f32 0.0, %v540
  %v542 = vpop.f32.mrb[0].mxu0
  %543 = vmatprep.mubr.f32.mxu0 0.0
  %544 = vmatmul.mubr.f32.gmra.mrb[0].mxu0 %v468
  %v545 = vpop.f32.mrb[0].mxu0
  %v546 = vadd.f32 0.0, %v545
  %v547 = vpop.f32.mrb[0].mxu0
  %548 = vdwg.mxu0
  %551 = vrot.lane.b32.xlu0 %v451, 96
  %v552 = vpop.permute.xlu0 %551
  %553 = vrot.lane.b32.xlu0 %v456, 96
  %v554 = vpop.permute.xlu0 %553
  %v555 = vsel %vm465, %v451, 0
  %v557 = vsel %vm465, %v456, 0
  %v559 = vsel %vm465, %v552, 0
  %v561 = vsel %vm465, %v554, 0
  %563 = vmatprep.subr.mxu0 0.0
  %564 = vmatpush1.xpose.msra.mxu0 %v559
  %565 = vmatprep.subr.mxu0 0.0
  %566 = vmatpush1.xpose.msra.mxu0 %v561
  %567 = vmatprep.subr.mxu0 0.0
  %568 = vmatpush1.xpose.msra.mxu0 0.0
  %569 = vmatprep.subr.mxu0 0.0
  %570 = vmatpush1.xpose.msra.mxu0 0.0
  %571 = vmatprep.subr.mxu0 0.0
  %572 = vmatpush1.xpose.msra.mxu0 0.0
  %573 = vmatprep.subr.mxu0 0.0
  %574 = vmatpush1.xpose.msra.mxu0 0.0
  %575 = vmatprep.subr.mxu0 0.0
  %576 = vmatpush1.xpose.msra.mxu0 0.0
  %577 = vmatprep.subr.mxu0 0.0
  %578 = vmatpush1.xpose.msra.mxu0 0.0
  %579 = vmatprep.subr.mxu0 0.0
  %580 = vmatpush1.xpose.msra.mxu0 0.0
  %581 = vmatprep.subr.mxu0 0.0
  %582 = vmatpush1.xpose.msra.mxu0 0.0
  %583 = vmatprep.subr.mxu0 0.0
  %584 = vmatpush1.xpose.msra.mxu0 0.0
  %585 = vmatprep.subr.mxu0 0.0
  %586 = vmatpush1.xpose.msra.mxu0 0.0
  %587 = vmatprep.subr.mxu0 0.0
  %588 = vmatpush1.xpose.msra.mxu0 0.0
  %589 = vmatprep.subr.mxu0 0.0
  %590 = vmatpush1.xpose.msra.mxu0 0.0
  %591 = vmatprep.subr.mxu0 0.0
  %592 = vmatpush1.xpose.msra.mxu0 0.0
  %593 = vmatprep.subr.mxu0 0.0
  %594 = vmatpush1.xpose.msra.mxu0 0.0
  %595 = vmatprep.subr.mxu0 0.0
  %596 = vmatpush1.xpose.msra.mxu0 0.0
  %597 = vmatprep.subr.mxu0 0.0
  %598 = vmatpush1.xpose.msra.mxu0 0.0
  %599 = vmatprep.subr.mxu0 0.0
  %600 = vmatpush1.xpose.msra.mxu0 0.0
  %601 = vmatprep.subr.mxu0 0.0
  %602 = vmatpush1.xpose.msra.mxu0 0.0
  %603 = vmatprep.subr.mxu0 0.0
  %604 = vmatpush1.xpose.msra.mxu0 0.0
  %605 = vmatprep.subr.mxu0 0.0
  %606 = vmatpush1.xpose.msra.mxu0 0.0
  %607 = vmatprep.subr.mxu0 0.0
  %608 = vmatpush1.xpose.msra.mxu0 0.0
  %609 = vmatprep.subr.mxu0 0.0
  %610 = vmatpush1.xpose.msra.mxu0 0.0
  %611 = vmatprep.subr.mxu0 0.0
  %612 = vmatpush1.xpose.msra.mxu0 0.0
  %613 = vmatprep.subr.mxu0 0.0
  %614 = vmatpush1.xpose.msra.mxu0 0.0
  %615 = vmatprep.subr.mxu0 0.0
  %616 = vmatpush1.xpose.msra.mxu0 0.0
  %617 = vmatprep.subr.mxu0 0.0
  %618 = vmatpush1.xpose.msra.mxu0 0.0
  %619 = vmatprep.subr.mxu0 0.0
  %620 = vmatpush1.xpose.msra.mxu0 0.0
  %621 = vmatprep.subr.mxu0 0.0
  %622 = vmatpush1.xpose.msra.mxu0 0.0
  %623 = vmatprep.subr.mxu0 0.0
  %624 = vmatpush1.xpose.msra.mxu0 0.0
  %625 = vmatprep.subr.mxu0 0.0
  %626 = vmatpush1.xpose.msra.mxu0 0.0
  %627 = vmatprep.mubr.f32.mxu0 0.0
  %628 = vmatmul.mubr.f32.gmra.mrb[0].mxu0 %v555
  %v629 = vpop.f32.mrb[0].mxu0
  %v630 = vadd.f32 0.0, %v629
  %v631 = vpop.f32.mrb[0].mxu0
  %632 = vmatprep.mubr.f32.mxu0 0.0
  %633 = vmatmul.mubr.f32.gmra.mrb[0].mxu0 %v557
  %v634 = vpop.f32.mrb[0].mxu0
  %v635 = vadd.f32 0.0, %v634
  %v636 = vpop.f32.mrb[0].mxu0
  %637 = vdwg.mxu0
  %v638 = vmul.f32 %v541, 0.35355338
  %v639 = vmul.f32 %v546, 0.35355338
  %v640 = vmul.f32 %v630, 0.35355338
  %v641 = vmul.f32 %v635, 0.35355338
  %v642 = vadd.f32 %v638, %v347
  %v643 = vadd.f32 %v639, %v348
  %v644 = vadd.f32 %v640, %v349
  %v645 = vadd.f32 %v641, %v350
  %v646 = vsel %vm85, %v642, -inf
  %647 = vmax.xlane.f32.xlu0 %v646
  %v648 = vpop.xlane.xlu0 %647
  %v649 = vsel %vm85, %v643, -inf
  %650 = vmax.xlane.f32.xlu0 %v649
  %v651 = vpop.xlane.xlu0 %650
  %v652 = vsel %vm85, %v644, -inf
  %653 = vmax.xlane.f32.xlu0 %v652
  %v654 = vpop.xlane.xlu0 %653
  %v655 = vsel %vm85, %v645, -inf
  %656 = vmax.xlane.f32.xlu0 %v655
  %v657 = vpop.xlane.xlu0 %656
  %v658 = vsub.f32 %v642, %v648
  %v659 = vsub.f32 %v643, %v651
  %v660 = vsub.f32 %v644, %v654
  %v661 = vsub.f32 %v645, %v657
  %v662 = vmul.f32 %v658, 1.442695
  %v663 = vpow.pop %v662
  %v664 = vmul.f32 %v659, 1.442695
  %v665 = vpow.pop %v664
  %v666 = vmul.f32 %v660, 1.442695
  %v667 = vpow.pop %v666
  %v668 = vmul.f32 %v661, 1.442695
  %v669 = vpow.pop %v668
  %v670 = vsel %vm85, %v663, 0.0
  %671 = vadd.xlane.f32.xlu0 %v670
  %v672 = vpop.xlane.xlu0 %671
  %v673 = vsel %vm85, %v665, 0.0
  %674 = vadd.xlane.f32.xlu0 %v673
  %v675 = vpop.xlane.xlu0 %674
  %v676 = vsel %vm85, %v667, 0.0
  %677 = vadd.xlane.f32.xlu0 %v676
  %v678 = vpop.xlane.xlu0 %677
  %v679 = vsel %vm85, %v669, 0.0
  %680 = vadd.xlane.f32.xlu0 %v679
  %v681 = vpop.xlane.xlu0 %680
  %v682 = vrcp.pop %v672
  %v683 = vmul.f32 %v663, %v682
  %v684 = vrcp.pop %v675
  %v685 = vmul.f32 %v665, %v684
  %v686 = vrcp.pop %v678
  %v687 = vmul.f32 %v667, %v686
  %v688 = vrcp.pop %v681
  %v689 = vmul.f32 %v669, %v688
  %690 = vst.msk [vmem:[%s25] sm:$0xff] %vm85, %v683
  %691 = vst.msk [vmem:[%s25 + $0x8] sm:$0xff] %vm85, %v685
  %692 = vst.msk [vmem:[%s25 + $0x10] sm:$0xff] %vm85, %v687
  %693 = vst.msk [vmem:[%s25 + $0x18] sm:$0xff] %vm85, %v689
  %694 = vrot.lane.b32.xlu0 %v441, 64
  %v695 = vpop.permute.xlu0 %694
  %696 = vrot.lane.b32.xlu0 %v446, 64
  %v697 = vpop.permute.xlu0 %696
  %v701 = vsel %vm85, %v683, 0
  %v704 = vsel %vm85, %v685, 0
  %706 = vmatprep.subr.mxu0 0.0
  %707 = vmatpush1.msra.mxu0 %v695
  %708 = vmatprep.subr.mxu0 0.0
  %709 = vmatpush1.msra.mxu0 %v697
  %710 = vmatprep.subr.mxu0 0.0
  %711 = vmatpush1.msra.mxu0 0.0
  %712 = vmatprep.subr.mxu0 0.0
  %713 = vmatpush1.msra.mxu0 0.0
  %714 = vmatprep.subr.mxu0 0.0
  %715 = vmatpush1.msra.mxu0 0.0
  %716 = vmatprep.subr.mxu0 0.0
  %717 = vmatpush1.msra.mxu0 0.0
  %718 = vmatprep.subr.mxu0 0.0
  %719 = vmatpush1.msra.mxu0 0.0
  %720 = vmatprep.subr.mxu0 0.0
  %721 = vmatpush1.msra.mxu0 0.0
  %722 = vmatprep.subr.mxu0 0.0
  %723 = vmatpush1.msra.mxu0 0.0
  %724 = vmatprep.subr.mxu0 0.0
  %725 = vmatpush1.msra.mxu0 0.0
  %726 = vmatprep.subr.mxu0 0.0
  %727 = vmatpush1.msra.mxu0 0.0
  %728 = vmatprep.subr.mxu0 0.0
  %729 = vmatpush1.msra.mxu0 0.0
  %730 = vmatprep.subr.mxu0 0.0
  %731 = vmatpush1.msra.mxu0 0.0
  %732 = vmatprep.subr.mxu0 0.0
  %733 = vmatpush1.msra.mxu0 0.0
  %734 = vmatprep.subr.mxu0 0.0
  %735 = vmatpush1.msra.mxu0 0.0
  %736 = vmatprep.subr.mxu0 0.0
  %737 = vmatpush1.msra.mxu0 0.0
  %738 = vmatprep.subr.mxu0 0.0
  %739 = vmatpush1.msra.mxu0 0.0
  %740 = vmatprep.subr.mxu0 0.0
  %741 = vmatpush1.msra.mxu0 0.0
  %742 = vmatprep.subr.mxu0 0.0
  %743 = vmatpush1.msra.mxu0 0.0
  %744 = vmatprep.subr.mxu0 0.0
  %745 = vmatpush1.msra.mxu0 0.0
  %746 = vmatprep.subr.mxu0 0.0
  %747 = vmatpush1.msra.mxu0 0.0
  %748 = vmatprep.subr.mxu0 0.0
  %749 = vmatpush1.msra.mxu0 0.0
  %750 = vmatprep.subr.mxu0 0.0
  %751 = vmatpush1.msra.mxu0 0.0
  %752 = vmatprep.subr.mxu0 0.0
  %753 = vmatpush1.msra.mxu0 0.0
  %754 = vmatprep.subr.mxu0 0.0
  %755 = vmatpush1.msra.mxu0 0.0
  %756 = vmatprep.subr.mxu0 0.0
  %757 = vmatpush1.msra.mxu0 0.0
  %758 = vmatprep.subr.mxu0 0.0
  %759 = vmatpush1.msra.mxu0 0.0
  %760 = vmatprep.subr.mxu0 0.0
  %761 = vmatpush1.msra.mxu0 0.0
  %762 = vmatprep.subr.mxu0 0.0
  %763 = vmatpush1.msra.mxu0 0.0
  %764 = vmatprep.subr.mxu0 0.0
  %765 = vmatpush1.msra.mxu0 0.0
  %766 = vmatprep.subr.mxu0 0.0
  %767 = vmatpush1.msra.mxu0 0.0
  %768 = vmatprep.subr.mxu0 0.0
  %769 = vmatpush1.msra.mxu0 0.0
  %770 = vmatprep.mubr.f32.mxu0 0.0
  %771 = vmatmul.mubr.f32.gmra.mrb[0].mxu0 %v701
  %v772 = vpop.f32.mrb[0].mxu0
  %v773 = vadd.f32 0.0, %v772
  %v774 = vpop.f32.mrb[0].mxu0
  %775 = vmatprep.mubr.f32.mxu0 0.0
  %776 = vmatmul.mubr.f32.gmra.mrb[0].mxu0 %v704
  %v777 = vpop.f32.mrb[0].mxu0
  %v778 = vadd.f32 0.0, %v777
  %v779 = vpop.f32.mrb[0].mxu0
  %780 = vdwg.mxu0
  %781 = vrot.lane.b32.xlu0 %v451, 64
  %v782 = vpop.permute.xlu0 %781
  %783 = vrot.lane.b32.xlu0 %v456, 64
  %v784 = vpop.permute.xlu0 %783
  %v788 = vsel %vm85, %v687, 0
  %v791 = vsel %vm85, %v689, 0
  %793 = vmatprep.subr.mxu0 0.0
  %794 = vmatpush1.msra.mxu0 %v782
  %795 = vmatprep.subr.mxu0 0.0
  %796 = vmatpush1.msra.mxu0 %v784
  %797 = vmatprep.subr.mxu0 0.0
  %798 = vmatpush1.msra.mxu0 0.0
  %799 = vmatprep.subr.mxu0 0.0
  %800 = vmatpush1.msra.mxu0 0.0
  %801 = vmatprep.subr.mxu0 0.0
  %802 = vmatpush1.msra.mxu0 0.0
  %803 = vmatprep.subr.mxu0 0.0
  %804 = vmatpush1.msra.mxu0 0.0
  %805 = vmatprep.subr.mxu0 0.0
  %806 = vmatpush1.msra.mxu0 0.0
  %807 = vmatprep.subr.mxu0 0.0
  %808 = vmatpush1.msra.mxu0 0.0
  %809 = vmatprep.subr.mxu0 0.0
  %810 = vmatpush1.msra.mxu0 0.0
  %811 = vmatprep.subr.mxu0 0.0
  %812 = vmatpush1.msra.mxu0 0.0
  %813 = vmatprep.subr.mxu0 0.0
  %814 = vmatpush1.msra.mxu0 0.0
  %815 = vmatprep.subr.mxu0 0.0
  %816 = vmatpush1.msra.mxu0 0.0
  %817 = vmatprep.subr.mxu0 0.0
  %818 = vmatpush1.msra.mxu0 0.0
  %819 = vmatprep.subr.mxu0 0.0
  %820 = vmatpush1.msra.mxu0 0.0
  %821 = vmatprep.subr.mxu0 0.0
  %822 = vmatpush1.msra.mxu0 0.0
  %823 = vmatprep.subr.mxu0 0.0
  %824 = vmatpush1.msra.mxu0 0.0
  %825 = vmatprep.subr.mxu0 0.0
  %826 = vmatpush1.msra.mxu0 0.0
  %827 = vmatprep.subr.mxu0 0.0
  %828 = vmatpush1.msra.mxu0 0.0
  %829 = vmatprep.subr.mxu0 0.0
  %830 = vmatpush1.msra.mxu0 0.0
  %831 = vmatprep.subr.mxu0 0.0
  %832 = vmatpush1.msra.mxu0 0.0
  %833 = vmatprep.subr.mxu0 0.0
  %834 = vmatpush1.msra.mxu0 0.0
  %835 = vmatprep.subr.mxu0 0.0
  %836 = vmatpush1.msra.mxu0 0.0
  %837 = vmatprep.subr.mxu0 0.0
  %838 = vmatpush1.msra.mxu0 0.0
  %839 = vmatprep.subr.mxu0 0.0
  %840 = vmatpush1.msra.mxu0 0.0
  %841 = vmatprep.subr.mxu0 0.0
  %842 = vmatpush1.msra.mxu0 0.0
  %843 = vmatprep.subr.mxu0 0.0
  %844 = vmatpush1.msra.mxu0 0.0
  %845 = vmatprep.subr.mxu0 0.0
  %846 = vmatpush1.msra.mxu0 0.0
  %847 = vmatprep.subr.mxu0 0.0
  %848 = vmatpush1.msra.mxu0 0.0
  %849 = vmatprep.subr.mxu0 0.0
  %850 = vmatpush1.msra.mxu0 0.0
  %851 = vmatprep.subr.mxu0 0.0
  %852 = vmatpush1.msra.mxu0 0.0
  %853 = vmatprep.subr.mxu0 0.0
  %854 = vmatpush1.msra.mxu0 0.0
  %855 = vmatprep.subr.mxu0 0.0
  %856 = vmatpush1.msra.mxu0 0.0
  %857 = vmatprep.mubr.f32.mxu0 0.0
  %858 = vmatmul.mubr.f32.gmra.mrb[0].mxu0 %v788
  %v859 = vpop.f32.mrb[0].mxu0
  %v860 = vadd.f32 0.0, %v859
  %v861 = vpop.f32.mrb[0].mxu0
  %862 = vmatprep.mubr.f32.mxu0 0.0
  %863 = vmatmul.mubr.f32.gmra.mrb[0].mxu0 %v791
  %v864 = vpop.f32.mrb[0].mxu0
  %v865 = vadd.f32 0.0, %v864
  %v866 = vpop.f32.mrb[0].mxu0
  %867 = vdwg.mxu0
  %868 = vrot.lane.b32.xlu0 %v441, 120
  %v869 = vpop.permute.xlu0 %868
  %870 = vrot.lane.b32.xlu0 %v446, 120
  %v871 = vpop.permute.xlu0 %870
  %872 = vrot.lane.b32.xlu0 %v441, 88
  %v873 = vpop.permute.xlu0 %872
  %874 = vrot.lane.b32.xlu0 %v446, 88
  %v875 = vpop.permute.xlu0 %874
  %v876 = vsel %vm465, %v869, 0
  %v878 = vsel %vm465, %v871, 0
  %v880 = vsel %vm465, %v873, 0
  %v882 = vsel %vm465, %v875, 0
  %884 = vmatprep.subr.mxu0 0.0
  %885 = vmatpush1.xpose.msra.mxu0 %v880
  %886 = vmatprep.subr.mxu0 0.0
  %887 = vmatpush1.xpose.msra.mxu0 %v882
  %888 = vmatprep.subr.mxu0 0.0
  %889 = vmatpush1.xpose.msra.mxu0 0.0
  %890 = vmatprep.subr.mxu0 0.0
  %891 = vmatpush1.xpose.msra.mxu0 0.0
  %892 = vmatprep.subr.mxu0 0.0
  %893 = vmatpush1.xpose.msra.mxu0 0.0
  %894 = vmatprep.subr.mxu0 0.0
  %895 = vmatpush1.xpose.msra.mxu0 0.0
  %896 = vmatprep.subr.mxu0 0.0
  %897 = vmatpush1.xpose.msra.mxu0 0.0
  %898 = vmatprep.subr.mxu0 0.0
  %899 = vmatpush1.xpose.msra.mxu0 0.0
  %900 = vmatprep.subr.mxu0 0.0
  %901 = vmatpush1.xpose.msra.mxu0 0.0
  %902 = vmatprep.subr.mxu0 0.0
  %903 = vmatpush1.xpose.msra.mxu0 0.0
  %904 = vmatprep.subr.mxu0 0.0
  %905 = vmatpush1.xpose.msra.mxu0 0.0
  %906 = vmatprep.subr.mxu0 0.0
  %907 = vmatpush1.xpose.msra.mxu0 0.0
  %908 = vmatprep.subr.mxu0 0.0
  %909 = vmatpush1.xpose.msra.mxu0 0.0
  %910 = vmatprep.subr.mxu0 0.0
  %911 = vmatpush1.xpose.msra.mxu0 0.0
  %912 = vmatprep.subr.mxu0 0.0
  %913 = vmatpush1.xpose.msra.mxu0 0.0
  %914 = vmatprep.subr.mxu0 0.0
  %915 = vmatpush1.xpose.msra.mxu0 0.0
  %916 = vmatprep.subr.mxu0 0.0
  %917 = vmatpush1.xpose.msra.mxu0 0.0
  %918 = vmatprep.subr.mxu0 0.0
  %919 = vmatpush1.xpose.msra.mxu0 0.0
  %920 = vmatprep.subr.mxu0 0.0
  %921 = vmatpush1.xpose.msra.mxu0 0.0
  %922 = vmatprep.subr.mxu0 0.0
  %923 = vmatpush1.xpose.msra.mxu0 0.0
  %924 = vmatprep.subr.mxu0 0.0
  %925 = vmatpush1.xpose.msra.mxu0 0.0
  %926 = vmatprep.subr.mxu0 0.0
  %927 = vmatpush1.xpose.msra.mxu0 0.0
  %928 = vmatprep.subr.mxu0 0.0
  %929 = vmatpush1.xpose.msra.mxu0 0.0
  %930 = vmatprep.subr.mxu0 0.0
  %931 = vmatpush1.xpose.msra.mxu0 0.0
  %932 = vmatprep.subr.mxu0 0.0
  %933 = vmatpush1.xpose.msra.mxu0 0.0
  %934 = vmatprep.subr.mxu0 0.0
  %935 = vmatpush1.xpose.msra.mxu0 0.0
  %936 = vmatprep.subr.mxu0 0.0
  %937 = vmatpush1.xpose.msra.mxu0 0.0
  %938 = vmatprep.subr.mxu0 0.0
  %939 = vmatpush1.xpose.msra.mxu0 0.0
  %940 = vmatprep.subr.mxu0 0.0
  %941 = vmatpush1.xpose.msra.mxu0 0.0
  %942 = vmatprep.subr.mxu0 0.0
  %943 = vmatpush1.xpose.msra.mxu0 0.0
  %944 = vmatprep.subr.mxu0 0.0
  %945 = vmatpush1.xpose.msra.mxu0 0.0
  %946 = vmatprep.subr.mxu0 0.0
  %947 = vmatpush1.xpose.msra.mxu0 0.0
  %948 = vmatprep.mubr.f32.mxu0 0.0
  %949 = vmatmul.mubr.f32.gmra.mrb[0].mxu0 %v876
  %v950 = vpop.f32.mrb[0].mxu0
  %v951 = vadd.f32 0.0, %v950
  %v952 = vpop.f32.mrb[0].mxu0
  %953 = vmatprep.mubr.f32.mxu0 0.0
  %954 = vmatmul.mubr.f32.gmra.mrb[0].mxu0 %v878
  %v955 = vpop.f32.mrb[0].mxu0
  %v956 = vadd.f32 0.0, %v955
  %v957 = vpop.f32.mrb[0].mxu0
  %958 = vdwg.mxu0
  %959 = vrot.lane.b32.xlu0 %v451, 120
  %v960 = vpop.permute.xlu0 %959
  %961 = vrot.lane.b32.xlu0 %v456, 120
  %v962 = vpop.permute.xlu0 %961
  %963 = vrot.lane.b32.xlu0 %v451, 88
  %v964 = vpop.permute.xlu0 %963
  %965 = vrot.lane.b32.xlu0 %v456, 88
  %v966 = vpop.permute.xlu0 %965
  %v967 = vsel %vm465, %v960, 0
  %v969 = vsel %vm465, %v962, 0
  %v971 = vsel %vm465, %v964, 0
  %v973 = vsel %vm465, %v966, 0
  %975 = vmatprep.subr.mxu0 0.0
  %976 = vmatpush1.xpose.msra.mxu0 %v971
  %977 = vmatprep.subr.mxu0 0.0
  %978 = vmatpush1.xpose.msra.mxu0 %v973
  %979 = vmatprep.subr.mxu0 0.0
  %980 = vmatpush1.xpose.msra.mxu0 0.0
  %981 = vmatprep.subr.mxu0 0.0
  %982 = vmatpush1.xpose.msra.mxu0 0.0
  %983 = vmatprep.subr.mxu0 0.0
  %984 = vmatpush1.xpose.msra.mxu0 0.0
  %985 = vmatprep.subr.mxu0 0.0
  %986 = vmatpush1.xpose.msra.mxu0 0.0
  %987 = vmatprep.subr.mxu0 0.0
  %988 = vmatpush1.xpose.msra.mxu0 0.0
  %989 = vmatprep.subr.mxu0 0.0
  %990 = vmatpush1.xpose.msra.mxu0 0.0
  %991 = vmatprep.subr.mxu0 0.0
  %992 = vmatpush1.xpose.msra.mxu0 0.0
  %993 = vmatprep.subr.mxu0 0.0
  %994 = vmatpush1.xpose.msra.mxu0 0.0
  %995 = vmatprep.subr.mxu0 0.0
  %996 = vmatpush1.xpose.msra.mxu0 0.0
  %997 = vmatprep.subr.mxu0 0.0
  %998 = vmatpush1.xpose.msra.mxu0 0.0
  %999 = vmatprep.subr.mxu0 0.0
  %1000 = vmatpush1.xpose.msra.mxu0 0.0
  %1001 = vmatprep.subr.mxu0 0.0
  %1002 = vmatpush1.xpose.msra.mxu0 0.0
  %1003 = vmatprep.subr.mxu0 0.0
  %1004 = vmatpush1.xpose.msra.mxu0 0.0
  %1005 = vmatprep.subr.mxu0 0.0
  %1006 = vmatpush1.xpose.msra.mxu0 0.0
  %1007 = vmatprep.subr.mxu0 0.0
  %1008 = vmatpush1.xpose.msra.mxu0 0.0
  %1009 = vmatprep.subr.mxu0 0.0
  %1010 = vmatpush1.xpose.msra.mxu0 0.0
  %1011 = vmatprep.subr.mxu0 0.0
  %1012 = vmatpush1.xpose.msra.mxu0 0.0
  %1013 = vmatprep.subr.mxu0 0.0
  %1014 = vmatpush1.xpose.msra.mxu0 0.0
  %1015 = vmatprep.subr.mxu0 0.0
  %1016 = vmatpush1.xpose.msra.mxu0 0.0
  %1017 = vmatprep.subr.mxu0 0.0
  %1018 = vmatpush1.xpose.msra.mxu0 0.0
  %1019 = vmatprep.subr.mxu0 0.0
  %1020 = vmatpush1.xpose.msra.mxu0 0.0
  %1021 = vmatprep.subr.mxu0 0.0
  %1022 = vmatpush1.xpose.msra.mxu0 0.0
  %1023 = vmatprep.subr.mxu0 0.0
  %1024 = vmatpush1.xpose.msra.mxu0 0.0
  %1025 = vmatprep.subr.mxu0 0.0
  %1026 = vmatpush1.xpose.msra.mxu0 0.0
  %1027 = vmatprep.subr.mxu0 0.0
  %1028 = vmatpush1.xpose.msra.mxu0 0.0
  %1029 = vmatprep.subr.mxu0 0.0
  %1030 = vmatpush1.xpose.msra.mxu0 0.0
  %1031 = vmatprep.subr.mxu0 0.0
  %1032 = vmatpush1.xpose.msra.mxu0 0.0
  %1033 = vmatprep.subr.mxu0 0.0
  %1034 = vmatpush1.xpose.msra.mxu0 0.0
  %1035 = vmatprep.subr.mxu0 0.0
  %1036 = vmatpush1.xpose.msra.mxu0 0.0
  %1037 = vmatprep.subr.mxu0 0.0
  %1038 = vmatpush1.xpose.msra.mxu0 0.0
  %1039 = vmatprep.mubr.f32.mxu0 0.0
  %1040 = vmatmul.mubr.f32.gmra.mrb[0].mxu0 %v967
  %v1041 = vpop.f32.mrb[0].mxu0
  %v1042 = vadd.f32 0.0, %v1041
  %v1043 = vpop.f32.mrb[0].mxu0
  %1044 = vmatprep.mubr.f32.mxu0 0.0
  %1045 = vmatmul.mubr.f32.gmra.mrb[0].mxu0 %v969
  %v1046 = vpop.f32.mrb[0].mxu0
  %v1047 = vadd.f32 0.0, %v1046
  %v1048 = vpop.f32.mrb[0].mxu0
  %1049 = vdwg.mxu0
  %v1050 = vmul.f32 %v951, 0.35355338
  %v1051 = vmul.f32 %v956, 0.35355338
  %v1052 = vmul.f32 %v1042, 0.35355338
  %v1053 = vmul.f32 %v1047, 0.35355338
  %v1054 = vadd.f32 %v1050, %v347
  %v1055 = vadd.f32 %v1051, %v348
  %v1056 = vadd.f32 %v1052, %v349
  %v1057 = vadd.f32 %v1053, %v350
  %v1058 = vsel %vm85, %v1054, -inf
  %1059 = vmax.xlane.f32.xlu0 %v1058
  %v1060 = vpop.xlane.xlu0 %1059
  %v1061 = vsel %vm85, %v1055, -inf
  %1062 = vmax.xlane.f32.xlu0 %v1061
  %v1063 = vpop.xlane.xlu0 %1062
  %v1064 = vsel %vm85, %v1056, -inf
  %1065 = vmax.xlane.f32.xlu0 %v1064
  %v1066 = vpop.xlane.xlu0 %1065
  %v1067 = vsel %vm85, %v1057, -inf
  %1068 = vmax.xlane.f32.xlu0 %v1067
  %v1069 = vpop.xlane.xlu0 %1068
  %v1070 = vsub.f32 %v1054, %v1060
  %v1071 = vsub.f32 %v1055, %v1063
  %v1072 = vsub.f32 %v1056, %v1066
  %v1073 = vsub.f32 %v1057, %v1069
  %v1074 = vmul.f32 %v1070, 1.442695
  %v1075 = vpow.pop %v1074
  %v1076 = vmul.f32 %v1071, 1.442695
  %v1077 = vpow.pop %v1076
  %v1078 = vmul.f32 %v1072, 1.442695
  %v1079 = vpow.pop %v1078
  %v1080 = vmul.f32 %v1073, 1.442695
  %v1081 = vpow.pop %v1080
  %v1082 = vsel %vm85, %v1075, 0.0
  %1083 = vadd.xlane.f32.xlu0 %v1082
  %v1084 = vpop.xlane.xlu0 %1083
  %v1085 = vsel %vm85, %v1077, 0.0
  %1086 = vadd.xlane.f32.xlu0 %v1085
  %v1087 = vpop.xlane.xlu0 %1086
  %v1088 = vsel %vm85, %v1079, 0.0
  %1089 = vadd.xlane.f32.xlu0 %v1088
  %v1090 = vpop.xlane.xlu0 %1089
  %v1091 = vsel %vm85, %v1081, 0.0
  %1092 = vadd.xlane.f32.xlu0 %v1091
  %v1093 = vpop.xlane.xlu0 %1092
  %v1094 = vrcp.pop %v1084
  %v1095 = vmul.f32 %v1075, %v1094
  %v1096 = vrcp.pop %v1087
  %v1097 = vmul.f32 %v1077, %v1096
  %v1098 = vrcp.pop %v1090
  %v1099 = vmul.f32 %v1079, %v1098
  %v1100 = vrcp.pop %v1093
  %v1101 = vmul.f32 %v1081, %v1100
  %1106 = vrot.lane.b32.xlu0 %v1095, 16
  %v1107 = vpop.permute.xlu0 %1106
  %1108 = vrot.lane.b32.xlu0 %v1097, 16
  %v1109 = vpop.permute.xlu0 %1108
  %1110 = vrot.lane.b32.xlu0 %v1099, 16
  %v1111 = vpop.permute.xlu0 %1110
  %1112 = vrot.lane.b32.xlu0 %v1101, 16
  %v1113 = vpop.permute.xlu0 %1112
  %vm1118 = vcmask 261248
  %1119 = vst.msk [vmem:[%s25] sm:$0xff] %vm1118, %v1107
  %1120 = vst.msk [vmem:[%s25 + $0x8] sm:$0xff] %vm1118, %v1109
  %1121 = vst.msk [vmem:[%s25 + $0x10] sm:$0xff] %vm1118, %v1111
  %1122 = vst.msk [vmem:[%s25 + $0x18] sm:$0xff] %vm1118, %v1113
  %1123 = vrot.lane.b32.xlu0 %v441, 56
  %v1124 = vpop.permute.xlu0 %1123
  %1125 = vrot.lane.b32.xlu0 %v446, 56
  %v1126 = vpop.permute.xlu0 %1125
  %v1129 = vsel %vm85, %v1095, 0
  %v1131 = vsel %vm85, %v1097, 0
  %1133 = vmatprep.subr.mxu0 0.0
  %1134 = vmatpush1.msra.mxu0 %v1124
  %1135 = vmatprep.subr.mxu0 0.0
  %1136 = vmatpush1.msra.mxu0 %v1126
  %1137 = vmatprep.subr.mxu0 0.0
  %1138 = vmatpush1.msra.mxu0 0.0
  %1139 = vmatprep.subr.mxu0 0.0
  %1140 = vmatpush1.msra.mxu0 0.0
  %1141 = vmatprep.subr.mxu0 0.0
  %1142 = vmatpush1.msra.mxu0 0.0
  %1143 = vmatprep.subr.mxu0 0.0
  %1144 = vmatpush1.msra.mxu0 0.0
  %1145 = vmatprep.subr.mxu0 0.0
  %1146 = vmatpush1.msra.mxu0 0.0
  %1147 = vmatprep.subr.mxu0 0.0
  %1148 = vmatpush1.msra.mxu0 0.0
  %1149 = vmatprep.subr.mxu0 0.0
  %1150 = vmatpush1.msra.mxu0 0.0
  %1151 = vmatprep.subr.mxu0 0.0
  %1152 = vmatpush1.msra.mxu0 0.0
  %1153 = vmatprep.subr.mxu0 0.0
  %1154 = vmatpush1.msra.mxu0 0.0
  %1155 = vmatprep.subr.mxu0 0.0
  %1156 = vmatpush1.msra.mxu0 0.0
  %1157 = vmatprep.subr.mxu0 0.0
  %1158 = vmatpush1.msra.mxu0 0.0
  %1159 = vmatprep.subr.mxu0 0.0
  %1160 = vmatpush1.msra.mxu0 0.0
  %1161 = vmatprep.subr.mxu0 0.0
  %1162 = vmatpush1.msra.mxu0 0.0
  %1163 = vmatprep.subr.mxu0 0.0
  %1164 = vmatpush1.msra.mxu0 0.0
  %1165 = vmatprep.subr.mxu0 0.0
  %1166 = vmatpush1.msra.mxu0 0.0
  %1167 = vmatprep.subr.mxu0 0.0
  %1168 = vmatpush1.msra.mxu0 0.0
  %1169 = vmatprep.subr.mxu0 0.0
  %1170 = vmatpush1.msra.mxu0 0.0
  %1171 = vmatprep.subr.mxu0 0.0
  %1172 = vmatpush1.msra.mxu0 0.0
  %1173 = vmatprep.subr.mxu0 0.0
  %1174 = vmatpush1.msra.mxu0 0.0
  %1175 = vmatprep.subr.mxu0 0.0
  %1176 = vmatpush1.msra.mxu0 0.0
  %1177 = vmatprep.subr.mxu0 0.0
  %1178 = vmatpush1.msra.mxu0 0.0
  %1179 = vmatprep.subr.mxu0 0.0
  %1180 = vmatpush1.msra.mxu0 0.0
  %1181 = vmatprep.subr.mxu0 0.0
  %1182 = vmatpush1.msra.mxu0 0.0
  %1183 = vmatprep.subr.mxu0 0.0
  %1184 = vmatpush1.msra.mxu0 0.0
  %1185 = vmatprep.subr.mxu0 0.0
  %1186 = vmatpush1.msra.mxu0 0.0
  %1187 = vmatprep.subr.mxu0 0.0
  %1188 = vmatpush1.msra.mxu0 0.0
  %1189 = vmatprep.subr.mxu0 0.0
  %1190 = vmatpush1.msra.mxu0 0.0
  %1191 = vmatprep.subr.mxu0 0.0
  %1192 = vmatpush1.msra.mxu0 0.0
  %1193 = vmatprep.subr.mxu0 0.0
  %1194 = vmatpush1.msra.mxu0 0.0
  %1195 = vmatprep.subr.mxu0 0.0
  %1196 = vmatpush1.msra.mxu0 0.0
  %1197 = vmatprep.mubr.f32.mxu0 0.0
  %1198 = vmatmul.mubr.f32.gmra.mrb[0].mxu0 %v1129
  %v1199 = vpop.f32.mrb[0].mxu0
  %v1200 = vadd.f32 0.0, %v1199
  %v1201 = vpop.f32.mrb[0].mxu0
  %1202 = vmatprep.mubr.f32.mxu0 0.0
  %1203 = vmatmul.mubr.f32.gmra.mrb[0].mxu0 %v1131
  %v1204 = vpop.f32.mrb[0].mxu0
  %v1205 = vadd.f32 0.0, %v1204
  %v1206 = vpop.f32.mrb[0].mxu0
  %1207 = vdwg.mxu0
  %1208 = vrot.lane.b32.xlu0 %v451, 56
  %v1209 = vpop.permute.xlu0 %1208
  %1210 = vrot.lane.b32.xlu0 %v456, 56
  %v1211 = vpop.permute.xlu0 %1210
  %v1214 = vsel %vm85, %v1099, 0
  %v1216 = vsel %vm85, %v1101, 0
  %1218 = vmatprep.subr.mxu0 0.0
  %1219 = vmatpush1.msra.mxu0 %v1209
  %1220 = vmatprep.subr.mxu0 0.0
  %1221 = vmatpush1.msra.mxu0 %v1211
  %1222 = vmatprep.subr.mxu0 0.0
  %1223 = vmatpush1.msra.mxu0 0.0
  %1224 = vmatprep.subr.mxu0 0.0
  %1225 = vmatpush1.msra.mxu0 0.0
  %1226 = vmatprep.subr.mxu0 0.0
  %1227 = vmatpush1.msra.mxu0 0.0
  %1228 = vmatprep.subr.mxu0 0.0
  %1229 = vmatpush1.msra.mxu0 0.0
  %1230 = vmatprep.subr.mxu0 0.0
  %1231 = vmatpush1.msra.mxu0 0.0
  %1232 = vmatprep.subr.mxu0 0.0
  %1233 = vmatpush1.msra.mxu0 0.0
  %1234 = vmatprep.subr.mxu0 0.0
  %1235 = vmatpush1.msra.mxu0 0.0
  %1236 = vmatprep.subr.mxu0 0.0
  %1237 = vmatpush1.msra.mxu0 0.0
  %1238 = vmatprep.subr.mxu0 0.0
  %1239 = vmatpush1.msra.mxu0 0.0
  %1240 = vmatprep.subr.mxu0 0.0
  %1241 = vmatpush1.msra.mxu0 0.0
  %1242 = vmatprep.subr.mxu0 0.0
  %1243 = vmatpush1.msra.mxu0 0.0
  %1244 = vmatprep.subr.mxu0 0.0
  %1245 = vmatpush1.msra.mxu0 0.0
  %1246 = vmatprep.subr.mxu0 0.0
  %1247 = vmatpush1.msra.mxu0 0.0
  %1248 = vmatprep.subr.mxu0 0.0
  %1249 = vmatpush1.msra.mxu0 0.0
  %1250 = vmatprep.subr.mxu0 0.0
  %1251 = vmatpush1.msra.mxu0 0.0
  %1252 = vmatprep.subr.mxu0 0.0
  %1253 = vmatpush1.msra.mxu0 0.0
  %1254 = vmatprep.subr.mxu0 0.0
  %1255 = vmatpush1.msra.mxu0 0.0
  %1256 = vmatprep.subr.mxu0 0.0
  %1257 = vmatpush1.msra.mxu0 0.0
  %1258 = vmatprep.subr.mxu0 0.0
  %1259 = vmatpush1.msra.mxu0 0.0
  %1260 = vmatprep.subr.mxu0 0.0
  %1261 = vmatpush1.msra.mxu0 0.0
  %1262 = vmatprep.subr.mxu0 0.0
  %1263 = vmatpush1.msra.mxu0 0.0
  %1264 = vmatprep.subr.mxu0 0.0
  %1265 = vmatpush1.msra.mxu0 0.0
  %1266 = vmatprep.subr.mxu0 0.0
  %1267 = vmatpush1.msra.mxu0 0.0
  %1268 = vmatprep.subr.mxu0 0.0
  %1269 = vmatpush1.msra.mxu0 0.0
  %1270 = vmatprep.subr.mxu0 0.0
  %1271 = vmatpush1.msra.mxu0 0.0
  %1272 = vmatprep.subr.mxu0 0.0
  %1273 = vmatpush1.msra.mxu0 0.0
  %1274 = vmatprep.subr.mxu0 0.0
  %1275 = vmatpush1.msra.mxu0 0.0
  %1276 = vmatprep.subr.mxu0 0.0
  %1277 = vmatpush1.msra.mxu0 0.0
  %1278 = vmatprep.subr.mxu0 0.0
  %1279 = vmatpush1.msra.mxu0 0.0
  %1280 = vmatprep.subr.mxu0 0.0
  %1281 = vmatpush1.msra.mxu0 0.0
  %1282 = vmatprep.mubr.f32.mxu0 0.0
  %1283 = vmatmul.mubr.f32.gmra.mrb[0].mxu0 %v1214
  %v1284 = vpop.f32.mrb[0].mxu0
  %v1285 = vadd.f32 0.0, %v1284
  %v1286 = vpop.f32.mrb[0].mxu0
  %1287 = vmatprep.mubr.f32.mxu0 0.0
  %1288 = vmatmul.mubr.f32.gmra.mrb[0].mxu0 %v1216
  %v1289 = vpop.f32.mrb[0].mxu0
  %v1290 = vadd.f32 0.0, %v1289
  %v1291 = vpop.f32.mrb[0].mxu0
  %1292 = vdwg.mxu0
  %1293 = vrot.lane.b32.xlu0 %v441, 112
  %v1294 = vpop.permute.xlu0 %1293
  %1295 = vrot.lane.b32.xlu0 %v446, 112
  %v1296 = vpop.permute.xlu0 %1295
  %1297 = vrot.lane.b32.xlu0 %v441, 80
  %v1298 = vpop.permute.xlu0 %1297
  %1299 = vrot.lane.b32.xlu0 %v446, 80
  %v1300 = vpop.permute.xlu0 %1299
  %v1301 = vsel %vm465, %v1294, 0
  %v1303 = vsel %vm465, %v1296, 0
  %v1305 = vsel %vm465, %v1298, 0
  %v1307 = vsel %vm465, %v1300, 0
  %1309 = vmatprep.subr.mxu0 0.0
  %1310 = vmatpush1.xpose.msra.mxu0 %v1305
  %1311 = vmatprep.subr.mxu0 0.0
  %1312 = vmatpush1.xpose.msra.mxu0 %v1307
  %1313 = vmatprep.subr.mxu0 0.0
  %1314 = vmatpush1.xpose.msra.mxu0 0.0
  %1315 = vmatprep.subr.mxu0 0.0
  %1316 = vmatpush1.xpose.msra.mxu0 0.0
  %1317 = vmatprep.subr.mxu0 0.0
  %1318 = vmatpush1.xpose.msra.mxu0 0.0
  %1319 = vmatprep.subr.mxu0 0.0
  %1320 = vmatpush1.xpose.msra.mxu0 0.0
  %1321 = vmatprep.subr.mxu0 0.0
  %1322 = vmatpush1.xpose.msra.mxu0 0.0
  %1323 = vmatprep.subr.mxu0 0.0
  %1324 = vmatpush1.xpose.msra.mxu0 0.0
  %1325 = vmatprep.subr.mxu0 0.0
  %1326 = vmatpush1.xpose.msra.mxu0 0.0
  %1327 = vmatprep.subr.mxu0 0.0
  %1328 = vmatpush1.xpose.msra.mxu0 0.0
  %1329 = vmatprep.subr.mxu0 0.0
  %1330 = vmatpush1.xpose.msra.mxu0 0.0
  %1331 = vmatprep.subr.mxu0 0.0
  %1332 = vmatpush1.xpose.msra.mxu0 0.0
  %1333 = vmatprep.subr.mxu0 0.0
  %1334 = vmatpush1.xpose.msra.mxu0 0.0
  %1335 = vmatprep.subr.mxu0 0.0
  %1336 = vmatpush1.xpose.msra.mxu0 0.0
  %1337 = vmatprep.subr.mxu0 0.0
  %1338 = vmatpush1.xpose.msra.mxu0 0.0
  %1339 = vmatprep.subr.mxu0 0.0
  %1340 = vmatpush1.xpose.msra.mxu0 0.0
  %1341 = vmatprep.subr.mxu0 0.0
  %1342 = vmatpush1.xpose.msra.mxu0 0.0
  %1343 = vmatprep.subr.mxu0 0.0
  %1344 = vmatpush1.xpose.msra.mxu0 0.0
  %1345 = vmatprep.subr.mxu0 0.0
  %1346 = vmatpush1.xpose.msra.mxu0 0.0
  %1347 = vmatprep.subr.mxu0 0.0
  %1348 = vmatpush1.xpose.msra.mxu0 0.0
  %1349 = vmatprep.subr.mxu0 0.0
  %1350 = vmatpush1.xpose.msra.mxu0 0.0
  %1351 = vmatprep.subr.mxu0 0.0
  %1352 = vmatpush1.xpose.msra.mxu0 0.0
  %1353 = vmatprep.subr.mxu0 0.0
  %1354 = vmatpush1.xpose.msra.mxu0 0.0
  %1355 = vmatprep.subr.mxu0 0.0
  %1356 = vmatpush1.xpose.msra.mxu0 0.0
  %1357 = vmatprep.subr.mxu0 0.0
  %1358 = vmatpush1.xpose.msra.mxu0 0.0
  %1359 = vmatprep.subr.mxu0 0.0
  %1360 = vmatpush1.xpose.msra.mxu0 0.0
  %1361 = vmatprep.subr.mxu0 0.0
  %1362 = vmatpush1.xpose.msra.mxu0 0.0
  %1363 = vmatprep.subr.mxu0 0.0
  %1364 = vmatpush1.xpose.msra.mxu0 0.0
  %1365 = vmatprep.subr.mxu0 0.0
  %1366 = vmatpush1.xpose.msra.mxu0 0.0
  %1367 = vmatprep.subr.mxu0 0.0
  %1368 = vmatpush1.xpose.msra.mxu0 0.0
  %1369 = vmatprep.subr.mxu0 0.0
  %1370 = vmatpush1.xpose.msra.mxu0 0.0
  %1371 = vmatprep.subr.mxu0 0.0
  %1372 = vmatpush1.xpose.msra.mxu0 0.0
  %1373 = vmatprep.mubr.f32.mxu0 0.0
  %1374 = vmatmul.mubr.f32.gmra.mrb[0].mxu0 %v1301
  %v1375 = vpop.f32.mrb[0].mxu0
  %v1376 = vadd.f32 0.0, %v1375
  %v1377 = vpop.f32.mrb[0].mxu0
  %1378 = vmatprep.mubr.f32.mxu0 0.0
  %1379 = vmatmul.mubr.f32.gmra.mrb[0].mxu0 %v1303
  %v1380 = vpop.f32.mrb[0].mxu0
  %v1381 = vadd.f32 0.0, %v1380
  %v1382 = vpop.f32.mrb[0].mxu0
  %1383 = vdwg.mxu0
  %1384 = vrot.lane.b32.xlu0 %v451, 112
  %v1385 = vpop.permute.xlu0 %1384
  %1386 = vrot.lane.b32.xlu0 %v456, 112
  %v1387 = vpop.permute.xlu0 %1386
  %1388 = vrot.lane.b32.xlu0 %v451, 80
  %v1389 = vpop.permute.xlu0 %1388
  %1390 = vrot.lane.b32.xlu0 %v456, 80
  %v1391 = vpop.permute.xlu0 %1390
  %v1392 = vsel %vm465, %v1385, 0
  %v1394 = vsel %vm465, %v1387, 0
  %v1396 = vsel %vm465, %v1389, 0
  %v1398 = vsel %vm465, %v1391, 0
  %1400 = vmatprep.subr.mxu0 0.0
  %1401 = vmatpush1.xpose.msra.mxu0 %v1396
  %1402 = vmatprep.subr.mxu0 0.0
  %1403 = vmatpush1.xpose.msra.mxu0 %v1398
  %1404 = vmatprep.subr.mxu0 0.0
  %1405 = vmatpush1.xpose.msra.mxu0 0.0
  %1406 = vmatprep.subr.mxu0 0.0
  %1407 = vmatpush1.xpose.msra.mxu0 0.0
  %1408 = vmatprep.subr.mxu0 0.0
  %1409 = vmatpush1.xpose.msra.mxu0 0.0
  %1410 = vmatprep.subr.mxu0 0.0
  %1411 = vmatpush1.xpose.msra.mxu0 0.0
  %1412 = vmatprep.subr.mxu0 0.0
  %1413 = vmatpush1.xpose.msra.mxu0 0.0
  %1414 = vmatprep.subr.mxu0 0.0
  %1415 = vmatpush1.xpose.msra.mxu0 0.0
  %1416 = vmatprep.subr.mxu0 0.0
  %1417 = vmatpush1.xpose.msra.mxu0 0.0
  %1418 = vmatprep.subr.mxu0 0.0
  %1419 = vmatpush1.xpose.msra.mxu0 0.0
  %1420 = vmatprep.subr.mxu0 0.0
  %1421 = vmatpush1.xpose.msra.mxu0 0.0
  %1422 = vmatprep.subr.mxu0 0.0
  %1423 = vmatpush1.xpose.msra.mxu0 0.0
  %1424 = vmatprep.subr.mxu0 0.0
  %1425 = vmatpush1.xpose.msra.mxu0 0.0
  %1426 = vmatprep.subr.mxu0 0.0
  %1427 = vmatpush1.xpose.msra.mxu0 0.0
  %1428 = vmatprep.subr.mxu0 0.0
  %1429 = vmatpush1.xpose.msra.mxu0 0.0
  %1430 = vmatprep.subr.mxu0 0.0
  %1431 = vmatpush1.xpose.msra.mxu0 0.0
  %1432 = vmatprep.subr.mxu0 0.0
  %1433 = vmatpush1.xpose.msra.mxu0 0.0
  %1434 = vmatprep.subr.mxu0 0.0
  %1435 = vmatpush1.xpose.msra.mxu0 0.0
  %1436 = vmatprep.subr.mxu0 0.0
  %1437 = vmatpush1.xpose.msra.mxu0 0.0
  %1438 = vmatprep.subr.mxu0 0.0
  %1439 = vmatpush1.xpose.msra.mxu0 0.0
  %1440 = vmatprep.subr.mxu0 0.0
  %1441 = vmatpush1.xpose.msra.mxu0 0.0
  %1442 = vmatprep.subr.mxu0 0.0
  %1443 = vmatpush1.xpose.msra.mxu0 0.0
  %1444 = vmatprep.subr.mxu0 0.0
  %1445 = vmatpush1.xpose.msra.mxu0 0.0
  %1446 = vmatprep.subr.mxu0 0.0
  %1447 = vmatpush1.xpose.msra.mxu0 0.0
  %1448 = vmatprep.subr.mxu0 0.0
  %1449 = vmatpush1.xpose.msra.mxu0 0.0
  %1450 = vmatprep.subr.mxu0 0.0
  %1451 = vmatpush1.xpose.msra.mxu0 0.0
  %1452 = vmatprep.subr.mxu0 0.0
  %1453 = vmatpush1.xpose.msra.mxu0 0.0
  %1454 = vmatprep.subr.mxu0 0.0
  %1455 = vmatpush1.xpose.msra.mxu0 0.0
  %1456 = vmatprep.subr.mxu0 0.0
  %1457 = vmatpush1.xpose.msra.mxu0 0.0
  %1458 = vmatprep.subr.mxu0 0.0
  %1459 = vmatpush1.xpose.msra.mxu0 0.0
  %1460 = vmatprep.subr.mxu0 0.0
  %1461 = vmatpush1.xpose.msra.mxu0 0.0
  %1462 = vmatprep.subr.mxu0 0.0
  %1463 = vmatpush1.xpose.msra.mxu0 0.0
  %1464 = vmatprep.mubr.f32.mxu0 0.0
  %1465 = vmatmul.mubr.f32.gmra.mrb[0].mxu0 %v1392
  %v1466 = vpop.f32.mrb[0].mxu0
  %v1467 = vadd.f32 0.0, %v1466
  %v1468 = vpop.f32.mrb[0].mxu0
  %1469 = vmatprep.mubr.f32.mxu0 0.0
  %1470 = vmatmul.mubr.f32.gmra.mrb[0].mxu0 %v1394
  %v1471 = vpop.f32.mrb[0].mxu0
  %v1472 = vadd.f32 0.0, %v1471
  %v1473 = vpop.f32.mrb[0].mxu0
  %1474 = vdwg.mxu0
  %v1475 = vmul.f32 %v1376, 0.35355338
  %v1476 = vmul.f32 %v1381, 0.35355338
  %v1477 = vmul.f32 %v1467, 0.35355338
  %v1478 = vmul.f32 %v1472, 0.35355338
  %v1479 = vadd.f32 %v1475, %v347
  %v1480 = vadd.f32 %v1476, %v348
  %v1481 = vadd.f32 %v1477, %v349
  %v1482 = vadd.f32 %v1478, %v350
  %v1483 = vsel %vm85, %v1479, -inf
  %1484 = vmax.xlane.f32.xlu0 %v1483
  %v1485 = vpop.xlane.xlu0 %1484
  %v1486 = vsel %vm85, %v1480, -inf
  %1487 = vmax.xlane.f32.xlu0 %v1486
  %v1488 = vpop.xlane.xlu0 %1487
  %v1489 = vsel %vm85, %v1481, -inf
  %1490 = vmax.xlane.f32.xlu0 %v1489
  %v1491 = vpop.xlane.xlu0 %1490
  %v1492 = vsel %vm85, %v1482, -inf
  %1493 = vmax.xlane.f32.xlu0 %v1492
  %v1494 = vpop.xlane.xlu0 %1493
  %v1495 = vsub.f32 %v1479, %v1485
  %v1496 = vsub.f32 %v1480, %v1488
  %v1497 = vsub.f32 %v1481, %v1491
  %v1498 = vsub.f32 %v1482, %v1494
  %v1499 = vmul.f32 %v1495, 1.442695
  %v1500 = vpow.pop %v1499
  %v1501 = vmul.f32 %v1496, 1.442695
  %v1502 = vpow.pop %v1501
  %v1503 = vmul.f32 %v1497, 1.442695
  %v1504 = vpow.pop %v1503
  %v1505 = vmul.f32 %v1498, 1.442695
  %v1506 = vpow.pop %v1505
  %v1507 = vsel %vm85, %v1500, 0.0
  %1508 = vadd.xlane.f32.xlu0 %v1507
  %v1509 = vpop.xlane.xlu0 %1508
  %v1510 = vsel %vm85, %v1502, 0.0
  %1511 = vadd.xlane.f32.xlu0 %v1510
  %v1512 = vpop.xlane.xlu0 %1511
  %v1513 = vsel %vm85, %v1504, 0.0
  %1514 = vadd.xlane.f32.xlu0 %v1513
  %v1515 = vpop.xlane.xlu0 %1514
  %v1516 = vsel %vm85, %v1506, 0.0
  %1517 = vadd.xlane.f32.xlu0 %v1516
  %v1518 = vpop.xlane.xlu0 %1517
  %v1519 = vrcp.pop %v1509
  %v1520 = vmul.f32 %v1500, %v1519
  %v1521 = vrcp.pop %v1512
  %v1522 = vmul.f32 %v1502, %v1521
  %v1523 = vrcp.pop %v1515
  %v1524 = vmul.f32 %v1504, %v1523
  %v1525 = vrcp.pop %v1518
  %v1526 = vmul.f32 %v1506, %v1525
  %1531 = vrot.lane.b32.xlu0 %v1520, 32
  %v1532 = vpop.permute.xlu0 %1531
  %1533 = vrot.lane.b32.xlu0 %v1522, 32
  %v1534 = vpop.permute.xlu0 %1533
  %1535 = vrot.lane.b32.xlu0 %v1524, 32
  %v1536 = vpop.permute.xlu0 %1535
  %1537 = vrot.lane.b32.xlu0 %v1526, 32
  %v1538 = vpop.permute.xlu0 %1537
  %vm1543 = vcmask 392448
  %1544 = vst.msk [vmem:[%s25] sm:$0xff] %vm1543, %v1532
  %1545 = vst.msk [vmem:[%s25 + $0x8] sm:$0xff] %vm1543, %v1534
  %1546 = vst.msk [vmem:[%s25 + $0x10] sm:$0xff] %vm1543, %v1536
  %1547 = vst.msk [vmem:[%s25 + $0x18] sm:$0xff] %vm1543, %v1538
  %1548 = vrot.lane.b32.xlu0 %v441, 48
  %v1549 = vpop.permute.xlu0 %1548
  %1550 = vrot.lane.b32.xlu0 %v446, 48
  %v1551 = vpop.permute.xlu0 %1550
  %v1554 = vsel %vm85, %v1520, 0
  %v1556 = vsel %vm85, %v1522, 0
  %1558 = vmatprep.subr.mxu0 0.0
  %1559 = vmatpush1.msra.mxu0 %v1549
  %1560 = vmatprep.subr.mxu0 0.0
  %1561 = vmatpush1.msra.mxu0 %v1551
  %1562 = vmatprep.subr.mxu0 0.0
  %1563 = vmatpush1.msra.mxu0 0.0
  %1564 = vmatprep.subr.mxu0 0.0
  %1565 = vmatpush1.msra.mxu0 0.0
  %1566 = vmatprep.subr.mxu0 0.0
  %1567 = vmatpush1.msra.mxu0 0.0
  %1568 = vmatprep.subr.mxu0 0.0
  %1569 = vmatpush1.msra.mxu0 0.0
  %1570 = vmatprep.subr.mxu0 0.0
  %1571 = vmatpush1.msra.mxu0 0.0
  %1572 = vmatprep.subr.mxu0 0.0
  %1573 = vmatpush1.msra.mxu0 0.0
  %1574 = vmatprep.subr.mxu0 0.0
  %1575 = vmatpush1.msra.mxu0 0.0
  %1576 = vmatprep.subr.mxu0 0.0
  %1577 = vmatpush1.msra.mxu0 0.0
  %1578 = vmatprep.subr.mxu0 0.0
  %1579 = vmatpush1.msra.mxu0 0.0
  %1580 = vmatprep.subr.mxu0 0.0
  %1581 = vmatpush1.msra.mxu0 0.0
  %1582 = vmatprep.subr.mxu0 0.0
  %1583 = vmatpush1.msra.mxu0 0.0
  %1584 = vmatprep.subr.mxu0 0.0
  %1585 = vmatpush1.msra.mxu0 0.0
  %1586 = vmatprep.subr.mxu0 0.0
  %1587 = vmatpush1.msra.mxu0 0.0
  %1588 = vmatprep.subr.mxu0 0.0
  %1589 = vmatpush1.msra.mxu0 0.0
  %1590 = vmatprep.subr.mxu0 0.0
  %1591 = vmatpush1.msra.mxu0 0.0
  %1592 = vmatprep.subr.mxu0 0.0
  %1593 = vmatpush1.msra.mxu0 0.0
  %1594 = vmatprep.subr.mxu0 0.0
  %1595 = vmatpush1.msra.mxu0 0.0
  %1596 = vmatprep.subr.mxu0 0.0
  %1597 = vmatpush1.msra.mxu0 0.0
  %1598 = vmatprep.subr.mxu0 0.0
  %1599 = vmatpush1.msra.mxu0 0.0
  %1600 = vmatprep.subr.mxu0 0.0
  %1601 = vmatpush1.msra.mxu0 0.0
  %1602 = vmatprep.subr.mxu0 0.0
  %1603 = vmatpush1.msra.mxu0 0.0
  %1604 = vmatprep.subr.mxu0 0.0
  %1605 = vmatpush1.msra.mxu0 0.0
  %1606 = vmatprep.subr.mxu0 0.0
  %1607 = vmatpush1.msra.mxu0 0.0
  %1608 = vmatprep.subr.mxu0 0.0
  %1609 = vmatpush1.msra.mxu0 0.0
  %1610 = vmatprep.subr.mxu0 0.0
  %1611 = vmatpush1.msra.mxu0 0.0
  %1612 = vmatprep.subr.mxu0 0.0
  %1613 = vmatpush1.msra.mxu0 0.0
  %1614 = vmatprep.subr.mxu0 0.0
  %1615 = vmatpush1.msra.mxu0 0.0
  %1616 = vmatprep.subr.mxu0 0.0
  %1617 = vmatpush1.msra.mxu0 0.0
  %1618 = vmatprep.subr.mxu0 0.0
  %1619 = vmatpush1.msra.mxu0 0.0
  %1620 = vmatprep.subr.mxu0 0.0
  %1621 = vmatpush1.msra.mxu0 0.0
  %1622 = vmatprep.mubr.f32.mxu0 0.0
  %1623 = vmatmul.mubr.f32.gmra.mrb[0].mxu0 %v1554
  %v1624 = vpop.f32.mrb[0].mxu0
  %v1625 = vadd.f32 0.0, %v1624
  %v1626 = vpop.f32.mrb[0].mxu0
  %1627 = vmatprep.mubr.f32.mxu0 0.0
  %1628 = vmatmul.mubr.f32.gmra.mrb[0].mxu0 %v1556
  %v1629 = vpop.f32.mrb[0].mxu0
  %v1630 = vadd.f32 0.0, %v1629
  %v1631 = vpop.f32.mrb[0].mxu0
  %1632 = vdwg.mxu0
  %1633 = vrot.lane.b32.xlu0 %v451, 48
  %v1634 = vpop.permute.xlu0 %1633
  %1635 = vrot.lane.b32.xlu0 %v456, 48
  %v1636 = vpop.permute.xlu0 %1635
  %v1639 = vsel %vm85, %v1524, 0
  %v1641 = vsel %vm85, %v1526, 0
  %1643 = vmatprep.subr.mxu0 0.0
  %1644 = vmatpush1.msra.mxu0 %v1634
  %1645 = vmatprep.subr.mxu0 0.0
  %1646 = vmatpush1.msra.mxu0 %v1636
  %1647 = vmatprep.subr.mxu0 0.0
  %1648 = vmatpush1.msra.mxu0 0.0
  %1649 = vmatprep.subr.mxu0 0.0
  %1650 = vmatpush1.msra.mxu0 0.0
  %1651 = vmatprep.subr.mxu0 0.0
  %1652 = vmatpush1.msra.mxu0 0.0
  %1653 = vmatprep.subr.mxu0 0.0
  %1654 = vmatpush1.msra.mxu0 0.0
  %1655 = vmatprep.subr.mxu0 0.0
  %1656 = vmatpush1.msra.mxu0 0.0
  %1657 = vmatprep.subr.mxu0 0.0
  %1658 = vmatpush1.msra.mxu0 0.0
  %1659 = vmatprep.subr.mxu0 0.0
  %1660 = vmatpush1.msra.mxu0 0.0
  %1661 = vmatprep.subr.mxu0 0.0
  %1662 = vmatpush1.msra.mxu0 0.0
  %1663 = vmatprep.subr.mxu0 0.0
  %1664 = vmatpush1.msra.mxu0 0.0
  %1665 = vmatprep.subr.mxu0 0.0
  %1666 = vmatpush1.msra.mxu0 0.0
  %1667 = vmatprep.subr.mxu0 0.0
  %1668 = vmatpush1.msra.mxu0 0.0
  %1669 = vmatprep.subr.mxu0 0.0
  %1670 = vmatpush1.msra.mxu0 0.0
  %1671 = vmatprep.subr.mxu0 0.0
  %1672 = vmatpush1.msra.mxu0 0.0
  %1673 = vmatprep.subr.mxu0 0.0
  %1674 = vmatpush1.msra.mxu0 0.0
  %1675 = vmatprep.subr.mxu0 0.0
  %1676 = vmatpush1.msra.mxu0 0.0
  %1677 = vmatprep.subr.mxu0 0.0
  %1678 = vmatpush1.msra.mxu0 0.0
  %1679 = vmatprep.subr.mxu0 0.0
  %1680 = vmatpush1.msra.mxu0 0.0
  %1681 = vmatprep.subr.mxu0 0.0
  %1682 = vmatpush1.msra.mxu0 0.0
  %1683 = vmatprep.subr.mxu0 0.0
  %1684 = vmatpush1.msra.mxu0 0.0
  %1685 = vmatprep.subr.mxu0 0.0
  %1686 = vmatpush1.msra.mxu0 0.0
  %1687 = vmatprep.subr.mxu0 0.0
  %1688 = vmatpush1.msra.mxu0 0.0
  %1689 = vmatprep.subr.mxu0 0.0
  %1690 = vmatpush1.msra.mxu0 0.0
  %1691 = vmatprep.subr.mxu0 0.0
  %1692 = vmatpush1.msra.mxu0 0.0
  %1693 = vmatprep.subr.mxu0 0.0
  %1694 = vmatpush1.msra.mxu0 0.0
  %1695 = vmatprep.subr.mxu0 0.0
  %1696 = vmatpush1.msra.mxu0 0.0
  %1697 = vmatprep.subr.mxu0 0.0
  %1698 = vmatpush1.msra.mxu0 0.0
  %1699 = vmatprep.subr.mxu0 0.0
  %1700 = vmatpush1.msra.mxu0 0.0
  %1701 = vmatprep.subr.mxu0 0.0
  %1702 = vmatpush1.msra.mxu0 0.0
  %1703 = vmatprep.subr.mxu0 0.0
  %1704 = vmatpush1.msra.mxu0 0.0
  %1705 = vmatprep.subr.mxu0 0.0
  %1706 = vmatpush1.msra.mxu0 0.0
  %1707 = vmatprep.mubr.f32.mxu0 0.0
  %1708 = vmatmul.mubr.f32.gmra.mrb[0].mxu0 %v1639
  %v1709 = vpop.f32.mrb[0].mxu0
  %v1710 = vadd.f32 0.0, %v1709
  %v1711 = vpop.f32.mrb[0].mxu0
  %1712 = vmatprep.mubr.f32.mxu0 0.0
  %1713 = vmatmul.mubr.f32.gmra.mrb[0].mxu0 %v1641
  %v1714 = vpop.f32.mrb[0].mxu0
  %v1715 = vadd.f32 0.0, %v1714
  %v1716 = vpop.f32.mrb[0].mxu0
  %1717 = vdwg.mxu0
  %1718 = vrot.lane.b32.xlu0 %v441, 104
  %v1719 = vpop.permute.xlu0 %1718
  %1720 = vrot.lane.b32.xlu0 %v446, 104
  %v1721 = vpop.permute.xlu0 %1720
  %1722 = vrot.lane.b32.xlu0 %v441, 72
  %v1723 = vpop.permute.xlu0 %1722
  %1724 = vrot.lane.b32.xlu0 %v446, 72
  %v1725 = vpop.permute.xlu0 %1724
  %v1726 = vsel %vm465, %v1719, 0
  %v1728 = vsel %vm465, %v1721, 0
  %v1730 = vsel %vm465, %v1723, 0
  %v1732 = vsel %vm465, %v1725, 0
  %1734 = vmatprep.subr.mxu0 0.0
  %1735 = vmatpush1.xpose.msra.mxu0 %v1730
  %1736 = vmatprep.subr.mxu0 0.0
  %1737 = vmatpush1.xpose.msra.mxu0 %v1732
  %1738 = vmatprep.subr.mxu0 0.0
  %1739 = vmatpush1.xpose.msra.mxu0 0.0
  %1740 = vmatprep.subr.mxu0 0.0
  %1741 = vmatpush1.xpose.msra.mxu0 0.0
  %1742 = vmatprep.subr.mxu0 0.0
  %1743 = vmatpush1.xpose.msra.mxu0 0.0
  %1744 = vmatprep.subr.mxu0 0.0
  %1745 = vmatpush1.xpose.msra.mxu0 0.0
  %1746 = vmatprep.subr.mxu0 0.0
  %1747 = vmatpush1.xpose.msra.mxu0 0.0
  %1748 = vmatprep.subr.mxu0 0.0
  %1749 = vmatpush1.xpose.msra.mxu0 0.0
  %1750 = vmatprep.subr.mxu0 0.0
  %1751 = vmatpush1.xpose.msra.mxu0 0.0
  %1752 = vmatprep.subr.mxu0 0.0
  %1753 = vmatpush1.xpose.msra.mxu0 0.0
  %1754 = vmatprep.subr.mxu0 0.0
  %1755 = vmatpush1.xpose.msra.mxu0 0.0
  %1756 = vmatprep.subr.mxu0 0.0
  %1757 = vmatpush1.xpose.msra.mxu0 0.0
  %1758 = vmatprep.subr.mxu0 0.0
  %1759 = vmatpush1.xpose.msra.mxu0 0.0
  %1760 = vmatprep.subr.mxu0 0.0
  %1761 = vmatpush1.xpose.msra.mxu0 0.0
  %1762 = vmatprep.subr.mxu0 0.0
  %1763 = vmatpush1.xpose.msra.mxu0 0.0
  %1764 = vmatprep.subr.mxu0 0.0
  %1765 = vmatpush1.xpose.msra.mxu0 0.0
  %1766 = vmatprep.subr.mxu0 0.0
  %1767 = vmatpush1.xpose.msra.mxu0 0.0
  %1768 = vmatprep.subr.mxu0 0.0
  %1769 = vmatpush1.xpose.msra.mxu0 0.0
  %1770 = vmatprep.subr.mxu0 0.0
  %1771 = vmatpush1.xpose.msra.mxu0 0.0
  %1772 = vmatprep.subr.mxu0 0.0
  %1773 = vmatpush1.xpose.msra.mxu0 0.0
  %1774 = vmatprep.subr.mxu0 0.0
  %1775 = vmatpush1.xpose.msra.mxu0 0.0
  %1776 = vmatprep.subr.mxu0 0.0
  %1777 = vmatpush1.xpose.msra.mxu0 0.0
  %1778 = vmatprep.subr.mxu0 0.0
  %1779 = vmatpush1.xpose.msra.mxu0 0.0
  %1780 = vmatprep.subr.mxu0 0.0
  %1781 = vmatpush1.xpose.msra.mxu0 0.0
  %1782 = vmatprep.subr.mxu0 0.0
  %1783 = vmatpush1.xpose.msra.mxu0 0.0
  %1784 = vmatprep.subr.mxu0 0.0
  %1785 = vmatpush1.xpose.msra.mxu0 0.0
  %1786 = vmatprep.subr.mxu0 0.0
  %1787 = vmatpush1.xpose.msra.mxu0 0.0
  %1788 = vmatprep.subr.mxu0 0.0
  %1789 = vmatpush1.xpose.msra.mxu0 0.0
  %1790 = vmatprep.subr.mxu0 0.0
  %1791 = vmatpush1.xpose.msra.mxu0 0.0
  %1792 = vmatprep.subr.mxu0 0.0
  %1793 = vmatpush1.xpose.msra.mxu0 0.0
  %1794 = vmatprep.subr.mxu0 0.0
  %1795 = vmatpush1.xpose.msra.mxu0 0.0
  %1796 = vmatprep.subr.mxu0 0.0
  %1797 = vmatpush1.xpose.msra.mxu0 0.0
  %1798 = vmatprep.mubr.f32.mxu0 0.0
  %1799 = vmatmul.mubr.f32.gmra.mrb[0].mxu0 %v1726
  %v1800 = vpop.f32.mrb[0].mxu0
  %v1801 = vadd.f32 0.0, %v1800
  %v1802 = vpop.f32.mrb[0].mxu0
  %1803 = vmatprep.mubr.f32.mxu0 0.0
  %1804 = vmatmul.mubr.f32.gmra.mrb[0].mxu0 %v1728
  %v1805 = vpop.f32.mrb[0].mxu0
  %v1806 = vadd.f32 0.0, %v1805
  %v1807 = vpop.f32.mrb[0].mxu0
  %1808 = vdwg.mxu0
  %1809 = vrot.lane.b32.xlu0 %v451, 104
  %v1810 = vpop.permute.xlu0 %1809
  %1811 = vrot.lane.b32.xlu0 %v456, 104
  %v1812 = vpop.permute.xlu0 %1811
  %1813 = vrot.lane.b32.xlu0 %v451, 72
  %v1814 = vpop.permute.xlu0 %1813
  %1815 = vrot.lane.b32.xlu0 %v456, 72
  %v1816 = vpop.permute.xlu0 %1815
  %v1817 = vsel %vm465, %v1810, 0
  %v1819 = vsel %vm465, %v1812, 0
  %v1821 = vsel %vm465, %v1814, 0
  %v1823 = vsel %vm465, %v1816, 0
  %1825 = vmatprep.subr.mxu0 0.0
  %1826 = vmatpush1.xpose.msra.mxu0 %v1821
  %1827 = vmatprep.subr.mxu0 0.0
  %1828 = vmatpush1.xpose.msra.mxu0 %v1823
  %1829 = vmatprep.subr.mxu0 0.0
  %1830 = vmatpush1.xpose.msra.mxu0 0.0
  %1831 = vmatprep.subr.mxu0 0.0
  %1832 = vmatpush1.xpose.msra.mxu0 0.0
  %1833 = vmatprep.subr.mxu0 0.0
  %1834 = vmatpush1.xpose.msra.mxu0 0.0
  %1835 = vmatprep.subr.mxu0 0.0
  %1836 = vmatpush1.xpose.msra.mxu0 0.0
  %1837 = vmatprep.subr.mxu0 0.0
  %1838 = vmatpush1.xpose.msra.mxu0 0.0
  %1839 = vmatprep.subr.mxu0 0.0
  %1840 = vmatpush1.xpose.msra.mxu0 0.0
  %1841 = vmatprep.subr.mxu0 0.0
  %1842 = vmatpush1.xpose.msra.mxu0 0.0
  %1843 = vmatprep.subr.mxu0 0.0
  %1844 = vmatpush1.xpose.msra.mxu0 0.0
  %1845 = vmatprep.subr.mxu0 0.0
  %1846 = vmatpush1.xpose.msra.mxu0 0.0
  %1847 = vmatprep.subr.mxu0 0.0
  %1848 = vmatpush1.xpose.msra.mxu0 0.0
  %1849 = vmatprep.subr.mxu0 0.0
  %1850 = vmatpush1.xpose.msra.mxu0 0.0
  %1851 = vmatprep.subr.mxu0 0.0
  %1852 = vmatpush1.xpose.msra.mxu0 0.0
  %1853 = vmatprep.subr.mxu0 0.0
  %1854 = vmatpush1.xpose.msra.mxu0 0.0
  %1855 = vmatprep.subr.mxu0 0.0
  %1856 = vmatpush1.xpose.msra.mxu0 0.0
  %1857 = vmatprep.subr.mxu0 0.0
  %1858 = vmatpush1.xpose.msra.mxu0 0.0
  %1859 = vmatprep.subr.mxu0 0.0
  %1860 = vmatpush1.xpose.msra.mxu0 0.0
  %1861 = vmatprep.subr.mxu0 0.0
  %1862 = vmatpush1.xpose.msra.mxu0 0.0
  %1863 = vmatprep.subr.mxu0 0.0
  %1864 = vmatpush1.xpose.msra.mxu0 0.0
  %1865 = vmatprep.subr.mxu0 0.0
  %1866 = vmatpush1.xpose.msra.mxu0 0.0
  %1867 = vmatprep.subr.mxu0 0.0
  %1868 = vmatpush1.xpose.msra.mxu0 0.0
  %1869 = vmatprep.subr.mxu0 0.0
  %1870 = vmatpush1.xpose.msra.mxu0 0.0
  %1871 = vmatprep.subr.mxu0 0.0
  %1872 = vmatpush1.xpose.msra.mxu0 0.0
  %1873 = vmatprep.subr.mxu0 0.0
  %1874 = vmatpush1.xpose.msra.mxu0 0.0
  %1875 = vmatprep.subr.mxu0 0.0
  %1876 = vmatpush1.xpose.msra.mxu0 0.0
  %1877 = vmatprep.subr.mxu0 0.0
  %1878 = vmatpush1.xpose.msra.mxu0 0.0
  %1879 = vmatprep.subr.mxu0 0.0
  %1880 = vmatpush1.xpose.msra.mxu0 0.0
  %1881 = vmatprep.subr.mxu0 0.0
  %1882 = vmatpush1.xpose.msra.mxu0 0.0
  %1883 = vmatprep.subr.mxu0 0.0
  %1884 = vmatpush1.xpose.msra.mxu0 0.0
  %1885 = vmatprep.subr.mxu0 0.0
  %1886 = vmatpush1.xpose.msra.mxu0 0.0
  %1887 = vmatprep.subr.mxu0 0.0
  %1888 = vmatpush1.xpose.msra.mxu0 0.0
  %1889 = vmatprep.mubr.f32.mxu0 0.0
  %1890 = vmatmul.mubr.f32.gmra.mrb[0].mxu0 %v1817
  %v1891 = vpop.f32.mrb[0].mxu0
  %v1892 = vadd.f32 0.0, %v1891
  %v1893 = vpop.f32.mrb[0].mxu0
  %1894 = vmatprep.mubr.f32.mxu0 0.0
  %1895 = vmatmul.mubr.f32.gmra.mrb[0].mxu0 %v1819
  %v1896 = vpop.f32.mrb[0].mxu0
  %v1897 = vadd.f32 0.0, %v1896
  %v1898 = vpop.f32.mrb[0].mxu0
  %1899 = vdwg.mxu0
  %v1900 = vmul.f32 %v1801, 0.35355338
  %v1901 = vmul.f32 %v1806, 0.35355338
  %v1902 = vmul.f32 %v1892, 0.35355338
  %v1903 = vmul.f32 %v1897, 0.35355338
  %v1904 = vadd.f32 %v1900, %v347
  %v1905 = vadd.f32 %v1901, %v348
  %v1906 = vadd.f32 %v1902, %v349
  %v1907 = vadd.f32 %v1903, %v350
  %v1908 = vsel %vm85, %v1904, -inf
  %1909 = vmax.xlane.f32.xlu0 %v1908
  %v1910 = vpop.xlane.xlu0 %1909
  %v1911 = vsel %vm85, %v1905, -inf
  %1912 = vmax.xlane.f32.xlu0 %v1911
  %v1913 = vpop.xlane.xlu0 %1912
  %v1914 = vsel %vm85, %v1906, -inf
  %1915 = vmax.xlane.f32.xlu0 %v1914
  %v1916 = vpop.xlane.xlu0 %1915
  %v1917 = vsel %vm85, %v1907, -inf
  %1918 = vmax.xlane.f32.xlu0 %v1917
  %v1919 = vpop.xlane.xlu0 %1918
  %v1920 = vsub.f32 %v1904, %v1910
  %v1921 = vsub.f32 %v1905, %v1913
  %v1922 = vsub.f32 %v1906, %v1916
  %v1923 = vsub.f32 %v1907, %v1919
  %v1924 = vmul.f32 %v1920, 1.442695
  %v1925 = vpow.pop %v1924
  %v1926 = vmul.f32 %v1921, 1.442695
  %v1927 = vpow.pop %v1926
  %v1928 = vmul.f32 %v1922, 1.442695
  %v1929 = vpow.pop %v1928
  %v1930 = vmul.f32 %v1923, 1.442695
  %v1931 = vpow.pop %v1930
  %v1932 = vsel %vm85, %v1925, 0.0
  %1933 = vadd.xlane.f32.xlu0 %v1932
  %v1934 = vpop.xlane.xlu0 %1933
  %v1935 = vsel %vm85, %v1927, 0.0
  %1936 = vadd.xlane.f32.xlu0 %v1935
  %v1937 = vpop.xlane.xlu0 %1936
  %v1938 = vsel %vm85, %v1929, 0.0
  %1939 = vadd.xlane.f32.xlu0 %v1938
  %v1940 = vpop.xlane.xlu0 %1939
  %v1941 = vsel %vm85, %v1931, 0.0
  %1942 = vadd.xlane.f32.xlu0 %v1941
  %v1943 = vpop.xlane.xlu0 %1942
  %v1944 = vrcp.pop %v1934
  %v1945 = vmul.f32 %v1925, %v1944
  %v1946 = vrcp.pop %v1937
  %v1947 = vmul.f32 %v1927, %v1946
  %v1948 = vrcp.pop %v1940
  %v1949 = vmul.f32 %v1929, %v1948
  %v1950 = vrcp.pop %v1943
  %v1951 = vmul.f32 %v1931, %v1950
  %1956 = vrot.lane.b32.xlu0 %v1945, 48
  %v1957 = vpop.permute.xlu0 %1956
  %1958 = vrot.lane.b32.xlu0 %v1947, 48
  %v1959 = vpop.permute.xlu0 %1958
  %1960 = vrot.lane.b32.xlu0 %v1949, 48
  %v1961 = vpop.permute.xlu0 %1960
  %1962 = vrot.lane.b32.xlu0 %v1951, 48
  %v1963 = vpop.permute.xlu0 %1962
  %vm1968 = vcmask 523648
  %1969 = vst.msk [vmem:[%s25] sm:$0xff] %vm1968, %v1957
  %1970 = vst.msk [vmem:[%s25 + $0x8] sm:$0xff] %vm1968, %v1959
  %1971 = vst.msk [vmem:[%s25 + $0x10] sm:$0xff] %vm1968, %v1961
  %1972 = vst.msk [vmem:[%s25 + $0x18] sm:$0xff] %vm1968, %v1963
  %1973 = vrot.lane.b32.xlu0 %v441, 40
  %v1974 = vpop.permute.xlu0 %1973
  %1975 = vrot.lane.b32.xlu0 %v446, 40
  %v1976 = vpop.permute.xlu0 %1975
  %v1979 = vsel %vm85, %v1945, 0
  %v1981 = vsel %vm85, %v1947, 0
  %1983 = vmatprep.subr.mxu0 0.0
  %1984 = vmatpush1.msra.mxu0 %v1974
  %1985 = vmatprep.subr.mxu0 0.0
  %1986 = vmatpush1.msra.mxu0 %v1976
  %1987 = vmatprep.subr.mxu0 0.0
  %1988 = vmatpush1.msra.mxu0 0.0
  %1989 = vmatprep.subr.mxu0 0.0
  %1990 = vmatpush1.msra.mxu0 0.0
  %1991 = vmatprep.subr.mxu0 0.0
  %1992 = vmatpush1.msra.mxu0 0.0
  %1993 = vmatprep.subr.mxu0 0.0
  %1994 = vmatpush1.msra.mxu0 0.0
  %1995 = vmatprep.subr.mxu0 0.0
  %1996 = vmatpush1.msra.mxu0 0.0
  %1997 = vmatprep.subr.mxu0 0.0
  %1998 = vmatpush1.msra.mxu0 0.0
  %1999 = vmatprep.subr.mxu0 0.0
  %2000 = vmatpush1.msra.mxu0 0.0
  %2001 = vmatprep.subr.mxu0 0.0
  %2002 = vmatpush1.msra.mxu0 0.0
  %2003 = vmatprep.subr.mxu0 0.0
  %2004 = vmatpush1.msra.mxu0 0.0
  %2005 = vmatprep.subr.mxu0 0.0
  %2006 = vmatpush1.msra.mxu0 0.0
  %2007 = vmatprep.subr.mxu0 0.0
  %2008 = vmatpush1.msra.mxu0 0.0
  %2009 = vmatprep.subr.mxu0 0.0
  %2010 = vmatpush1.msra.mxu0 0.0
  %2011 = vmatprep.subr.mxu0 0.0
  %2012 = vmatpush1.msra.mxu0 0.0
  %2013 = vmatprep.subr.mxu0 0.0
  %2014 = vmatpush1.msra.mxu0 0.0
  %2015 = vmatprep.subr.mxu0 0.0
  %2016 = vmatpush1.msra.mxu0 0.0
  %2017 = vmatprep.subr.mxu0 0.0
  %2018 = vmatpush1.msra.mxu0 0.0
  %2019 = vmatprep.subr.mxu0 0.0
  %2020 = vmatpush1.msra.mxu0 0.0
  %2021 = vmatprep.subr.mxu0 0.0
  %2022 = vmatpush1.msra.mxu0 0.0
  %2023 = vmatprep.subr.mxu0 0.0
  %2024 = vmatpush1.msra.mxu0 0.0
  %2025 = vmatprep.subr.mxu0 0.0
  %2026 = vmatpush1.msra.mxu0 0.0
  %2027 = vmatprep.subr.mxu0 0.0
  %2028 = vmatpush1.msra.mxu0 0.0
  %2029 = vmatprep.subr.mxu0 0.0
  %2030 = vmatpush1.msra.mxu0 0.0
  %2031 = vmatprep.subr.mxu0 0.0
  %2032 = vmatpush1.msra.mxu0 0.0
  %2033 = vmatprep.subr.mxu0 0.0
  %2034 = vmatpush1.msra.mxu0 0.0
  %2035 = vmatprep.subr.mxu0 0.0
  %2036 = vmatpush1.msra.mxu0 0.0
  %2037 = vmatprep.subr.mxu0 0.0
  %2038 = vmatpush1.msra.mxu0 0.0
  %2039 = vmatprep.subr.mxu0 0.0
  %2040 = vmatpush1.msra.mxu0 0.0
  %2041 = vmatprep.subr.mxu0 0.0
  %2042 = vmatpush1.msra.mxu0 0.0
  %2043 = vmatprep.subr.mxu0 0.0
  %2044 = vmatpush1.msra.mxu0 0.0
  %2045 = vmatprep.subr.mxu0 0.0
  %2046 = vmatpush1.msra.mxu0 0.0
  %2047 = vmatprep.mubr.f32.mxu0 0.0
  %2048 = vmatmul.mubr.f32.gmra.mrb[0].mxu0 %v1979
  %v2049 = vpop.f32.mrb[0].mxu0
  %v2050 = vadd.f32 0.0, %v2049
  %v2051 = vpop.f32.mrb[0].mxu0
  %2052 = vmatprep.mubr.f32.mxu0 0.0
  %2053 = vmatmul.mubr.f32.gmra.mrb[0].mxu0 %v1981
  %v2054 = vpop.f32.mrb[0].mxu0
  %v2055 = vadd.f32 0.0, %v2054
  %v2056 = vpop.f32.mrb[0].mxu0
  %2057 = vdwg.mxu0
  %2058 = vrot.lane.b32.xlu0 %v451, 40
  %v2059 = vpop.permute.xlu0 %2058
  %2060 = vrot.lane.b32.xlu0 %v456, 40
  %v2061 = vpop.permute.xlu0 %2060
  %v2064 = vsel %vm85, %v1949, 0
  %v2066 = vsel %vm85, %v1951, 0
  %2068 = vmatprep.subr.mxu0 0.0
  %2069 = vmatpush1.msra.mxu0 %v2059
  %2070 = vmatprep.subr.mxu0 0.0
  %2071 = vmatpush1.msra.mxu0 %v2061
  %2072 = vmatprep.subr.mxu0 0.0
  %2073 = vmatpush1.msra.mxu0 0.0
  %2074 = vmatprep.subr.mxu0 0.0
  %2075 = vmatpush1.msra.mxu0 0.0
  %2076 = vmatprep.subr.mxu0 0.0
  %2077 = vmatpush1.msra.mxu0 0.0
  %2078 = vmatprep.subr.mxu0 0.0
  %2079 = vmatpush1.msra.mxu0 0.0
  %2080 = vmatprep.subr.mxu0 0.0
  %2081 = vmatpush1.msra.mxu0 0.0
  %2082 = vmatprep.subr.mxu0 0.0
  %2083 = vmatpush1.msra.mxu0 0.0
  %2084 = vmatprep.subr.mxu0 0.0
  %2085 = vmatpush1.msra.mxu0 0.0
  %2086 = vmatprep.subr.mxu0 0.0
  %2087 = vmatpush1.msra.mxu0 0.0
  %2088 = vmatprep.subr.mxu0 0.0
  %2089 = vmatpush1.msra.mxu0 0.0
  %2090 = vmatprep.subr.mxu0 0.0
  %2091 = vmatpush1.msra.mxu0 0.0
  %2092 = vmatprep.subr.mxu0 0.0
  %2093 = vmatpush1.msra.mxu0 0.0
  %2094 = vmatprep.subr.mxu0 0.0
  %2095 = vmatpush1.msra.mxu0 0.0
  %2096 = vmatprep.subr.mxu0 0.0
  %2097 = vmatpush1.msra.mxu0 0.0
  %2098 = vmatprep.subr.mxu0 0.0
  %2099 = vmatpush1.msra.mxu0 0.0
  %2100 = vmatprep.subr.mxu0 0.0
  %2101 = vmatpush1.msra.mxu0 0.0
  %2102 = vmatprep.subr.mxu0 0.0
  %2103 = vmatpush1.msra.mxu0 0.0
  %2104 = vmatprep.subr.mxu0 0.0
  %2105 = vmatpush1.msra.mxu0 0.0
  %2106 = vmatprep.subr.mxu0 0.0
  %2107 = vmatpush1.msra.mxu0 0.0
  %2108 = vmatprep.subr.mxu0 0.0
  %2109 = vmatpush1.msra.mxu0 0.0
  %2110 = vmatprep.subr.mxu0 0.0
  %2111 = vmatpush1.msra.mxu0 0.0
  %2112 = vmatprep.subr.mxu0 0.0
  %2113 = vmatpush1.msra.mxu0 0.0
  %2114 = vmatprep.subr.mxu0 0.0
  %2115 = vmatpush1.msra.mxu0 0.0
  %2116 = vmatprep.subr.mxu0 0.0
  %2117 = vmatpush1.msra.mxu0 0.0
  %2118 = vmatprep.subr.mxu0 0.0
  %2119 = vmatpush1.msra.mxu0 0.0
  %2120 = vmatprep.subr.mxu0 0.0
  %2121 = vmatpush1.msra.mxu0 0.0
  %2122 = vmatprep.subr.mxu0 0.0
  %2123 = vmatpush1.msra.mxu0 0.0
  %2124 = vmatprep.subr.mxu0 0.0
  %2125 = vmatpush1.msra.mxu0 0.0
  %2126 = vmatprep.subr.mxu0 0.0
  %2127 = vmatpush1.msra.mxu0 0.0
  %2128 = vmatprep.subr.mxu0 0.0
  %2129 = vmatpush1.msra.mxu0 0.0
  %2130 = vmatprep.subr.mxu0 0.0
  %2131 = vmatpush1.msra.mxu0 0.0
  %2132 = vmatprep.mubr.f32.mxu0 0.0
  %2133 = vmatmul.mubr.f32.gmra.mrb[0].mxu0 %v2064
  %v2134 = vpop.f32.mrb[0].mxu0
  %v2135 = vadd.f32 0.0, %v2134
  %v2136 = vpop.f32.mrb[0].mxu0
  %2137 = vmatprep.mubr.f32.mxu0 0.0
  %2138 = vmatmul.mubr.f32.gmra.mrb[0].mxu0 %v2066
  %v2139 = vpop.f32.mrb[0].mxu0
  %v2140 = vadd.f32 0.0, %v2139
  %v2141 = vpop.f32.mrb[0].mxu0
  %2142 = vdwg.mxu0
  %2147 = vrot.lane.b32.xlu0 %v1200, 8
  %v2148 = vpop.permute.xlu0 %2147
  %2149 = vrot.lane.b32.xlu0 %v1205, 8
  %v2150 = vpop.permute.xlu0 %2149
  %2151 = vrot.lane.b32.xlu0 %v1285, 8
  %v2152 = vpop.permute.xlu0 %2151
  %2153 = vrot.lane.b32.xlu0 %v1290, 8
  %v2154 = vpop.permute.xlu0 %2153
  %2163 = vrot.lane.b32.xlu0 %v1625, 16
  %v2164 = vpop.permute.xlu0 %2163
  %2165 = vrot.lane.b32.xlu0 %v1630, 16
  %v2166 = vpop.permute.xlu0 %2165
  %2167 = vrot.lane.b32.xlu0 %v1710, 16
  %v2168 = vpop.permute.xlu0 %2167
  %2169 = vrot.lane.b32.xlu0 %v1715, 16
  %v2170 = vpop.permute.xlu0 %2169
  %2179 = vrot.lane.b32.xlu0 %v2050, 24
  %v2180 = vpop.permute.xlu0 %2179
  %2181 = vrot.lane.b32.xlu0 %v2055, 24
  %v2182 = vpop.permute.xlu0 %2181
  %2183 = vrot.lane.b32.xlu0 %v2135, 24
  %v2184 = vpop.permute.xlu0 %2183
  %2185 = vrot.lane.b32.xlu0 %v2140, 24
  %v2186 = vpop.permute.xlu0 %2185
  %v2191 = vsel %vm465, %v773, %v2148
  %v2192 = vsel %vm465, %v778, %v2150
  %v2193 = vsel %vm465, %v860, %v2152
  %v2194 = vsel %vm465, %v865, %v2154
  %v2195 = vsel %vm85, %v2191, %v2164
  %v2196 = vsel %vm85, %v2192, %v2166
  %v2197 = vsel %vm85, %v2193, %v2168
  %v2198 = vsel %vm85, %v2194, %v2170
  %vm2199 = vcmask 195584
  %v2200 = vsel %vm2199, %v2195, %v2180
  %v2201 = vsel %vm2199, %v2196, %v2182
  %v2202 = vsel %vm2199, %v2197, %v2184
  %v2203 = vsel %vm2199, %v2198, %v2186
  %v2204 = vld [vmem:[%s9] sm:$0xff]
  %v2205 = vld [vmem:[%s9 + $0x8] sm:$0xff]
  %v2206 = vld [vmem:[%s9 + $0x10] sm:$0xff]
  %v2207 = vld [vmem:[%s9 + $0x18] sm:$0xff]
  %v2208 = vld [vmem:[%s10] sm:$0x1]
  %v2210 = vlaneseq
  %v2211 = vshrl.u32 %v2210, 7
  %v2212 = vsub.s32 0, %v2211
  %v2213 = vrot.slane %v2208, %v2212
  %v2216 = vsel %vm269, %v2200, 0
  %v2219 = vsel %vm269, %v2201, 0
  %v2222 = vsel %vm269, %v2202, 0
  %v2225 = vsel %vm269, %v2203, 0
  %2227 = vmatprep.subr.mxu0 0.0
  %2228 = vmatpush1.msra.mxu0 %v2204
  %2229 = vmatprep.subr.mxu0 0.0
  %2230 = vmatpush1.msra.mxu0 %v2205
  %2231 = vmatprep.subr.mxu0 0.0
  %2232 = vmatpush1.msra.mxu0 %v2206
  %2233 = vmatprep.subr.mxu0 0.0
  %2234 = vmatpush1.msra.mxu0 %v2207
  %2235 = vmatprep.subr.mxu0 0.0
  %2236 = vmatpush1.msra.mxu0 0.0
  %2237 = vmatprep.subr.mxu0 0.0
  %2238 = vmatpush1.msra.mxu0 0.0
  %2239 = vmatprep.subr.mxu0 0.0
  %2240 = vmatpush1.msra.mxu0 0.0
  %2241 = vmatprep.subr.mxu0 0.0
  %2242 = vmatpush1.msra.mxu0 0.0
  %2243 = vmatprep.subr.mxu0 0.0
  %2244 = vmatpush1.msra.mxu0 0.0
  %2245 = vmatprep.subr.mxu0 0.0
  %2246 = vmatpush1.msra.mxu0 0.0
  %2247 = vmatprep.subr.mxu0 0.0
  %2248 = vmatpush1.msra.mxu0 0.0
  %2249 = vmatprep.subr.mxu0 0.0
  %2250 = vmatpush1.msra.mxu0 0.0
  %2251 = vmatprep.subr.mxu0 0.0
  %2252 = vmatpush1.msra.mxu0 0.0
  %2253 = vmatprep.subr.mxu0 0.0
  %2254 = vmatpush1.msra.mxu0 0.0
  %2255 = vmatprep.subr.mxu0 0.0
  %2256 = vmatpush1.msra.mxu0 0.0
  %2257 = vmatprep.subr.mxu0 0.0
  %2258 = vmatpush1.msra.mxu0 0.0
  %2259 = vmatprep.subr.mxu0 0.0
  %2260 = vmatpush1.msra.mxu0 0.0
  %2261 = vmatprep.subr.mxu0 0.0
  %2262 = vmatpush1.msra.mxu0 0.0
  %2263 = vmatprep.subr.mxu0 0.0
  %2264 = vmatpush1.msra.mxu0 0.0
  %2265 = vmatprep.subr.mxu0 0.0
  %2266 = vmatpush1.msra.mxu0 0.0
  %2267 = vmatprep.subr.mxu0 0.0
  %2268 = vmatpush1.msra.mxu0 0.0
  %2269 = vmatprep.subr.mxu0 0.0
  %2270 = vmatpush1.msra.mxu0 0.0
  %2271 = vmatprep.subr.mxu0 0.0
  %2272 = vmatpush1.msra.mxu0 0.0
  %2273 = vmatprep.subr.mxu0 0.0
  %2274 = vmatpush1.msra.mxu0 0.0
  %2275 = vmatprep.subr.mxu0 0.0
  %2276 = vmatpush1.msra.mxu0 0.0
  %2277 = vmatprep.subr.mxu0 0.0
  %2278 = vmatpush1.msra.mxu0 0.0
  %2279 = vmatprep.subr.mxu0 0.0
  %2280 = vmatpush1.msra.mxu0 0.0
  %2281 = vmatprep.subr.mxu0 0.0
  %2282 = vmatpush1.msra.mxu0 0.0
  %2283 = vmatprep.subr.mxu0 0.0
  %2284 = vmatpush1.msra.mxu0 0.0
  %2285 = vmatprep.subr.mxu0 0.0
  %2286 = vmatpush1.msra.mxu0 0.0
  %2287 = vmatprep.subr.mxu0 0.0
  %2288 = vmatpush1.msra.mxu0 0.0
  %2289 = vmatprep.subr.mxu0 0.0
  %2290 = vmatpush1.msra.mxu0 0.0
  %2291 = vmatprep.mubr.f32.mxu0 0.0
  %2292 = vmatmul.mubr.f32.gmra.mrb[0].mxu0 %v2216
  %v2293 = vpop.f32.mrb[0].mxu0
  %v2294 = vadd.f32 %v2213, %v2293
  %v2295 = vpop.f32.mrb[0].mxu0
  %2296 = vmatprep.mubr.f32.mxu0 0.0
  %2297 = vmatmul.mubr.f32.gmra.mrb[0].mxu0 %v2219
  %v2298 = vpop.f32.mrb[0].mxu0
  %v2299 = vadd.f32 %v2213, %v2298
  %v2300 = vpop.f32.mrb[0].mxu0
  %2301 = vmatprep.mubr.f32.mxu0 0.0
  %2302 = vmatmul.mubr.f32.gmra.mrb[0].mxu0 %v2222
  %v2303 = vpop.f32.mrb[0].mxu0
  %v2304 = vadd.f32 %v2213, %v2303
  %v2305 = vpop.f32.mrb[0].mxu0
  %2306 = vmatprep.mubr.f32.mxu0 0.0
  %2307 = vmatmul.mubr.f32.gmra.mrb[0].mxu0 %v2225
  %v2308 = vpop.f32.mrb[0].mxu0
  %v2309 = vadd.f32 %v2213, %v2308
  %v2310 = vpop.f32.mrb[0].mxu0
  %2311 = vdwg.mxu0
  %v2312 = vadd.f32 %v2294, %v339
  %v2313 = vadd.f32 %v2299, %v340
  %v2314 = vadd.f32 %v2304, %v341
  %v2315 = vadd.f32 %v2309, %v342
  %v2316 = vld [vmem:[%s11] sm:$0x1]
  %v2317 = vld [vmem:[%s12] sm:$0x1]
  %v2318 = vsel %vm269, %v2312, 0.0
  %2319 = vadd.xlane.f32.xlu0 %v2318
  %v2320 = vpop.xlane.xlu0 %2319
  %v2321 = vsel %vm269, %v2313, 0.0
  %2322 = vadd.xlane.f32.xlu0 %v2321
  %v2323 = vpop.xlane.xlu0 %2322
  %v2324 = vsel %vm269, %v2314, 0.0
  %2325 = vadd.xlane.f32.xlu0 %v2324
  %v2326 = vpop.xlane.xlu0 %2325
  %v2327 = vsel %vm269, %v2315, 0.0
  %2328 = vadd.xlane.f32.xlu0 %v2327
  %v2329 = vpop.xlane.xlu0 %2328
  %v2330 = vmul.f32 %v2320, %v282
  %v2331 = vmul.f32 %v2323, %v282
  %v2332 = vmul.f32 %v2326, %v282
  %v2333 = vmul.f32 %v2329, %v282
  %v2334 = vsub.f32 %v2312, %v2330
  %v2335 = vsub.f32 %v2313, %v2331
  %v2336 = vsub.f32 %v2314, %v2332
  %v2337 = vsub.f32 %v2315, %v2333
  %v2338 = vmul.f32 %v2334, %v2334
  %v2339 = vmul.f32 %v2335, %v2335
  %v2340 = vmul.f32 %v2336, %v2336
  %v2341 = vmul.f32 %v2337, %v2337
  %v2342 = vsel %vm269, %v2338, 0.0
  %2343 = vadd.xlane.f32.xlu0 %v2342
  %v2344 = vpop.xlane.xlu0 %2343
  %v2345 = vsel %vm269, %v2339, 0.0
  %2346 = vadd.xlane.f32.xlu0 %v2345
  %v2347 = vpop.xlane.xlu0 %2346
  %v2348 = vsel %vm269, %v2340, 0.0
  %2349 = vadd.xlane.f32.xlu0 %v2348
  %v2350 = vpop.xlane.xlu0 %2349
  %v2351 = vsel %vm269, %v2341, 0.0
  %2352 = vadd.xlane.f32.xlu0 %v2351
  %v2353 = vpop.xlane.xlu0 %2352
  %v2354 = vmul.f32 %v2344, %v282
  %v2355 = vmul.f32 %v2347, %v282
  %v2356 = vmul.f32 %v2350, %v282
  %v2357 = vmul.f32 %v2353, %v282
  %v2358 = vadd.f32 %v2354, 1e-05
  %v2359 = vadd.f32 %v2355, 1e-05
  %v2360 = vadd.f32 %v2356, 1e-05
  %v2361 = vadd.f32 %v2357, 1e-05
  %v2362 = vrsqrt.pop %v2358
  %v2363 = vrsqrt.pop %v2359
  %v2364 = vrsqrt.pop %v2360
  %v2365 = vrsqrt.pop %v2361
  %v2366 = vmul.f32 %v2334, %v2362
  %v2367 = vmul.f32 %v2335, %v2363
  %v2368 = vmul.f32 %v2336, %v2364
  %v2369 = vmul.f32 %v2337, %v2365
  %v2371 = vlaneseq
  %v2372 = vshrl.u32 %v2371, 7
  %v2373 = vsub.s32 0, %v2372
  %v2374 = vrot.slane %v2316, %v2373
  %v2376 = vmul.f32 %v2366, %v2374
  %v2377 = vmul.f32 %v2367, %v2374
  %v2378 = vmul.f32 %v2368, %v2374
  %v2379 = vmul.f32 %v2369, %v2374
  %v2381 = vlaneseq
  %v2382 = vshrl.u32 %v2381, 7
  %v2383 = vsub.s32 0, %v2382
  %v2384 = vrot.slane %v2317, %v2383
  %v2386 = vadd.f32 %v2376, %v2384
  %v2387 = vadd.f32 %v2377, %v2384
  %v2388 = vadd.f32 %v2378, %v2384
  %v2389 = vadd.f32 %v2379, %v2384
  %v2390 = vld [vmem:[%s13] sm:$0xff]
  %v2391 = vld [vmem:[%s13 + $0x8] sm:$0xff]
  %v2392 = vld [vmem:[%s13 + $0x10] sm:$0xff]
  %v2393 = vld [vmem:[%s13 + $0x18] sm:$0xff]
  %v2394 = vld [vmem:[%s14] sm:$0x1]
  %v2396 = vlaneseq
  %v2397 = vshrl.u32 %v2396, 7
  %v2398 = vsub.s32 0, %v2397
  %v2399 = vrot.slane %v2394, %v2398
  %v2402 = vsel %vm269, %v2386, 0
  %v2405 = vsel %vm269, %v2387, 0
  %v2408 = vsel %vm269, %v2388, 0
  %v2411 = vsel %vm269, %v2389, 0
  %2413 = vmatprep.subr.mxu0 0.0
  %2414 = vmatpush1.msra.mxu0 %v2390
  %2415 = vmatprep.subr.mxu0 0.0
  %2416 = vmatpush1.msra.mxu0 %v2391
  %2417 = vmatprep.subr.mxu0 0.0
  %2418 = vmatpush1.msra.mxu0 %v2392
  %2419 = vmatprep.subr.mxu0 0.0
  %2420 = vmatpush1.msra.mxu0 %v2393
  %2421 = vmatprep.subr.mxu0 0.0
  %2422 = vmatpush1.msra.mxu0 0.0
  %2423 = vmatprep.subr.mxu0 0.0
  %2424 = vmatpush1.msra.mxu0 0.0
  %2425 = vmatprep.subr.mxu0 0.0
  %2426 = vmatpush1.msra.mxu0 0.0
  %2427 = vmatprep.subr.mxu0 0.0
  %2428 = vmatpush1.msra.mxu0 0.0
  %2429 = vmatprep.subr.mxu0 0.0
  %2430 = vmatpush1.msra.mxu0 0.0
  %2431 = vmatprep.subr.mxu0 0.0
  %2432 = vmatpush1.msra.mxu0 0.0
  %2433 = vmatprep.subr.mxu0 0.0
  %2434 = vmatpush1.msra.mxu0 0.0
  %2435 = vmatprep.subr.mxu0 0.0
  %2436 = vmatpush1.msra.mxu0 0.0
  %2437 = vmatprep.subr.mxu0 0.0
  %2438 = vmatpush1.msra.mxu0 0.0
  %2439 = vmatprep.subr.mxu0 0.0
  %2440 = vmatpush1.msra.mxu0 0.0
  %2441 = vmatprep.subr.mxu0 0.0
  %2442 = vmatpush1.msra.mxu0 0.0
  %2443 = vmatprep.subr.mxu0 0.0
  %2444 = vmatpush1.msra.mxu0 0.0
  %2445 = vmatprep.subr.mxu0 0.0
  %2446 = vmatpush1.msra.mxu0 0.0
  %2447 = vmatprep.subr.mxu0 0.0
  %2448 = vmatpush1.msra.mxu0 0.0
  %2449 = vmatprep.subr.mxu0 0.0
  %2450 = vmatpush1.msra.mxu0 0.0
  %2451 = vmatprep.subr.mxu0 0.0
  %2452 = vmatpush1.msra.mxu0 0.0
  %2453 = vmatprep.subr.mxu0 0.0
  %2454 = vmatpush1.msra.mxu0 0.0
  %2455 = vmatprep.subr.mxu0 0.0
  %2456 = vmatpush1.msra.mxu0 0.0
  %2457 = vmatprep.subr.mxu0 0.0
  %2458 = vmatpush1.msra.mxu0 0.0
  %2459 = vmatprep.subr.mxu0 0.0
  %2460 = vmatpush1.msra.mxu0 0.0
  %2461 = vmatprep.subr.mxu0 0.0
  %2462 = vmatpush1.msra.mxu0 0.0
  %2463 = vmatprep.subr.mxu0 0.0
  %2464 = vmatpush1.msra.mxu0 0.0
  %2465 = vmatprep.subr.mxu0 0.0
  %2466 = vmatpush1.msra.mxu0 0.0
  %2467 = vmatprep.subr.mxu0 0.0
  %2468 = vmatpush1.msra.mxu0 0.0
  %2469 = vmatprep.subr.mxu0 0.0
  %2470 = vmatpush1.msra.mxu0 0.0
  %2471 = vmatprep.subr.mxu0 0.0
  %2472 = vmatpush1.msra.mxu0 0.0
  %2473 = vmatprep.subr.mxu0 0.0
  %2474 = vmatpush1.msra.mxu0 0.0
  %2475 = vmatprep.subr.mxu0 0.0
  %2476 = vmatpush1.msra.mxu0 0.0
  %2477 = vmatprep.mubr.f32.mxu0 0.0
  %2478 = vmatmul.mubr.f32.gmra.mrb[0].mxu0 %v2402
  %v2479 = vpop.f32.mrb[0].mxu0
  %v2480 = vadd.f32 %v2399, %v2479
  %v2481 = vpop.f32.mrb[0].mxu0
  %2482 = vmatprep.mubr.f32.mxu0 0.0
  %2483 = vmatmul.mubr.f32.gmra.mrb[0].mxu0 %v2405
  %v2484 = vpop.f32.mrb[0].mxu0
  %v2485 = vadd.f32 %v2399, %v2484
  %v2486 = vpop.f32.mrb[0].mxu0
  %2487 = vmatprep.mubr.f32.mxu0 0.0
  %2488 = vmatmul.mubr.f32.gmra.mrb[0].mxu0 %v2408
  %v2489 = vpop.f32.mrb[0].mxu0
  %v2490 = vadd.f32 %v2399, %v2489
  %v2491 = vpop.f32.mrb[0].mxu0
  %2492 = vmatprep.mubr.f32.mxu0 0.0
  %2493 = vmatmul.mubr.f32.gmra.mrb[0].mxu0 %v2411
  %v2494 = vpop.f32.mrb[0].mxu0
  %v2495 = vadd.f32 %v2399, %v2494
  %v2496 = vpop.f32.mrb[0].mxu0
  %2497 = vdwg.mxu0
  %v2498 = vmul.f32 %v2480, %v2480
  %v2499 = vmul.f32 %v2485, %v2485
  %v2500 = vmul.f32 %v2490, %v2490
  %v2501 = vmul.f32 %v2495, %v2495
  %v2502 = vmul.f32 %v2480, %v2498
  %v2503 = vmul.f32 %v2485, %v2499
  %v2504 = vmul.f32 %v2490, %v2500
  %v2505 = vmul.f32 %v2495, %v2501
  %v2506 = vmul.f32 %v2502, 0.044715
  %v2507 = vmul.f32 %v2503, 0.044715
  %v2508 = vmul.f32 %v2504, 0.044715
  %v2509 = vmul.f32 %v2505, 0.044715
  %v2510 = vadd.f32 %v2480, %v2506
  %v2511 = vadd.f32 %v2485, %v2507
  %v2512 = vadd.f32 %v2490, %v2508
  %v2513 = vadd.f32 %v2495, %v2509
  %v2514 = vmul.f32 %v2510, 0.7978846
  %v2515 = vmul.f32 %v2511, 0.7978846
  %v2516 = vmul.f32 %v2512, 0.7978846
  %v2517 = vmul.f32 %v2513, 0.7978846
  %v2518 = vtanh.pop %v2514
  %v2519 = vtanh.pop %v2515
  %v2520 = vtanh.pop %v2516
  %v2521 = vtanh.pop %v2517
  %v2522 = vadd.f32 %v2518, 1.0
  %v2523 = vadd.f32 %v2519, 1.0
  %v2524 = vadd.f32 %v2520, 1.0
  %v2525 = vadd.f32 %v2521, 1.0
  %v2526 = vmul.f32 %v2522, 0.5
  %v2527 = vmul.f32 %v2523, 0.5
  %v2528 = vmul.f32 %v2524, 0.5
  %v2529 = vmul.f32 %v2525, 0.5
  %v2530 = vmul.f32 %v2480, %v2526
  %v2531 = vmul.f32 %v2485, %v2527
  %v2532 = vmul.f32 %v2490, %v2528
  %v2533 = vmul.f32 %v2495, %v2529
  %v2534 = vld [vmem:[%s15] sm:$0xff]
  %v2535 = vld [vmem:[%s15 + $0x8] sm:$0xff]
  %v2536 = vld [vmem:[%s15 + $0x10] sm:$0xff]
  %v2537 = vld [vmem:[%s15 + $0x18] sm:$0xff]
  %v2538 = vld [vmem:[%s15 + $0x20] sm:$0xff]
  %v2539 = vld [vmem:[%s15 + $0x28] sm:$0xff]
  %v2540 = vld [vmem:[%s15 + $0x30] sm:$0xff]
  %v2541 = vld [vmem:[%s15 + $0x38] sm:$0xff]
  %v2542 = vld [vmem:[%s16] sm:$0x1]
  %v2544 = vlaneseq
  %v2545 = vshrl.u32 %v2544, 7
  %v2546 = vsub.s32 0, %v2545
  %v2547 = vrot.slane %v2542, %v2546
  %vm2549 = vcmask 523264
  %v2551 = vsel %vm2549, %v2530, 0
  %v2554 = vsel %vm2549, %v2531, 0
  %v2557 = vsel %vm2549, %v2532, 0
  %v2560 = vsel %vm2549, %v2533, 0
  %2562 = vmatprep.subr.mxu0 0.0
  %2563 = vmatpush1.msra.mxu0 %v2534
  %2564 = vmatprep.subr.mxu0 0.0
  %2565 = vmatpush1.msra.mxu0 %v2535
  %2566 = vmatprep.subr.mxu0 0.0
  %2567 = vmatpush1.msra.mxu0 %v2536
  %2568 = vmatprep.subr.mxu0 0.0
  %2569 = vmatpush1.msra.mxu0 %v2537
  %2570 = vmatprep.subr.mxu0 0.0
  %2571 = vmatpush1.msra.mxu0 %v2538
  %2572 = vmatprep.subr.mxu0 0.0
  %2573 = vmatpush1.msra.mxu0 %v2539
  %2574 = vmatprep.subr.mxu0 0.0
  %2575 = vmatpush1.msra.mxu0 %v2540
  %2576 = vmatprep.subr.mxu0 0.0
  %2577 = vmatpush1.msra.mxu0 %v2541
  %2578 = vmatprep.subr.mxu0 0.0
  %2579 = vmatpush1.msra.mxu0 0.0
  %2580 = vmatprep.subr.mxu0 0.0
  %2581 = vmatpush1.msra.mxu0 0.0
  %2582 = vmatprep.subr.mxu0 0.0
  %2583 = vmatpush1.msra.mxu0 0.0
  %2584 = vmatprep.subr.mxu0 0.0
  %2585 = vmatpush1.msra.mxu0 0.0
  %2586 = vmatprep.subr.mxu0 0.0
  %2587 = vmatpush1.msra.mxu0 0.0
  %2588 = vmatprep.subr.mxu0 0.0
  %2589 = vmatpush1.msra.mxu0 0.0
  %2590 = vmatprep.subr.mxu0 0.0
  %2591 = vmatpush1.msra.mxu0 0.0
  %2592 = vmatprep.subr.mxu0 0.0
  %2593 = vmatpush1.msra.mxu0 0.0
  %2594 = vmatprep.subr.mxu0 0.0
  %2595 = vmatpush1.msra.mxu0 0.0
  %2596 = vmatprep.subr.mxu0 0.0
  %2597 = vmatpush1.msra.mxu0 0.0
  %2598 = vmatprep.subr.mxu0 0.0
  %2599 = vmatpush1.msra.mxu0 0.0
  %2600 = vmatprep.subr.mxu0 0.0
  %2601 = vmatpush1.msra.mxu0 0.0
  %2602 = vmatprep.subr.mxu0 0.0
  %2603 = vmatpush1.msra.mxu0 0.0
  %2604 = vmatprep.subr.mxu0 0.0
  %2605 = vmatpush1.msra.mxu0 0.0
  %2606 = vmatprep.subr.mxu0 0.0
  %2607 = vmatpush1.msra.mxu0 0.0
  %2608 = vmatprep.subr.mxu0 0.0
  %2609 = vmatpush1.msra.mxu0 0.0
  %2610 = vmatprep.subr.mxu0 0.0
  %2611 = vmatpush1.msra.mxu0 0.0
  %2612 = vmatprep.subr.mxu0 0.0
  %2613 = vmatpush1.msra.mxu0 0.0
  %2614 = vmatprep.subr.mxu0 0.0
  %2615 = vmatpush1.msra.mxu0 0.0
  %2616 = vmatprep.subr.mxu0 0.0
  %2617 = vmatpush1.msra.mxu0 0.0
  %2618 = vmatprep.subr.mxu0 0.0
  %2619 = vmatpush1.msra.mxu0 0.0
  %2620 = vmatprep.subr.mxu0 0.0
  %2621 = vmatpush1.msra.mxu0 0.0
  %2622 = vmatprep.subr.mxu0 0.0
  %2623 = vmatpush1.msra.mxu0 0.0
  %2624 = vmatprep.subr.mxu0 0.0
  %2625 = vmatpush1.msra.mxu0 0.0
  %2626 = vmatprep.mubr.f32.mxu0 0.0
  %2627 = vmatmul.mubr.f32.gmra.mrb[0].mxu0 %v2551
  %v2628 = vpop.f32.mrb[0].mxu0
  %v2629 = vadd.f32 %v2547, %v2628
  %v2630 = vpop.f32.mrb[0].mxu0
  %2631 = vmatprep.mubr.f32.mxu0 0.0
  %2632 = vmatmul.mubr.f32.gmra.mrb[0].mxu0 %v2554
  %v2633 = vpop.f32.mrb[0].mxu0
  %v2634 = vadd.f32 %v2547, %v2633
  %v2635 = vpop.f32.mrb[0].mxu0
  %2636 = vmatprep.mubr.f32.mxu0 0.0
  %2637 = vmatmul.mubr.f32.gmra.mrb[0].mxu0 %v2557
  %v2638 = vpop.f32.mrb[0].mxu0
  %v2639 = vadd.f32 %v2547, %v2638
  %v2640 = vpop.f32.mrb[0].mxu0
  %2641 = vmatprep.mubr.f32.mxu0 0.0
  %2642 = vmatmul.mubr.f32.gmra.mrb[0].mxu0 %v2560
  %v2643 = vpop.f32.mrb[0].mxu0
  %v2644 = vadd.f32 %v2547, %v2643
  %v2645 = vpop.f32.mrb[0].mxu0
  %2646 = vdwg.mxu0
  %v2647 = vadd.f32 %v2629, %v2386
  %v2648 = vadd.f32 %v2634, %v2387
  %v2649 = vadd.f32 %v2639, %v2388
  %v2650 = vadd.f32 %v2644, %v2389
  %v2651 = vld [vmem:[%s17] sm:$0x1]
  %v2652 = vld [vmem:[%s18] sm:$0x1]
  %v2653 = vsel %vm269, %v2647, 0.0
  %2654 = vadd.xlane.f32.xlu0 %v2653
  %v2655 = vpop.xlane.xlu0 %2654
  %v2656 = vsel %vm269, %v2648, 0.0
  %2657 = vadd.xlane.f32.xlu0 %v2656
  %v2658 = vpop.xlane.xlu0 %2657
  %v2659 = vsel %vm269, %v2649, 0.0
  %2660 = vadd.xlane.f32.xlu0 %v2659
  %v2661 = vpop.xlane.xlu0 %2660
  %v2662 = vsel %vm269, %v2650, 0.0
  %2663 = vadd.xlane.f32.xlu0 %v2662
  %v2664 = vpop.xlane.xlu0 %2663
  %v2665 = vmul.f32 %v2655, %v282
  %v2666 = vmul.f32 %v2658, %v282
  %v2667 = vmul.f32 %v2661, %v282
  %v2668 = vmul.f32 %v2664, %v282
  %v2669 = vsub.f32 %v2647, %v2665
  %v2670 = vsub.f32 %v2648, %v2666
  %v2671 = vsub.f32 %v2649, %v2667
  %v2672 = vsub.f32 %v2650, %v2668
  %v2673 = vmul.f32 %v2669, %v2669
  %v2674 = vmul.f32 %v2670, %v2670
  %v2675 = vmul.f32 %v2671, %v2671
  %v2676 = vmul.f32 %v2672, %v2672
  %v2677 = vsel %vm269, %v2673, 0.0
  %2678 = vadd.xlane.f32.xlu0 %v2677
  %v2679 = vpop.xlane.xlu0 %2678
  %v2680 = vsel %vm269, %v2674, 0.0
  %2681 = vadd.xlane.f32.xlu0 %v2680
  %v2682 = vpop.xlane.xlu0 %2681
  %v2683 = vsel %vm269, %v2675, 0.0
  %2684 = vadd.xlane.f32.xlu0 %v2683
  %v2685 = vpop.xlane.xlu0 %2684
  %v2686 = vsel %vm269, %v2676, 0.0
  %2687 = vadd.xlane.f32.xlu0 %v2686
  %v2688 = vpop.xlane.xlu0 %2687
  %v2689 = vmul.f32 %v2679, %v282
  %v2690 = vmul.f32 %v2682, %v282
  %v2691 = vmul.f32 %v2685, %v282
  %v2692 = vmul.f32 %v2688, %v282
  %v2693 = vadd.f32 %v2689, 1e-05
  %v2694 = vadd.f32 %v2690, 1e-05
  %v2695 = vadd.f32 %v2691, 1e-05
  %v2696 = vadd.f32 %v2692, 1e-05
  %v2697 = vrsqrt.pop %v2693
  %v2698 = vrsqrt.pop %v2694
  %v2699 = vrsqrt.pop %v2695
  %v2700 = vrsqrt.pop %v2696
  %v2701 = vmul.f32 %v2669, %v2697
  %v2702 = vmul.f32 %v2670, %v2698
  %v2703 = vmul.f32 %v2671, %v2699
  %v2704 = vmul.f32 %v2672, %v2700
  %v2706 = vlaneseq
  %v2707 = vshrl.u32 %v2706, 7
  %v2708 = vsub.s32 0, %v2707
  %v2709 = vrot.slane %v2651, %v2708
  %v2711 = vmul.f32 %v2701, %v2709
  %v2712 = vmul.f32 %v2702, %v2709
  %v2713 = vmul.f32 %v2703, %v2709
  %v2714 = vmul.f32 %v2704, %v2709
  %v2716 = vlaneseq
  %v2717 = vshrl.u32 %v2716, 7
  %v2718 = vsub.s32 0, %v2717
  %v2719 = vrot.slane %v2652, %v2718
  %v2721 = vadd.f32 %v2711, %v2719
  %v2722 = vadd.f32 %v2712, %v2719
  %v2723 = vadd.f32 %v2713, %v2719
  %v2724 = vadd.f32 %v2714, %v2719
  %2729 = vrot.lane.b32.xlu0 %v2721, 32
  %v2730 = vpop.permute.xlu0 %2729
  %2731 = vrot.lane.b32.xlu0 %v2722, 32
  %v2732 = vpop.permute.xlu0 %2731
  %2733 = vrot.lane.b32.xlu0 %v2723, 32
  %v2734 = vpop.permute.xlu0 %2733
  %2735 = vrot.lane.b32.xlu0 %v2724, 32
  %v2736 = vpop.permute.xlu0 %2735
  %vm2741 = vcmask 523520
  %2742 = vst.msk [vmem:[%s24] sm:$0xff] %vm2741, %v2730
  %2743 = vst.msk [vmem:[%s24 + $0x8] sm:$0xff] %vm2741, %v2732
  %2744 = vst.msk [vmem:[%s24 + $0x10] sm:$0xff] %vm2741, %v2734
  %2745 = vst.msk [vmem:[%s24 + $0x18] sm:$0xff] %vm2741, %v2736
  %s2746 = scalar_lea.vmem %s7, 32
  %v2747 = vld [vmem:[%s2746] sm:$0xff]
  %v2748 = vld [vmem:[%s2746 + $0x8] sm:$0xff]
  %v2749 = vld [vmem:[%s2746 + $0x10] sm:$0xff]
  %v2750 = vld [vmem:[%s2746 + $0x18] sm:$0xff]
  %s2751 = scalar_lea.vmem %s8, 1
  %v2752 = vld [vmem:[%s2751] sm:$0x1]
  %v2754 = vlaneseq
  %v2755 = vshrl.u32 %v2754, 7
  %v2756 = vsub.s32 0, %v2755
  %v2757 = vrot.slane %v2752, %v2756
  %v2759 = vsel %vm269, %v2721, 0
  %v2761 = vsel %vm269, %v2722, 0
  %v2763 = vsel %vm269, %v2723, 0
  %v2765 = vsel %vm269, %v2724, 0
  %2767 = vmatprep.subr.mxu0 0.0
  %2768 = vmatpush1.msra.mxu0 %v2747
  %2769 = vmatprep.subr.mxu0 0.0
  %2770 = vmatpush1.msra.mxu0 %v2748
  %2771 = vmatprep.subr.mxu0 0.0
  %2772 = vmatpush1.msra.mxu0 %v2749
  %2773 = vmatprep.subr.mxu0 0.0
  %2774 = vmatpush1.msra.mxu0 %v2750
  %2775 = vmatprep.subr.mxu0 0.0
  %2776 = vmatpush1.msra.mxu0 0.0
  %2777 = vmatprep.subr.mxu0 0.0
  %2778 = vmatpush1.msra.mxu0 0.0
  %2779 = vmatprep.subr.mxu0 0.0
  %2780 = vmatpush1.msra.mxu0 0.0
  %2781 = vmatprep.subr.mxu0 0.0
  %2782 = vmatpush1.msra.mxu0 0.0
  %2783 = vmatprep.subr.mxu0 0.0
  %2784 = vmatpush1.msra.mxu0 0.0
  %2785 = vmatprep.subr.mxu0 0.0
  %2786 = vmatpush1.msra.mxu0 0.0
  %2787 = vmatprep.subr.mxu0 0.0
  %2788 = vmatpush1.msra.mxu0 0.0
  %2789 = vmatprep.subr.mxu0 0.0
  %2790 = vmatpush1.msra.mxu0 0.0
  %2791 = vmatprep.subr.mxu0 0.0
  %2792 = vmatpush1.msra.mxu0 0.0
  %2793 = vmatprep.subr.mxu0 0.0
  %2794 = vmatpush1.msra.mxu0 0.0
  %2795 = vmatprep.subr.mxu0 0.0
  %2796 = vmatpush1.msra.mxu0 0.0
  %2797 = vmatprep.subr.mxu0 0.0
  %2798 = vmatpush1.msra.mxu0 0.0
  %2799 = vmatprep.subr.mxu0 0.0
  %2800 = vmatpush1.msra.mxu0 0.0
  %2801 = vmatprep.subr.mxu0 0.0
  %2802 = vmatpush1.msra.mxu0 0.0
  %2803 = vmatprep.subr.mxu0 0.0
  %2804 = vmatpush1.msra.mxu0 0.0
  %2805 = vmatprep.subr.mxu0 0.0
  %2806 = vmatpush1.msra.mxu0 0.0
  %2807 = vmatprep.subr.mxu0 0.0
  %2808 = vmatpush1.msra.mxu0 0.0
  %2809 = vmatprep.subr.mxu0 0.0
  %2810 = vmatpush1.msra.mxu0 0.0
  %2811 = vmatprep.subr.mxu0 0.0
  %2812 = vmatpush1.msra.mxu0 0.0
  %2813 = vmatprep.subr.mxu0 0.0
  %2814 = vmatpush1.msra.mxu0 0.0
  %2815 = vmatprep.subr.mxu0 0.0
  %2816 = vmatpush1.msra.mxu0 0.0
  %2817 = vmatprep.subr.mxu0 0.0
  %2818 = vmatpush1.msra.mxu0 0.0
  %2819 = vmatprep.subr.mxu0 0.0
  %2820 = vmatpush1.msra.mxu0 0.0
  %2821 = vmatprep.subr.mxu0 0.0
  %2822 = vmatpush1.msra.mxu0 0.0
  %2823 = vmatprep.subr.mxu0 0.0
  %2824 = vmatpush1.msra.mxu0 0.0
  %2825 = vmatprep.subr.mxu0 0.0
  %2826 = vmatpush1.msra.mxu0 0.0
  %2827 = vmatprep.subr.mxu0 0.0
  %2828 = vmatpush1.msra.mxu0 0.0
  %2829 = vmatprep.subr.mxu0 0.0
  %2830 = vmatpush1.msra.mxu0 0.0
  %2831 = vmatprep.mubr.f32.mxu0 0.0
  %2832 = vmatmul.mubr.f32.gmra.mrb[0].mxu0 %v2759
  %v2833 = vpop.f32.mrb[0].mxu0
  %v2834 = vadd.f32 %v2757, %v2833
  %v2835 = vpop.f32.mrb[0].mxu0
  %2836 = vmatprep.mubr.f32.mxu0 0.0
  %2837 = vmatmul.mubr.f32.gmra.mrb[0].mxu0 %v2761
  %v2838 = vpop.f32.mrb[0].mxu0
  %v2839 = vadd.f32 %v2757, %v2838
  %v2840 = vpop.f32.mrb[0].mxu0
  %2841 = vmatprep.mubr.f32.mxu0 0.0
  %2842 = vmatmul.mubr.f32.gmra.mrb[0].mxu0 %v2763
  %v2843 = vpop.f32.mrb[0].mxu0
  %v2844 = vadd.f32 %v2757, %v2843
  %v2845 = vpop.f32.mrb[0].mxu0
  %2846 = vmatprep.mubr.f32.mxu0 0.0
  %2847 = vmatmul.mubr.f32.gmra.mrb[0].mxu0 %v2765
  %v2848 = vpop.f32.mrb[0].mxu0
  %v2849 = vadd.f32 %v2757, %v2848
  %v2850 = vpop.f32.mrb[0].mxu0
  %2851 = vdwg.mxu0
  %2854 = vrot.lane.b32.xlu0 %v2834, 96
  %v2855 = vpop.permute.xlu0 %2854
  %2856 = vrot.lane.b32.xlu0 %v2839, 96
  %v2857 = vpop.permute.xlu0 %2856
  %v2858 = vsel %vm465, %v2834, 0
  %v2860 = vsel %vm465, %v2839, 0
  %v2862 = vsel %vm465, %v2855, 0
  %v2864 = vsel %vm465, %v2857, 0
  %2866 = vmatprep.subr.mxu0 0.0
  %2867 = vmatpush1.xpose.msra.mxu0 %v2862
  %2868 = vmatprep.subr.mxu0 0.0
  %2869 = vmatpush1.xpose.msra.mxu0 %v2864
  %2870 = vmatprep.subr.mxu0 0.0
  %2871 = vmatpush1.xpose.msra.mxu0 0.0
  %2872 = vmatprep.subr.mxu0 0.0
  %2873 = vmatpush1.xpose.msra.mxu0 0.0
  %2874 = vmatprep.subr.mxu0 0.0
  %2875 = vmatpush1.xpose.msra.mxu0 0.0
  %2876 = vmatprep.subr.mxu0 0.0
  %2877 = vmatpush1.xpose.msra.mxu0 0.0
  %2878 = vmatprep.subr.mxu0 0.0
  %2879 = vmatpush1.xpose.msra.mxu0 0.0
  %2880 = vmatprep.subr.mxu0 0.0
  %2881 = vmatpush1.xpose.msra.mxu0 0.0
  %2882 = vmatprep.subr.mxu0 0.0
  %2883 = vmatpush1.xpose.msra.mxu0 0.0
  %2884 = vmatprep.subr.mxu0 0.0
  %2885 = vmatpush1.xpose.msra.mxu0 0.0
  %2886 = vmatprep.subr.mxu0 0.0
  %2887 = vmatpush1.xpose.msra.mxu0 0.0
  %2888 = vmatprep.subr.mxu0 0.0
  %2889 = vmatpush1.xpose.msra.mxu0 0.0
  %2890 = vmatprep.subr.mxu0 0.0
  %2891 = vmatpush1.xpose.msra.mxu0 0.0
  %2892 = vmatprep.subr.mxu0 0.0
  %2893 = vmatpush1.xpose.msra.mxu0 0.0
  %2894 = vmatprep.subr.mxu0 0.0
  %2895 = vmatpush1.xpose.msra.mxu0 0.0
  %2896 = vmatprep.subr.mxu0 0.0
  %2897 = vmatpush1.xpose.msra.mxu0 0.0
  %2898 = vmatprep.subr.mxu0 0.0
  %2899 = vmatpush1.xpose.msra.mxu0 0.0
  %2900 = vmatprep.subr.mxu0 0.0
  %2901 = vmatpush1.xpose.msra.mxu0 0.0
  %2902 = vmatprep.subr.mxu0 0.0
  %2903 = vmatpush1.xpose.msra.mxu0 0.0
  %2904 = vmatprep.subr.mxu0 0.0
  %2905 = vmatpush1.xpose.msra.mxu0 0.0
  %2906 = vmatprep.subr.mxu0 0.0
  %2907 = vmatpush1.xpose.msra.mxu0 0.0
  %2908 = vmatprep.subr.mxu0 0.0
  %2909 = vmatpush1.xpose.msra.mxu0 0.0
  %2910 = vmatprep.subr.mxu0 0.0
  %2911 = vmatpush1.xpose.msra.mxu0 0.0
  %2912 = vmatprep.subr.mxu0 0.0
  %2913 = vmatpush1.xpose.msra.mxu0 0.0
  %2914 = vmatprep.subr.mxu0 0.0
  %2915 = vmatpush1.xpose.msra.mxu0 0.0
  %2916 = vmatprep.subr.mxu0 0.0
  %2917 = vmatpush1.xpose.msra.mxu0 0.0
  %2918 = vmatprep.subr.mxu0 0.0
  %2919 = vmatpush1.xpose.msra.mxu0 0.0
  %2920 = vmatprep.subr.mxu0 0.0
  %2921 = vmatpush1.xpose.msra.mxu0 0.0
  %2922 = vmatprep.subr.mxu0 0.0
  %2923 = vmatpush1.xpose.msra.mxu0 0.0
  %2924 = vmatprep.subr.mxu0 0.0
  %2925 = vmatpush1.xpose.msra.mxu0 0.0
  %2926 = vmatprep.subr.mxu0 0.0
  %2927 = vmatpush1.xpose.msra.mxu0 0.0
  %2928 = vmatprep.subr.mxu0 0.0
  %2929 = vmatpush1.xpose.msra.mxu0 0.0
  %2930 = vmatprep.mubr.f32.mxu0 0.0
  %2931 = vmatmul.mubr.f32.gmra.mrb[0].mxu0 %v2858
  %v2932 = vpop.f32.mrb[0].mxu0
  %v2933 = vadd.f32 0.0, %v2932
  %v2934 = vpop.f32.mrb[0].mxu0
  %2935 = vmatprep.mubr.f32.mxu0 0.0
  %2936 = vmatmul.mubr.f32.gmra.mrb[0].mxu0 %v2860
  %v2937 = vpop.f32.mrb[0].mxu0
  %v2938 = vadd.f32 0.0, %v2937
  %v2939 = vpop.f32.mrb[0].mxu0
  %2940 = vdwg.mxu0
  %2943 = vrot.lane.b32.xlu0 %v2844, 96
  %v2944 = vpop.permute.xlu0 %2943
  %2945 = vrot.lane.b32.xlu0 %v2849, 96
  %v2946 = vpop.permute.xlu0 %2945
  %v2947 = vsel %vm465, %v2844, 0
  %v2949 = vsel %vm465, %v2849, 0
  %v2951 = vsel %vm465, %v2944, 0
  %v2953 = vsel %vm465, %v2946, 0
  %2955 = vmatprep.subr.mxu0 0.0
  %2956 = vmatpush1.xpose.msra.mxu0 %v2951
  %2957 = vmatprep.subr.mxu0 0.0
  %2958 = vmatpush1.xpose.msra.mxu0 %v2953
  %2959 = vmatprep.subr.mxu0 0.0
  %2960 = vmatpush1.xpose.msra.mxu0 0.0
  %2961 = vmatprep.subr.mxu0 0.0
  %2962 = vmatpush1.xpose.msra.mxu0 0.0
  %2963 = vmatprep.subr.mxu0 0.0
  %2964 = vmatpush1.xpose.msra.mxu0 0.0
  %2965 = vmatprep.subr.mxu0 0.0
  %2966 = vmatpush1.xpose.msra.mxu0 0.0
  %2967 = vmatprep.subr.mxu0 0.0
  %2968 = vmatpush1.xpose.msra.mxu0 0.0
  %2969 = vmatprep.subr.mxu0 0.0
  %2970 = vmatpush1.xpose.msra.mxu0 0.0
  %2971 = vmatprep.subr.mxu0 0.0
  %2972 = vmatpush1.xpose.msra.mxu0 0.0
  %2973 = vmatprep.subr.mxu0 0.0
  %2974 = vmatpush1.xpose.msra.mxu0 0.0
  %2975 = vmatprep.subr.mxu0 0.0
  %2976 = vmatpush1.xpose.msra.mxu0 0.0
  %2977 = vmatprep.subr.mxu0 0.0
  %2978 = vmatpush1.xpose.msra.mxu0 0.0
  %2979 = vmatprep.subr.mxu0 0.0
  %2980 = vmatpush1.xpose.msra.mxu0 0.0
  %2981 = vmatprep.subr.mxu0 0.0
  %2982 = vmatpush1.xpose.msra.mxu0 0.0
  %2983 = vmatprep.subr.mxu0 0.0
  %2984 = vmatpush1.xpose.msra.mxu0 0.0
  %2985 = vmatprep.subr.mxu0 0.0
  %2986 = vmatpush1.xpose.msra.mxu0 0.0
  %2987 = vmatprep.subr.mxu0 0.0
  %2988 = vmatpush1.xpose.msra.mxu0 0.0
  %2989 = vmatprep.subr.mxu0 0.0
  %2990 = vmatpush1.xpose.msra.mxu0 0.0
  %2991 = vmatprep.subr.mxu0 0.0
  %2992 = vmatpush1.xpose.msra.mxu0 0.0
  %2993 = vmatprep.subr.mxu0 0.0
  %2994 = vmatpush1.xpose.msra.mxu0 0.0
  %2995 = vmatprep.subr.mxu0 0.0
  %2996 = vmatpush1.xpose.msra.mxu0 0.0
  %2997 = vmatprep.subr.mxu0 0.0
  %2998 = vmatpush1.xpose.msra.mxu0 0.0
  %2999 = vmatprep.subr.mxu0 0.0
  %3000 = vmatpush1.xpose.msra.mxu0 0.0
  %3001 = vmatprep.subr.mxu0 0.0
  %3002 = vmatpush1.xpose.msra.mxu0 0.0
  %3003 = vmatprep.subr.mxu0 0.0
  %3004 = vmatpush1.xpose.msra.mxu0 0.0
  %3005 = vmatprep.subr.mxu0 0.0
  %3006 = vmatpush1.xpose.msra.mxu0 0.0
  %3007 = vmatprep.subr.mxu0 0.0
  %3008 = vmatpush1.xpose.msra.mxu0 0.0
  %3009 = vmatprep.subr.mxu0 0.0
  %3010 = vmatpush1.xpose.msra.mxu0 0.0
  %3011 = vmatprep.subr.mxu0 0.0
  %3012 = vmatpush1.xpose.msra.mxu0 0.0
  %3013 = vmatprep.subr.mxu0 0.0
  %3014 = vmatpush1.xpose.msra.mxu0 0.0
  %3015 = vmatprep.subr.mxu0 0.0
  %3016 = vmatpush1.xpose.msra.mxu0 0.0
  %3017 = vmatprep.subr.mxu0 0.0
  %3018 = vmatpush1.xpose.msra.mxu0 0.0
  %3019 = vmatprep.mubr.f32.mxu0 0.0
  %3020 = vmatmul.mubr.f32.gmra.mrb[0].mxu0 %v2947
  %v3021 = vpop.f32.mrb[0].mxu0
  %v3022 = vadd.f32 0.0, %v3021
  %v3023 = vpop.f32.mrb[0].mxu0
  %3024 = vmatprep.mubr.f32.mxu0 0.0
  %3025 = vmatmul.mubr.f32.gmra.mrb[0].mxu0 %v2949
  %v3026 = vpop.f32.mrb[0].mxu0
  %v3027 = vadd.f32 0.0, %v3026
  %v3028 = vpop.f32.mrb[0].mxu0
  %3029 = vdwg.mxu0
  %v3030 = vmul.f32 %v2933, 0.35355338
  %v3031 = vmul.f32 %v2938, 0.35355338
  %v3032 = vmul.f32 %v3022, 0.35355338
  %v3033 = vmul.f32 %v3027, 0.35355338
  %v3034 = vadd.f32 %v3030, %v347
  %v3035 = vadd.f32 %v3031, %v348
  %v3036 = vadd.f32 %v3032, %v349
  %v3037 = vadd.f32 %v3033, %v350
  %v3038 = vsel %vm85, %v3034, -inf
  %3039 = vmax.xlane.f32.xlu0 %v3038
  %v3040 = vpop.xlane.xlu0 %3039
  %v3041 = vsel %vm85, %v3035, -inf
  %3042 = vmax.xlane.f32.xlu0 %v3041
  %v3043 = vpop.xlane.xlu0 %3042
  %v3044 = vsel %vm85, %v3036, -inf
  %3045 = vmax.xlane.f32.xlu0 %v3044
  %v3046 = vpop.xlane.xlu0 %3045
  %v3047 = vsel %vm85, %v3037, -inf
  %3048 = vmax.xlane.f32.xlu0 %v3047
  %v3049 = vpop.xlane.xlu0 %3048
  %v3050 = vsub.f32 %v3034, %v3040
  %v3051 = vsub.f32 %v3035, %v3043
  %v3052 = vsub.f32 %v3036, %v3046
  %v3053 = vsub.f32 %v3037, %v3049
  %v3054 = vmul.f32 %v3050, 1.442695
  %v3055 = vpow.pop %v3054
  %v3056 = vmul.f32 %v3051, 1.442695
  %v3057 = vpow.pop %v3056
  %v3058 = vmul.f32 %v3052, 1.442695
  %v3059 = vpow.pop %v3058
  %v3060 = vmul.f32 %v3053, 1.442695
  %v3061 = vpow.pop %v3060
  %v3062 = vsel %vm85, %v3055, 0.0
  %3063 = vadd.xlane.f32.xlu0 %v3062
  %v3064 = vpop.xlane.xlu0 %3063
  %v3065 = vsel %vm85, %v3057, 0.0
  %3066 = vadd.xlane.f32.xlu0 %v3065
  %v3067 = vpop.xlane.xlu0 %3066
  %v3068 = vsel %vm85, %v3059, 0.0
  %3069 = vadd.xlane.f32.xlu0 %v3068
  %v3070 = vpop.xlane.xlu0 %3069
  %v3071 = vsel %vm85, %v3061, 0.0
  %3072 = vadd.xlane.f32.xlu0 %v3071
  %v3073 = vpop.xlane.xlu0 %3072
  %v3074 = vrcp.pop %v3064
  %v3075 = vmul.f32 %v3055, %v3074
  %v3076 = vrcp.pop %v3067
  %v3077 = vmul.f32 %v3057, %v3076
  %v3078 = vrcp.pop %v3070
  %v3079 = vmul.f32 %v3059, %v3078
  %v3080 = vrcp.pop %v3073
  %v3081 = vmul.f32 %v3061, %v3080
  %3086 = vrot.lane.b32.xlu0 %v3075, 64
  %v3087 = vpop.permute.xlu0 %3086
  %3088 = vrot.lane.b32.xlu0 %v3077, 64
  %v3089 = vpop.permute.xlu0 %3088
  %3090 = vrot.lane.b32.xlu0 %v3079, 64
  %v3091 = vpop.permute.xlu0 %3090
  %3092 = vrot.lane.b32.xlu0 %v3081, 64
  %v3093 = vpop.permute.xlu0 %3092
  %vm3098 = vcmask 654848
  %3099 = vst.msk [vmem:[%s25] sm:$0xff] %vm3098, %v3087
  %3100 = vst.msk [vmem:[%s25 + $0x8] sm:$0xff] %vm3098, %v3089
  %3101 = vst.msk [vmem:[%s25 + $0x10] sm:$0xff] %vm3098, %v3091
  %3102 = vst.msk [vmem:[%s25 + $0x18] sm:$0xff] %vm3098, %v3093
  %3103 = vrot.lane.b32.xlu0 %v2834, 64
  %v3104 = vpop.permute.xlu0 %3103
  %3105 = vrot.lane.b32.xlu0 %v2839, 64
  %v3106 = vpop.permute.xlu0 %3105
  %v3109 = vsel %vm85, %v3075, 0
  %v3111 = vsel %vm85, %v3077, 0
  %3113 = vmatprep.subr.mxu0 0.0
  %3114 = vmatpush1.msra.mxu0 %v3104
  %3115 = vmatprep.subr.mxu0 0.0
  %3116 = vmatpush1.msra.mxu0 %v3106
  %3117 = vmatprep.subr.mxu0 0.0
  %3118 = vmatpush1.msra.mxu0 0.0
  %3119 = vmatprep.subr.mxu0 0.0
  %3120 = vmatpush1.msra.mxu0 0.0
  %3121 = vmatprep.subr.mxu0 0.0
  %3122 = vmatpush1.msra.mxu0 0.0
  %3123 = vmatprep.subr.mxu0 0.0
  %3124 = vmatpush1.msra.mxu0 0.0
  %3125 = vmatprep.subr.mxu0 0.0
  %3126 = vmatpush1.msra.mxu0 0.0
  %3127 = vmatprep.subr.mxu0 0.0
  %3128 = vmatpush1.msra.mxu0 0.0
  %3129 = vmatprep.subr.mxu0 0.0
  %3130 = vmatpush1.msra.mxu0 0.0
  %3131 = vmatprep.subr.mxu0 0.0
  %3132 = vmatpush1.msra.mxu0 0.0
  %3133 = vmatprep.subr.mxu0 0.0
  %3134 = vmatpush1.msra.mxu0 0.0
  %3135 = vmatprep.subr.mxu0 0.0
  %3136 = vmatpush1.msra.mxu0 0.0
  %3137 = vmatprep.subr.mxu0 0.0
  %3138 = vmatpush1.msra.mxu0 0.0
  %3139 = vmatprep.subr.mxu0 0.0
  %3140 = vmatpush1.msra.mxu0 0.0
  %3141 = vmatprep.subr.mxu0 0.0
  %3142 = vmatpush1.msra.mxu0 0.0
  %3143 = vmatprep.subr.mxu0 0.0
  %3144 = vmatpush1.msra.mxu0 0.0
  %3145 = vmatprep.subr.mxu0 0.0
  %3146 = vmatpush1.msra.mxu0 0.0
  %3147 = vmatprep.subr.mxu0 0.0
  %3148 = vmatpush1.msra.mxu0 0.0
  %3149 = vmatprep.subr.mxu0 0.0
  %3150 = vmatpush1.msra.mxu0 0.0
  %3151 = vmatprep.subr.mxu0 0.0
  %3152 = vmatpush1.msra.mxu0 0.0
  %3153 = vmatprep.subr.mxu0 0.0
  %3154 = vmatpush1.msra.mxu0 0.0
  %3155 = vmatprep.subr.mxu0 0.0
  %3156 = vmatpush1.msra.mxu0 0.0
  %3157 = vmatprep.subr.mxu0 0.0
  %3158 = vmatpush1.msra.mxu0 0.0
  %3159 = vmatprep.subr.mxu0 0.0
  %3160 = vmatpush1.msra.mxu0 0.0
  %3161 = vmatprep.subr.mxu0 0.0
  %3162 = vmatpush1.msra.mxu0 0.0
  %3163 = vmatprep.subr.mxu0 0.0
  %3164 = vmatpush1.msra.mxu0 0.0
  %3165 = vmatprep.subr.mxu0 0.0
  %3166 = vmatpush1.msra.mxu0 0.0
  %3167 = vmatprep.subr.mxu0 0.0
  %3168 = vmatpush1.msra.mxu0 0.0
  %3169 = vmatprep.subr.mxu0 0.0
  %3170 = vmatpush1.msra.mxu0 0.0
  %3171 = vmatprep.subr.mxu0 0.0
  %3172 = vmatpush1.msra.mxu0 0.0
  %3173 = vmatprep.subr.mxu0 0.0
  %3174 = vmatpush1.msra.mxu0 0.0
  %3175 = vmatprep.subr.mxu0 0.0
  %3176 = vmatpush1.msra.mxu0 0.0
  %3177 = vmatprep.mubr.f32.mxu0 0.0
  %3178 = vmatmul.mubr.f32.gmra.mrb[0].mxu0 %v3109
  %v3179 = vpop.f32.mrb[0].mxu0
  %v3180 = vadd.f32 0.0, %v3179
  %v3181 = vpop.f32.mrb[0].mxu0
  %3182 = vmatprep.mubr.f32.mxu0 0.0
  %3183 = vmatmul.mubr.f32.gmra.mrb[0].mxu0 %v3111
  %v3184 = vpop.f32.mrb[0].mxu0
  %v3185 = vadd.f32 0.0, %v3184
  %v3186 = vpop.f32.mrb[0].mxu0
  %3187 = vdwg.mxu0
  %3188 = vrot.lane.b32.xlu0 %v2844, 64
  %v3189 = vpop.permute.xlu0 %3188
  %3190 = vrot.lane.b32.xlu0 %v2849, 64
  %v3191 = vpop.permute.xlu0 %3190
  %v3194 = vsel %vm85, %v3079, 0
  %v3196 = vsel %vm85, %v3081, 0
  %3198 = vmatprep.subr.mxu0 0.0
  %3199 = vmatpush1.msra.mxu0 %v3189
  %3200 = vmatprep.subr.mxu0 0.0
  %3201 = vmatpush1.msra.mxu0 %v3191
  %3202 = vmatprep.subr.mxu0 0.0
  %3203 = vmatpush1.msra.mxu0 0.0
  %3204 = vmatprep.subr.mxu0 0.0
  %3205 = vmatpush1.msra.mxu0 0.0
  %3206 = vmatprep.subr.mxu0 0.0
  %3207 = vmatpush1.msra.mxu0 0.0
  %3208 = vmatprep.subr.mxu0 0.0
  %3209 = vmatpush1.msra.mxu0 0.0
  %3210 = vmatprep.subr.mxu0 0.0
  %3211 = vmatpush1.msra.mxu0 0.0
  %3212 = vmatprep.subr.mxu0 0.0
  %3213 = vmatpush1.msra.mxu0 0.0
  %3214 = vmatprep.subr.mxu0 0.0
  %3215 = vmatpush1.msra.mxu0 0.0
  %3216 = vmatprep.subr.mxu0 0.0
  %3217 = vmatpush1.msra.mxu0 0.0
  %3218 = vmatprep.subr.mxu0 0.0
  %3219 = vmatpush1.msra.mxu0 0.0
  %3220 = vmatprep.subr.mxu0 0.0
  %3221 = vmatpush1.msra.mxu0 0.0
  %3222 = vmatprep.subr.mxu0 0.0
  %3223 = vmatpush1.msra.mxu0 0.0
  %3224 = vmatprep.subr.mxu0 0.0
  %3225 = vmatpush1.msra.mxu0 0.0
  %3226 = vmatprep.subr.mxu0 0.0
  %3227 = vmatpush1.msra.mxu0 0.0
  %3228 = vmatprep.subr.mxu0 0.0
  %3229 = vmatpush1.msra.mxu0 0.0
  %3230 = vmatprep.subr.mxu0 0.0
  %3231 = vmatpush1.msra.mxu0 0.0
  %3232 = vmatprep.subr.mxu0 0.0
  %3233 = vmatpush1.msra.mxu0 0.0
  %3234 = vmatprep.subr.mxu0 0.0
  %3235 = vmatpush1.msra.mxu0 0.0
  %3236 = vmatprep.subr.mxu0 0.0
  %3237 = vmatpush1.msra.mxu0 0.0
  %3238 = vmatprep.subr.mxu0 0.0
  %3239 = vmatpush1.msra.mxu0 0.0
  %3240 = vmatprep.subr.mxu0 0.0
  %3241 = vmatpush1.msra.mxu0 0.0
  %3242 = vmatprep.subr.mxu0 0.0
  %3243 = vmatpush1.msra.mxu0 0.0
  %3244 = vmatprep.subr.mxu0 0.0
  %3245 = vmatpush1.msra.mxu0 0.0
  %3246 = vmatprep.subr.mxu0 0.0
  %3247 = vmatpush1.msra.mxu0 0.0
  %3248 = vmatprep.subr.mxu0 0.0
  %3249 = vmatpush1.msra.mxu0 0.0
  %3250 = vmatprep.subr.mxu0 0.0
  %3251 = vmatpush1.msra.mxu0 0.0
  %3252 = vmatprep.subr.mxu0 0.0
  %3253 = vmatpush1.msra.mxu0 0.0
  %3254 = vmatprep.subr.mxu0 0.0
  %3255 = vmatpush1.msra.mxu0 0.0
  %3256 = vmatprep.subr.mxu0 0.0
  %3257 = vmatpush1.msra.mxu0 0.0
  %3258 = vmatprep.subr.mxu0 0.0
  %3259 = vmatpush1.msra.mxu0 0.0
  %3260 = vmatprep.subr.mxu0 0.0
  %3261 = vmatpush1.msra.mxu0 0.0
  %3262 = vmatprep.mubr.f32.mxu0 0.0
  %3263 = vmatmul.mubr.f32.gmra.mrb[0].mxu0 %v3194
  %v3264 = vpop.f32.mrb[0].mxu0
  %v3265 = vadd.f32 0.0, %v3264
  %v3266 = vpop.f32.mrb[0].mxu0
  %3267 = vmatprep.mubr.f32.mxu0 0.0
  %3268 = vmatmul.mubr.f32.gmra.mrb[0].mxu0 %v3196
  %v3269 = vpop.f32.mrb[0].mxu0
  %v3270 = vadd.f32 0.0, %v3269
  %v3271 = vpop.f32.mrb[0].mxu0
  %3272 = vdwg.mxu0
  %3273 = vrot.lane.b32.xlu0 %v2834, 120
  %v3274 = vpop.permute.xlu0 %3273
  %3275 = vrot.lane.b32.xlu0 %v2839, 120
  %v3276 = vpop.permute.xlu0 %3275
  %3277 = vrot.lane.b32.xlu0 %v2834, 88
  %v3278 = vpop.permute.xlu0 %3277
  %3279 = vrot.lane.b32.xlu0 %v2839, 88
  %v3280 = vpop.permute.xlu0 %3279
  %v3281 = vsel %vm465, %v3274, 0
  %v3283 = vsel %vm465, %v3276, 0
  %v3285 = vsel %vm465, %v3278, 0
  %v3287 = vsel %vm465, %v3280, 0
  %3289 = vmatprep.subr.mxu0 0.0
  %3290 = vmatpush1.xpose.msra.mxu0 %v3285
  %3291 = vmatprep.subr.mxu0 0.0
  %3292 = vmatpush1.xpose.msra.mxu0 %v3287
  %3293 = vmatprep.subr.mxu0 0.0
  %3294 = vmatpush1.xpose.msra.mxu0 0.0
  %3295 = vmatprep.subr.mxu0 0.0
  %3296 = vmatpush1.xpose.msra.mxu0 0.0
  %3297 = vmatprep.subr.mxu0 0.0
  %3298 = vmatpush1.xpose.msra.mxu0 0.0
  %3299 = vmatprep.subr.mxu0 0.0
  %3300 = vmatpush1.xpose.msra.mxu0 0.0
  %3301 = vmatprep.subr.mxu0 0.0
  %3302 = vmatpush1.xpose.msra.mxu0 0.0
  %3303 = vmatprep.subr.mxu0 0.0
  %3304 = vmatpush1.xpose.msra.mxu0 0.0
  %3305 = vmatprep.subr.mxu0 0.0
  %3306 = vmatpush1.xpose.msra.mxu0 0.0
  %3307 = vmatprep.subr.mxu0 0.0
  %3308 = vmatpush1.xpose.msra.mxu0 0.0
  %3309 = vmatprep.subr.mxu0 0.0
  %3310 = vmatpush1.xpose.msra.mxu0 0.0
  %3311 = vmatprep.subr.mxu0 0.0
  %3312 = vmatpush1.xpose.msra.mxu0 0.0
  %3313 = vmatprep.subr.mxu0 0.0
  %3314 = vmatpush1.xpose.msra.mxu0 0.0
  %3315 = vmatprep.subr.mxu0 0.0
  %3316 = vmatpush1.xpose.msra.mxu0 0.0
  %3317 = vmatprep.subr.mxu0 0.0
  %3318 = vmatpush1.xpose.msra.mxu0 0.0
  %3319 = vmatprep.subr.mxu0 0.0
  %3320 = vmatpush1.xpose.msra.mxu0 0.0
  %3321 = vmatprep.subr.mxu0 0.0
  %3322 = vmatpush1.xpose.msra.mxu0 0.0
  %3323 = vmatprep.subr.mxu0 0.0
  %3324 = vmatpush1.xpose.msra.mxu0 0.0
  %3325 = vmatprep.subr.mxu0 0.0
  %3326 = vmatpush1.xpose.msra.mxu0 0.0
  %3327 = vmatprep.subr.mxu0 0.0
  %3328 = vmatpush1.xpose.msra.mxu0 0.0
  %3329 = vmatprep.subr.mxu0 0.0
  %3330 = vmatpush1.xpose.msra.mxu0 0.0
  %3331 = vmatprep.subr.mxu0 0.0
  %3332 = vmatpush1.xpose.msra.mxu0 0.0
  %3333 = vmatprep.subr.mxu0 0.0
  %3334 = vmatpush1.xpose.msra.mxu0 0.0
  %3335 = vmatprep.subr.mxu0 0.0
  %3336 = vmatpush1.xpose.msra.mxu0 0.0
  %3337 = vmatprep.subr.mxu0 0.0
  %3338 = vmatpush1.xpose.msra.mxu0 0.0
  %3339 = vmatprep.subr.mxu0 0.0
  %3340 = vmatpush1.xpose.msra.mxu0 0.0
  %3341 = vmatprep.subr.mxu0 0.0
  %3342 = vmatpush1.xpose.msra.mxu0 0.0
  %3343 = vmatprep.subr.mxu0 0.0
  %3344 = vmatpush1.xpose.msra.mxu0 0.0
  %3345 = vmatprep.subr.mxu0 0.0
  %3346 = vmatpush1.xpose.msra.mxu0 0.0
  %3347 = vmatprep.subr.mxu0 0.0
  %3348 = vmatpush1.xpose.msra.mxu0 0.0
  %3349 = vmatprep.subr.mxu0 0.0
  %3350 = vmatpush1.xpose.msra.mxu0 0.0
  %3351 = vmatprep.subr.mxu0 0.0
  %3352 = vmatpush1.xpose.msra.mxu0 0.0
  %3353 = vmatprep.mubr.f32.mxu0 0.0
  %3354 = vmatmul.mubr.f32.gmra.mrb[0].mxu0 %v3281
  %v3355 = vpop.f32.mrb[0].mxu0
  %v3356 = vadd.f32 0.0, %v3355
  %v3357 = vpop.f32.mrb[0].mxu0
  %3358 = vmatprep.mubr.f32.mxu0 0.0
  %3359 = vmatmul.mubr.f32.gmra.mrb[0].mxu0 %v3283
  %v3360 = vpop.f32.mrb[0].mxu0
  %v3361 = vadd.f32 0.0, %v3360
  %v3362 = vpop.f32.mrb[0].mxu0
  %3363 = vdwg.mxu0
  %3364 = vrot.lane.b32.xlu0 %v2844, 120
  %v3365 = vpop.permute.xlu0 %3364
  %3366 = vrot.lane.b32.xlu0 %v2849, 120
  %v3367 = vpop.permute.xlu0 %3366
  %3368 = vrot.lane.b32.xlu0 %v2844, 88
  %v3369 = vpop.permute.xlu0 %3368
  %3370 = vrot.lane.b32.xlu0 %v2849, 88
  %v3371 = vpop.permute.xlu0 %3370
  %v3372 = vsel %vm465, %v3365, 0
  %v3374 = vsel %vm465, %v3367, 0
  %v3376 = vsel %vm465, %v3369, 0
  %v3378 = vsel %vm465, %v3371, 0
  %3380 = vmatprep.subr.mxu0 0.0
  %3381 = vmatpush1.xpose.msra.mxu0 %v3376
  %3382 = vmatprep.subr.mxu0 0.0
  %3383 = vmatpush1.xpose.msra.mxu0 %v3378
  %3384 = vmatprep.subr.mxu0 0.0
  %3385 = vmatpush1.xpose.msra.mxu0 0.0
  %3386 = vmatprep.subr.mxu0 0.0
  %3387 = vmatpush1.xpose.msra.mxu0 0.0
  %3388 = vmatprep.subr.mxu0 0.0
  %3389 = vmatpush1.xpose.msra.mxu0 0.0
  %3390 = vmatprep.subr.mxu0 0.0
  %3391 = vmatpush1.xpose.msra.mxu0 0.0
  %3392 = vmatprep.subr.mxu0 0.0
  %3393 = vmatpush1.xpose.msra.mxu0 0.0
  %3394 = vmatprep.subr.mxu0 0.0
  %3395 = vmatpush1.xpose.msra.mxu0 0.0
  %3396 = vmatprep.subr.mxu0 0.0
  %3397 = vmatpush1.xpose.msra.mxu0 0.0
  %3398 = vmatprep.subr.mxu0 0.0
  %3399 = vmatpush1.xpose.msra.mxu0 0.0
  %3400 = vmatprep.subr.mxu0 0.0
  %3401 = vmatpush1.xpose.msra.mxu0 0.0
  %3402 = vmatprep.subr.mxu0 0.0
  %3403 = vmatpush1.xpose.msra.mxu0 0.0
  %3404 = vmatprep.subr.mxu0 0.0
  %3405 = vmatpush1.xpose.msra.mxu0 0.0
  %3406 = vmatprep.subr.mxu0 0.0
  %3407 = vmatpush1.xpose.msra.mxu0 0.0
  %3408 = vmatprep.subr.mxu0 0.0
  %3409 = vmatpush1.xpose.msra.mxu0 0.0
  %3410 = vmatprep.subr.mxu0 0.0
  %3411 = vmatpush1.xpose.msra.mxu0 0.0
  %3412 = vmatprep.subr.mxu0 0.0
  %3413 = vmatpush1.xpose.msra.mxu0 0.0
  %3414 = vmatprep.subr.mxu0 0.0
  %3415 = vmatpush1.xpose.msra.mxu0 0.0
  %3416 = vmatprep.subr.mxu0 0.0
  %3417 = vmatpush1.xpose.msra.mxu0 0.0
  %3418 = vmatprep.subr.mxu0 0.0
  %3419 = vmatpush1.xpose.msra.mxu0 0.0
  %3420 = vmatprep.subr.mxu0 0.0
  %3421 = vmatpush1.xpose.msra.mxu0 0.0
  %3422 = vmatprep.subr.mxu0 0.0
  %3423 = vmatpush1.xpose.msra.mxu0 0.0
  %3424 = vmatprep.subr.mxu0 0.0
  %3425 = vmatpush1.xpose.msra.mxu0 0.0
  %3426 = vmatprep.subr.mxu0 0.0
  %3427 = vmatpush1.xpose.msra.mxu0 0.0
  %3428 = vmatprep.subr.mxu0 0.0
  %3429 = vmatpush1.xpose.msra.mxu0 0.0
  %3430 = vmatprep.subr.mxu0 0.0
  %3431 = vmatpush1.xpose.msra.mxu0 0.0
  %3432 = vmatprep.subr.mxu0 0.0
  %3433 = vmatpush1.xpose.msra.mxu0 0.0
  %3434 = vmatprep.subr.mxu0 0.0
  %3435 = vmatpush1.xpose.msra.mxu0 0.0
  %3436 = vmatprep.subr.mxu0 0.0
  %3437 = vmatpush1.xpose.msra.mxu0 0.0
  %3438 = vmatprep.subr.mxu0 0.0
  %3439 = vmatpush1.xpose.msra.mxu0 0.0
  %3440 = vmatprep.subr.mxu0 0.0
  %3441 = vmatpush1.xpose.msra.mxu0 0.0
  %3442 = vmatprep.subr.mxu0 0.0
  %3443 = vmatpush1.xpose.msra.mxu0 0.0
  %3444 = vmatprep.mubr.f32.mxu0 0.0
  %3445 = vmatmul.mubr.f32.gmra.mrb[0].mxu0 %v3372
  %v3446 = vpop.f32.mrb[0].mxu0
  %v3447 = vadd.f32 0.0, %v3446
  %v3448 = vpop.f32.mrb[0].mxu0
  %3449 = vmatprep.mubr.f32.mxu0 0.0
  %3450 = vmatmul.mubr.f32.gmra.mrb[0].mxu0 %v3374
  %v3451 = vpop.f32.mrb[0].mxu0
  %v3452 = vadd.f32 0.0, %v3451
  %v3453 = vpop.f32.mrb[0].mxu0
  %3454 = vdwg.mxu0
  %v3455 = vmul.f32 %v3356, 0.35355338
  %v3456 = vmul.f32 %v3361, 0.35355338
  %v3457 = vmul.f32 %v3447, 0.35355338
  %v3458 = vmul.f32 %v3452, 0.35355338
  %v3459 = vadd.f32 %v3455, %v347
  %v3460 = vadd.f32 %v3456, %v348
  %v3461 = vadd.f32 %v3457, %v349
  %v3462 = vadd.f32 %v3458, %v350
  %v3463 = vsel %vm85, %v3459, -inf
  %3464 = vmax.xlane.f32.xlu0 %v3463
  %v3465 = vpop.xlane.xlu0 %3464
  %v3466 = vsel %vm85, %v3460, -inf
  %3467 = vmax.xlane.f32.xlu0 %v3466
  %v3468 = vpop.xlane.xlu0 %3467
  %v3469 = vsel %vm85, %v3461, -inf
  %3470 = vmax.xlane.f32.xlu0 %v3469
  %v3471 = vpop.xlane.xlu0 %3470
  %v3472 = vsel %vm85, %v3462, -inf
  %3473 = vmax.xlane.f32.xlu0 %v3472
  %v3474 = vpop.xlane.xlu0 %3473
  %v3475 = vsub.f32 %v3459, %v3465
  %v3476 = vsub.f32 %v3460, %v3468
  %v3477 = vsub.f32 %v3461, %v3471
  %v3478 = vsub.f32 %v3462, %v3474
  %v3479 = vmul.f32 %v3475, 1.442695
  %v3480 = vpow.pop %v3479
  %v3481 = vmul.f32 %v3476, 1.442695
  %v3482 = vpow.pop %v3481
  %v3483 = vmul.f32 %v3477, 1.442695
  %v3484 = vpow.pop %v3483
  %v3485 = vmul.f32 %v3478, 1.442695
  %v3486 = vpow.pop %v3485
  %v3487 = vsel %vm85, %v3480, 0.0
  %3488 = vadd.xlane.f32.xlu0 %v3487
  %v3489 = vpop.xlane.xlu0 %3488
  %v3490 = vsel %vm85, %v3482, 0.0
  %3491 = vadd.xlane.f32.xlu0 %v3490
  %v3492 = vpop.xlane.xlu0 %3491
  %v3493 = vsel %vm85, %v3484, 0.0
  %3494 = vadd.xlane.f32.xlu0 %v3493
  %v3495 = vpop.xlane.xlu0 %3494
  %v3496 = vsel %vm85, %v3486, 0.0
  %3497 = vadd.xlane.f32.xlu0 %v3496
  %v3498 = vpop.xlane.xlu0 %3497
  %v3499 = vrcp.pop %v3489
  %v3500 = vmul.f32 %v3480, %v3499
  %v3501 = vrcp.pop %v3492
  %v3502 = vmul.f32 %v3482, %v3501
  %v3503 = vrcp.pop %v3495
  %v3504 = vmul.f32 %v3484, %v3503
  %v3505 = vrcp.pop %v3498
  %v3506 = vmul.f32 %v3486, %v3505
  %3511 = vrot.lane.b32.xlu0 %v3500, 80
  %v3512 = vpop.permute.xlu0 %3511
  %3513 = vrot.lane.b32.xlu0 %v3502, 80
  %v3514 = vpop.permute.xlu0 %3513
  %3515 = vrot.lane.b32.xlu0 %v3504, 80
  %v3516 = vpop.permute.xlu0 %3515
  %3517 = vrot.lane.b32.xlu0 %v3506, 80
  %v3518 = vpop.permute.xlu0 %3517
  %vm3523 = vcmask 786048
  %3524 = vst.msk [vmem:[%s25] sm:$0xff] %vm3523, %v3512
  %3525 = vst.msk [vmem:[%s25 + $0x8] sm:$0xff] %vm3523, %v3514
  %3526 = vst.msk [vmem:[%s25 + $0x10] sm:$0xff] %vm3523, %v3516
  %3527 = vst.msk [vmem:[%s25 + $0x18] sm:$0xff] %vm3523, %v3518
  %3528 = vrot.lane.b32.xlu0 %v2834, 56
  %v3529 = vpop.permute.xlu0 %3528
  %3530 = vrot.lane.b32.xlu0 %v2839, 56
  %v3531 = vpop.permute.xlu0 %3530
  %v3534 = vsel %vm85, %v3500, 0
  %v3536 = vsel %vm85, %v3502, 0
  %3538 = vmatprep.subr.mxu0 0.0
  %3539 = vmatpush1.msra.mxu0 %v3529
  %3540 = vmatprep.subr.mxu0 0.0
  %3541 = vmatpush1.msra.mxu0 %v3531
  %3542 = vmatprep.subr.mxu0 0.0
  %3543 = vmatpush1.msra.mxu0 0.0
  %3544 = vmatprep.subr.mxu0 0.0
  %3545 = vmatpush1.msra.mxu0 0.0
  %3546 = vmatprep.subr.mxu0 0.0
  %3547 = vmatpush1.msra.mxu0 0.0
  %3548 = vmatprep.subr.mxu0 0.0
  %3549 = vmatpush1.msra.mxu0 0.0
  %3550 = vmatprep.subr.mxu0 0.0
  %3551 = vmatpush1.msra.mxu0 0.0
  %3552 = vmatprep.subr.mxu0 0.0
  %3553 = vmatpush1.msra.mxu0 0.0
  %3554 = vmatprep.subr.mxu0 0.0
  %3555 = vmatpush1.msra.mxu0 0.0
  %3556 = vmatprep.subr.mxu0 0.0
  %3557 = vmatpush1.msra.mxu0 0.0
  %3558 = vmatprep.subr.mxu0 0.0
  %3559 = vmatpush1.msra.mxu0 0.0
  %3560 = vmatprep.subr.mxu0 0.0
  %3561 = vmatpush1.msra.mxu0 0.0
  %3562 = vmatprep.subr.mxu0 0.0
  %3563 = vmatpush1.msra.mxu0 0.0
  %3564 = vmatprep.subr.mxu0 0.0
  %3565 = vmatpush1.msra.mxu0 0.0
  %3566 = vmatprep.subr.mxu0 0.0
  %3567 = vmatpush1.msra.mxu0 0.0
  %3568 = vmatprep.subr.mxu0 0.0
  %3569 = vmatpush1.msra.mxu0 0.0
  %3570 = vmatprep.subr.mxu0 0.0
  %3571 = vmatpush1.msra.mxu0 0.0
  %3572 = vmatprep.subr.mxu0 0.0
  %3573 = vmatpush1.msra.mxu0 0.0
  %3574 = vmatprep.subr.mxu0 0.0
  %3575 = vmatpush1.msra.mxu0 0.0
  %3576 = vmatprep.subr.mxu0 0.0
  %3577 = vmatpush1.msra.mxu0 0.0
  %3578 = vmatprep.subr.mxu0 0.0
  %3579 = vmatpush1.msra.mxu0 0.0
  %3580 = vmatprep.subr.mxu0 0.0
  %3581 = vmatpush1.msra.mxu0 0.0
  %3582 = vmatprep.subr.mxu0 0.0
  %3583 = vmatpush1.msra.mxu0 0.0
  %3584 = vmatprep.subr.mxu0 0.0
  %3585 = vmatpush1.msra.mxu0 0.0
  %3586 = vmatprep.subr.mxu0 0.0
  %3587 = vmatpush1.msra.mxu0 0.0
  %3588 = vmatprep.subr.mxu0 0.0
  %3589 = vmatpush1.msra.mxu0 0.0
  %3590 = vmatprep.subr.mxu0 0.0
  %3591 = vmatpush1.msra.mxu0 0.0
  %3592 = vmatprep.subr.mxu0 0.0
  %3593 = vmatpush1.msra.mxu0 0.0
  %3594 = vmatprep.subr.mxu0 0.0
  %3595 = vmatpush1.msra.mxu0 0.0
  %3596 = vmatprep.subr.mxu0 0.0
  %3597 = vmatpush1.msra.mxu0 0.0
  %3598 = vmatprep.subr.mxu0 0.0
  %3599 = vmatpush1.msra.mxu0 0.0
  %3600 = vmatprep.subr.mxu0 0.0
  %3601 = vmatpush1.msra.mxu0 0.0
  %3602 = vmatprep.mubr.f32.mxu0 0.0
  %3603 = vmatmul.mubr.f32.gmra.mrb[0].mxu0 %v3534
  %v3604 = vpop.f32.mrb[0].mxu0
  %v3605 = vadd.f32 0.0, %v3604
  %v3606 = vpop.f32.mrb[0].mxu0
  %3607 = vmatprep.mubr.f32.mxu0 0.0
  %3608 = vmatmul.mubr.f32.gmra.mrb[0].mxu0 %v3536
  %v3609 = vpop.f32.mrb[0].mxu0
  %v3610 = vadd.f32 0.0, %v3609
  %v3611 = vpop.f32.mrb[0].mxu0
  %3612 = vdwg.mxu0
  %3613 = vrot.lane.b32.xlu0 %v2844, 56
  %v3614 = vpop.permute.xlu0 %3613
  %3615 = vrot.lane.b32.xlu0 %v2849, 56
  %v3616 = vpop.permute.xlu0 %3615
  %v3619 = vsel %vm85, %v3504, 0
  %v3621 = vsel %vm85, %v3506, 0
  %3623 = vmatprep.subr.mxu0 0.0
  %3624 = vmatpush1.msra.mxu0 %v3614
  %3625 = vmatprep.subr.mxu0 0.0
  %3626 = vmatpush1.msra.mxu0 %v3616
  %3627 = vmatprep.subr.mxu0 0.0
  %3628 = vmatpush1.msra.mxu0 0.0
  %3629 = vmatprep.subr.mxu0 0.0
  %3630 = vmatpush1.msra.mxu0 0.0
  %3631 = vmatprep.subr.mxu0 0.0
  %3632 = vmatpush1.msra.mxu0 0.0
  %3633 = vmatprep.subr.mxu0 0.0
  %3634 = vmatpush1.msra.mxu0 0.0
  %3635 = vmatprep.subr.mxu0 0.0
  %3636 = vmatpush1.msra.mxu0 0.0
  %3637 = vmatprep.subr.mxu0 0.0
  %3638 = vmatpush1.msra.mxu0 0.0
  %3639 = vmatprep.subr.mxu0 0.0
  %3640 = vmatpush1.msra.mxu0 0.0
  %3641 = vmatprep.subr.mxu0 0.0
  %3642 = vmatpush1.msra.mxu0 0.0
  %3643 = vmatprep.subr.mxu0 0.0
  %3644 = vmatpush1.msra.mxu0 0.0
  %3645 = vmatprep.subr.mxu0 0.0
  %3646 = vmatpush1.msra.mxu0 0.0
  %3647 = vmatprep.subr.mxu0 0.0
  %3648 = vmatpush1.msra.mxu0 0.0
  %3649 = vmatprep.subr.mxu0 0.0
  %3650 = vmatpush1.msra.mxu0 0.0
  %3651 = vmatprep.subr.mxu0 0.0
  %3652 = vmatpush1.msra.mxu0 0.0
  %3653 = vmatprep.subr.mxu0 0.0
  %3654 = vmatpush1.msra.mxu0 0.0
  %3655 = vmatprep.subr.mxu0 0.0
  %3656 = vmatpush1.msra.mxu0 0.0
  %3657 = vmatprep.subr.mxu0 0.0
  %3658 = vmatpush1.msra.mxu0 0.0
  %3659 = vmatprep.subr.mxu0 0.0
  %3660 = vmatpush1.msra.mxu0 0.0
  %3661 = vmatprep.subr.mxu0 0.0
  %3662 = vmatpush1.msra.mxu0 0.0
  %3663 = vmatprep.subr.mxu0 0.0
  %3664 = vmatpush1.msra.mxu0 0.0
  %3665 = vmatprep.subr.mxu0 0.0
  %3666 = vmatpush1.msra.mxu0 0.0
  %3667 = vmatprep.subr.mxu0 0.0
  %3668 = vmatpush1.msra.mxu0 0.0
  %3669 = vmatprep.subr.mxu0 0.0
  %3670 = vmatpush1.msra.mxu0 0.0
  %3671 = vmatprep.subr.mxu0 0.0
  %3672 = vmatpush1.msra.mxu0 0.0
  %3673 = vmatprep.subr.mxu0 0.0
  %3674 = vmatpush1.msra.mxu0 0.0
  %3675 = vmatprep.subr.mxu0 0.0
  %3676 = vmatpush1.msra.mxu0 0.0
  %3677 = vmatprep.subr.mxu0 0.0
  %3678 = vmatpush1.msra.mxu0 0.0
  %3679 = vmatprep.subr.mxu0 0.0
  %3680 = vmatpush1.msra.mxu0 0.0
  %3681 = vmatprep.subr.mxu0 0.0
  %3682 = vmatpush1.msra.mxu0 0.0
  %3683 = vmatprep.subr.mxu0 0.0
  %3684 = vmatpush1.msra.mxu0 0.0
  %3685 = vmatprep.subr.mxu0 0.0
  %3686 = vmatpush1.msra.mxu0 0.0
  %3687 = vmatprep.mubr.f32.mxu0 0.0
  %3688 = vmatmul.mubr.f32.gmra.mrb[0].mxu0 %v3619
  %v3689 = vpop.f32.mrb[0].mxu0
  %v3690 = vadd.f32 0.0, %v3689
  %v3691 = vpop.f32.mrb[0].mxu0
  %3692 = vmatprep.mubr.f32.mxu0 0.0
  %3693 = vmatmul.mubr.f32.gmra.mrb[0].mxu0 %v3621
  %v3694 = vpop.f32.mrb[0].mxu0
  %v3695 = vadd.f32 0.0, %v3694
  %v3696 = vpop.f32.mrb[0].mxu0
  %3697 = vdwg.mxu0
  %3698 = vrot.lane.b32.xlu0 %v2834, 112
  %v3699 = vpop.permute.xlu0 %3698
  %3700 = vrot.lane.b32.xlu0 %v2839, 112
  %v3701 = vpop.permute.xlu0 %3700
  %3702 = vrot.lane.b32.xlu0 %v2834, 80
  %v3703 = vpop.permute.xlu0 %3702
  %3704 = vrot.lane.b32.xlu0 %v2839, 80
  %v3705 = vpop.permute.xlu0 %3704
  %v3706 = vsel %vm465, %v3699, 0
  %v3708 = vsel %vm465, %v3701, 0
  %v3710 = vsel %vm465, %v3703, 0
  %v3712 = vsel %vm465, %v3705, 0
  %3714 = vmatprep.subr.mxu0 0.0
  %3715 = vmatpush1.xpose.msra.mxu0 %v3710
  %3716 = vmatprep.subr.mxu0 0.0
  %3717 = vmatpush1.xpose.msra.mxu0 %v3712
  %3718 = vmatprep.subr.mxu0 0.0
  %3719 = vmatpush1.xpose.msra.mxu0 0.0
  %3720 = vmatprep.subr.mxu0 0.0
  %3721 = vmatpush1.xpose.msra.mxu0 0.0
  %3722 = vmatprep.subr.mxu0 0.0
  %3723 = vmatpush1.xpose.msra.mxu0 0.0
  %3724 = vmatprep.subr.mxu0 0.0
  %3725 = vmatpush1.xpose.msra.mxu0 0.0
  %3726 = vmatprep.subr.mxu0 0.0
  %3727 = vmatpush1.xpose.msra.mxu0 0.0
  %3728 = vmatprep.subr.mxu0 0.0
  %3729 = vmatpush1.xpose.msra.mxu0 0.0
  %3730 = vmatprep.subr.mxu0 0.0
  %3731 = vmatpush1.xpose.msra.mxu0 0.0
  %3732 = vmatprep.subr.mxu0 0.0
  %3733 = vmatpush1.xpose.msra.mxu0 0.0
  %3734 = vmatprep.subr.mxu0 0.0
  %3735 = vmatpush1.xpose.msra.mxu0 0.0
  %3736 = vmatprep.subr.mxu0 0.0
  %3737 = vmatpush1.xpose.msra.mxu0 0.0
  %3738 = vmatprep.subr.mxu0 0.0
  %3739 = vmatpush1.xpose.msra.mxu0 0.0
  %3740 = vmatprep.subr.mxu0 0.0
  %3741 = vmatpush1.xpose.msra.mxu0 0.0
  %3742 = vmatprep.subr.mxu0 0.0
  %3743 = vmatpush1.xpose.msra.mxu0 0.0
  %3744 = vmatprep.subr.mxu0 0.0
  %3745 = vmatpush1.xpose.msra.mxu0 0.0
  %3746 = vmatprep.subr.mxu0 0.0
  %3747 = vmatpush1.xpose.msra.mxu0 0.0
  %3748 = vmatprep.subr.mxu0 0.0
  %3749 = vmatpush1.xpose.msra.mxu0 0.0
  %3750 = vmatprep.subr.mxu0 0.0
  %3751 = vmatpush1.xpose.msra.mxu0 0.0
  %3752 = vmatprep.subr.mxu0 0.0
  %3753 = vmatpush1.xpose.msra.mxu0 0.0
  %3754 = vmatprep.subr.mxu0 0.0
  %3755 = vmatpush1.xpose.msra.mxu0 0.0
  %3756 = vmatprep.subr.mxu0 0.0
  %3757 = vmatpush1.xpose.msra.mxu0 0.0
  %3758 = vmatprep.subr.mxu0 0.0
  %3759 = vmatpush1.xpose.msra.mxu0 0.0
  %3760 = vmatprep.subr.mxu0 0.0
  %3761 = vmatpush1.xpose.msra.mxu0 0.0
  %3762 = vmatprep.subr.mxu0 0.0
  %3763 = vmatpush1.xpose.msra.mxu0 0.0
  %3764 = vmatprep.subr.mxu0 0.0
  %3765 = vmatpush1.xpose.msra.mxu0 0.0
  %3766 = vmatprep.subr.mxu0 0.0
  %3767 = vmatpush1.xpose.msra.mxu0 0.0
  %3768 = vmatprep.subr.mxu0 0.0
  %3769 = vmatpush1.xpose.msra.mxu0 0.0
  %3770 = vmatprep.subr.mxu0 0.0
  %3771 = vmatpush1.xpose.msra.mxu0 0.0
  %3772 = vmatprep.subr.mxu0 0.0
  %3773 = vmatpush1.xpose.msra.mxu0 0.0
  %3774 = vmatprep.subr.mxu0 0.0
  %3775 = vmatpush1.xpose.msra.mxu0 0.0
  %3776 = vmatprep.subr.mxu0 0.0
  %3777 = vmatpush1.xpose.msra.mxu0 0.0
  %3778 = vmatprep.mubr.f32.mxu0 0.0
  %3779 = vmatmul.mubr.f32.gmra.mrb[0].mxu0 %v3706
  %v3780 = vpop.f32.mrb[0].mxu0
  %v3781 = vadd.f32 0.0, %v3780
  %v3782 = vpop.f32.mrb[0].mxu0
  %3783 = vmatprep.mubr.f32.mxu0 0.0
  %3784 = vmatmul.mubr.f32.gmra.mrb[0].mxu0 %v3708
  %v3785 = vpop.f32.mrb[0].mxu0
  %v3786 = vadd.f32 0.0, %v3785
  %v3787 = vpop.f32.mrb[0].mxu0
  %3788 = vdwg.mxu0
  %3789 = vrot.lane.b32.xlu0 %v2844, 112
  %v3790 = vpop.permute.xlu0 %3789
  %3791 = vrot.lane.b32.xlu0 %v2849, 112
  %v3792 = vpop.permute.xlu0 %3791
  %3793 = vrot.lane.b32.xlu0 %v2844, 80
  %v3794 = vpop.permute.xlu0 %3793
  %3795 = vrot.lane.b32.xlu0 %v2849, 80
  %v3796 = vpop.permute.xlu0 %3795
  %v3797 = vsel %vm465, %v3790, 0
  %v3799 = vsel %vm465, %v3792, 0
  %v3801 = vsel %vm465, %v3794, 0
  %v3803 = vsel %vm465, %v3796, 0
  %3805 = vmatprep.subr.mxu0 0.0
  %3806 = vmatpush1.xpose.msra.mxu0 %v3801
  %3807 = vmatprep.subr.mxu0 0.0
  %3808 = vmatpush1.xpose.msra.mxu0 %v3803
  %3809 = vmatprep.subr.mxu0 0.0
  %3810 = vmatpush1.xpose.msra.mxu0 0.0
  %3811 = vmatprep.subr.mxu0 0.0
  %3812 = vmatpush1.xpose.msra.mxu0 0.0
  %3813 = vmatprep.subr.mxu0 0.0
  %3814 = vmatpush1.xpose.msra.mxu0 0.0
  %3815 = vmatprep.subr.mxu0 0.0
  %3816 = vmatpush1.xpose.msra.mxu0 0.0
  %3817 = vmatprep.subr.mxu0 0.0
  %3818 = vmatpush1.xpose.msra.mxu0 0.0
  %3819 = vmatprep.subr.mxu0 0.0
  %3820 = vmatpush1.xpose.msra.mxu0 0.0
  %3821 = vmatprep.subr.mxu0 0.0
  %3822 = vmatpush1.xpose.msra.mxu0 0.0
  %3823 = vmatprep.subr.mxu0 0.0
  %3824 = vmatpush1.xpose.msra.mxu0 0.0
  %3825 = vmatprep.subr.mxu0 0.0
  %3826 = vmatpush1.xpose.msra.mxu0 0.0
  %3827 = vmatprep.subr.mxu0 0.0
  %3828 = vmatpush1.xpose.msra.mxu0 0.0
  %3829 = vmatprep.subr.mxu0 0.0
  %3830 = vmatpush1.xpose.msra.mxu0 0.0
  %3831 = vmatprep.subr.mxu0 0.0
  %3832 = vmatpush1.xpose.msra.mxu0 0.0
  %3833 = vmatprep.subr.mxu0 0.0
  %3834 = vmatpush1.xpose.msra.mxu0 0.0
  %3835 = vmatprep.subr.mxu0 0.0
  %3836 = vmatpush1.xpose.msra.mxu0 0.0
  %3837 = vmatprep.subr.mxu0 0.0
  %3838 = vmatpush1.xpose.msra.mxu0 0.0
  %3839 = vmatprep.subr.mxu0 0.0
  %3840 = vmatpush1.xpose.msra.mxu0 0.0
  %3841 = vmatprep.subr.mxu0 0.0
  %3842 = vmatpush1.xpose.msra.mxu0 0.0
  %3843 = vmatprep.subr.mxu0 0.0
  %3844 = vmatpush1.xpose.msra.mxu0 0.0
  %3845 = vmatprep.subr.mxu0 0.0
  %3846 = vmatpush1.xpose.msra.mxu0 0.0
  %3847 = vmatprep.subr.mxu0 0.0
  %3848 = vmatpush1.xpose.msra.mxu0 0.0
  %3849 = vmatprep.subr.mxu0 0.0
  %3850 = vmatpush1.xpose.msra.mxu0 0.0
  %3851 = vmatprep.subr.mxu0 0.0
  %3852 = vmatpush1.xpose.msra.mxu0 0.0
  %3853 = vmatprep.subr.mxu0 0.0
  %3854 = vmatpush1.xpose.msra.mxu0 0.0
  %3855 = vmatprep.subr.mxu0 0.0
  %3856 = vmatpush1.xpose.msra.mxu0 0.0
  %3857 = vmatprep.subr.mxu0 0.0
  %3858 = vmatpush1.xpose.msra.mxu0 0.0
  %3859 = vmatprep.subr.mxu0 0.0
  %3860 = vmatpush1.xpose.msra.mxu0 0.0
  %3861 = vmatprep.subr.mxu0 0.0
  %3862 = vmatpush1.xpose.msra.mxu0 0.0
  %3863 = vmatprep.subr.mxu0 0.0
  %3864 = vmatpush1.xpose.msra.mxu0 0.0
  %3865 = vmatprep.subr.mxu0 0.0
  %3866 = vmatpush1.xpose.msra.mxu0 0.0
  %3867 = vmatprep.subr.mxu0 0.0
  %3868 = vmatpush1.xpose.msra.mxu0 0.0
  %3869 = vmatprep.mubr.f32.mxu0 0.0
  %3870 = vmatmul.mubr.f32.gmra.mrb[0].mxu0 %v3797
  %v3871 = vpop.f32.mrb[0].mxu0
  %v3872 = vadd.f32 0.0, %v3871
  %v3873 = vpop.f32.mrb[0].mxu0
  %3874 = vmatprep.mubr.f32.mxu0 0.0
  %3875 = vmatmul.mubr.f32.gmra.mrb[0].mxu0 %v3799
  %v3876 = vpop.f32.mrb[0].mxu0
  %v3877 = vadd.f32 0.0, %v3876
  %v3878 = vpop.f32.mrb[0].mxu0
  %3879 = vdwg.mxu0
  %v3880 = vmul.f32 %v3781, 0.35355338
  %v3881 = vmul.f32 %v3786, 0.35355338
  %v3882 = vmul.f32 %v3872, 0.35355338
  %v3883 = vmul.f32 %v3877, 0.35355338
  %v3884 = vadd.f32 %v3880, %v347
  %v3885 = vadd.f32 %v3881, %v348
  %v3886 = vadd.f32 %v3882, %v349
  %v3887 = vadd.f32 %v3883, %v350
  %v3888 = vsel %vm85, %v3884, -inf
  %3889 = vmax.xlane.f32.xlu0 %v3888
  %v3890 = vpop.xlane.xlu0 %3889
  %v3891 = vsel %vm85, %v3885, -inf
  %3892 = vmax.xlane.f32.xlu0 %v3891
  %v3893 = vpop.xlane.xlu0 %3892
  %v3894 = vsel %vm85, %v3886, -inf
  %3895 = vmax.xlane.f32.xlu0 %v3894
  %v3896 = vpop.xlane.xlu0 %3895
  %v3897 = vsel %vm85, %v3887, -inf
  %3898 = vmax.xlane.f32.xlu0 %v3897
  %v3899 = vpop.xlane.xlu0 %3898
  %v3900 = vsub.f32 %v3884, %v3890
  %v3901 = vsub.f32 %v3885, %v3893
  %v3902 = vsub.f32 %v3886, %v3896
  %v3903 = vsub.f32 %v3887, %v3899
  %v3904 = vmul.f32 %v3900, 1.442695
  %v3905 = vpow.pop %v3904
  %v3906 = vmul.f32 %v3901, 1.442695
  %v3907 = vpow.pop %v3906
  %v3908 = vmul.f32 %v3902, 1.442695
  %v3909 = vpow.pop %v3908
  %v3910 = vmul.f32 %v3903, 1.442695
  %v3911 = vpow.pop %v3910
  %v3912 = vsel %vm85, %v3905, 0.0
  %3913 = vadd.xlane.f32.xlu0 %v3912
  %v3914 = vpop.xlane.xlu0 %3913
  %v3915 = vsel %vm85, %v3907, 0.0
  %3916 = vadd.xlane.f32.xlu0 %v3915
  %v3917 = vpop.xlane.xlu0 %3916
  %v3918 = vsel %vm85, %v3909, 0.0
  %3919 = vadd.xlane.f32.xlu0 %v3918
  %v3920 = vpop.xlane.xlu0 %3919
  %v3921 = vsel %vm85, %v3911, 0.0
  %3922 = vadd.xlane.f32.xlu0 %v3921
  %v3923 = vpop.xlane.xlu0 %3922
  %v3924 = vrcp.pop %v3914
  %v3925 = vmul.f32 %v3905, %v3924
  %v3926 = vrcp.pop %v3917
  %v3927 = vmul.f32 %v3907, %v3926
  %v3928 = vrcp.pop %v3920
  %v3929 = vmul.f32 %v3909, %v3928
  %v3930 = vrcp.pop %v3923
  %v3931 = vmul.f32 %v3911, %v3930
  %3936 = vrot.lane.b32.xlu0 %v3925, 96
  %v3937 = vpop.permute.xlu0 %3936
  %3938 = vrot.lane.b32.xlu0 %v3927, 96
  %v3939 = vpop.permute.xlu0 %3938
  %3940 = vrot.lane.b32.xlu0 %v3929, 96
  %v3941 = vpop.permute.xlu0 %3940
  %3942 = vrot.lane.b32.xlu0 %v3931, 96
  %v3943 = vpop.permute.xlu0 %3942
  %vm3948 = vcmask 917248
  %3949 = vst.msk [vmem:[%s25] sm:$0xff] %vm3948, %v3937
  %3950 = vst.msk [vmem:[%s25 + $0x8] sm:$0xff] %vm3948, %v3939
  %3951 = vst.msk [vmem:[%s25 + $0x10] sm:$0xff] %vm3948, %v3941
  %3952 = vst.msk [vmem:[%s25 + $0x18] sm:$0xff] %vm3948, %v3943
  %3953 = vrot.lane.b32.xlu0 %v2834, 48
  %v3954 = vpop.permute.xlu0 %3953
  %3955 = vrot.lane.b32.xlu0 %v2839, 48
  %v3956 = vpop.permute.xlu0 %3955
  %v3959 = vsel %vm85, %v3925, 0
  %v3961 = vsel %vm85, %v3927, 0
  %3963 = vmatprep.subr.mxu0 0.0
  %3964 = vmatpush1.msra.mxu0 %v3954
  %3965 = vmatprep.subr.mxu0 0.0
  %3966 = vmatpush1.msra.mxu0 %v3956
  %3967 = vmatprep.subr.mxu0 0.0
  %3968 = vmatpush1.msra.mxu0 0.0
  %3969 = vmatprep.subr.mxu0 0.0
  %3970 = vmatpush1.msra.mxu0 0.0
  %3971 = vmatprep.subr.mxu0 0.0
  %3972 = vmatpush1.msra.mxu0 0.0
  %3973 = vmatprep.subr.mxu0 0.0
  %3974 = vmatpush1.msra.mxu0 0.0
  %3975 = vmatprep.subr.mxu0 0.0
  %3976 = vmatpush1.msra.mxu0 0.0
  %3977 = vmatprep.subr.mxu0 0.0
  %3978 = vmatpush1.msra.mxu0 0.0
  %3979 = vmatprep.subr.mxu0 0.0
  %3980 = vmatpush1.msra.mxu0 0.0
  %3981 = vmatprep.subr.mxu0 0.0
  %3982 = vmatpush1.msra.mxu0 0.0
  %3983 = vmatprep.subr.mxu0 0.0
  %3984 = vmatpush1.msra.mxu0 0.0
  %3985 = vmatprep.subr.mxu0 0.0
  %3986 = vmatpush1.msra.mxu0 0.0
  %3987 = vmatprep.subr.mxu0 0.0
  %3988 = vmatpush1.msra.mxu0 0.0
  %3989 = vmatprep.subr.mxu0 0.0
  %3990 = vmatpush1.msra.mxu0 0.0
  %3991 = vmatprep.subr.mxu0 0.0
  %3992 = vmatpush1.msra.mxu0 0.0
  %3993 = vmatprep.subr.mxu0 0.0
  %3994 = vmatpush1.msra.mxu0 0.0
  %3995 = vmatprep.subr.mxu0 0.0
  %3996 = vmatpush1.msra.mxu0 0.0
  %3997 = vmatprep.subr.mxu0 0.0
  %3998 = vmatpush1.msra.mxu0 0.0
  %3999 = vmatprep.subr.mxu0 0.0
  %4000 = vmatpush1.msra.mxu0 0.0
  %4001 = vmatprep.subr.mxu0 0.0
  %4002 = vmatpush1.msra.mxu0 0.0
  %4003 = vmatprep.subr.mxu0 0.0
  %4004 = vmatpush1.msra.mxu0 0.0
  %4005 = vmatprep.subr.mxu0 0.0
  %4006 = vmatpush1.msra.mxu0 0.0
  %4007 = vmatprep.subr.mxu0 0.0
  %4008 = vmatpush1.msra.mxu0 0.0
  %4009 = vmatprep.subr.mxu0 0.0
  %4010 = vmatpush1.msra.mxu0 0.0
  %4011 = vmatprep.subr.mxu0 0.0
  %4012 = vmatpush1.msra.mxu0 0.0
  %4013 = vmatprep.subr.mxu0 0.0
  %4014 = vmatpush1.msra.mxu0 0.0
  %4015 = vmatprep.subr.mxu0 0.0
  %4016 = vmatpush1.msra.mxu0 0.0
  %4017 = vmatprep.subr.mxu0 0.0
  %4018 = vmatpush1.msra.mxu0 0.0
  %4019 = vmatprep.subr.mxu0 0.0
  %4020 = vmatpush1.msra.mxu0 0.0
  %4021 = vmatprep.subr.mxu0 0.0
  %4022 = vmatpush1.msra.mxu0 0.0
  %4023 = vmatprep.subr.mxu0 0.0
  %4024 = vmatpush1.msra.mxu0 0.0
  %4025 = vmatprep.subr.mxu0 0.0
  %4026 = vmatpush1.msra.mxu0 0.0
  %4027 = vmatprep.mubr.f32.mxu0 0.0
  %4028 = vmatmul.mubr.f32.gmra.mrb[0].mxu0 %v3959
  %v4029 = vpop.f32.mrb[0].mxu0
  %v4030 = vadd.f32 0.0, %v4029
  %v4031 = vpop.f32.mrb[0].mxu0
  %4032 = vmatprep.mubr.f32.mxu0 0.0
  %4033 = vmatmul.mubr.f32.gmra.mrb[0].mxu0 %v3961
  %v4034 = vpop.f32.mrb[0].mxu0
  %v4035 = vadd.f32 0.0, %v4034
  %v4036 = vpop.f32.mrb[0].mxu0
  %4037 = vdwg.mxu0
  %4038 = vrot.lane.b32.xlu0 %v2844, 48
  %v4039 = vpop.permute.xlu0 %4038
  %4040 = vrot.lane.b32.xlu0 %v2849, 48
  %v4041 = vpop.permute.xlu0 %4040
  %v4044 = vsel %vm85, %v3929, 0
  %v4046 = vsel %vm85, %v3931, 0
  %4048 = vmatprep.subr.mxu0 0.0
  %4049 = vmatpush1.msra.mxu0 %v4039
  %4050 = vmatprep.subr.mxu0 0.0
  %4051 = vmatpush1.msra.mxu0 %v4041
  %4052 = vmatprep.subr.mxu0 0.0
  %4053 = vmatpush1.msra.mxu0 0.0
  %4054 = vmatprep.subr.mxu0 0.0
  %4055 = vmatpush1.msra.mxu0 0.0
  %4056 = vmatprep.subr.mxu0 0.0
  %4057 = vmatpush1.msra.mxu0 0.0
  %4058 = vmatprep.subr.mxu0 0.0
  %4059 = vmatpush1.msra.mxu0 0.0
  %4060 = vmatprep.subr.mxu0 0.0
  %4061 = vmatpush1.msra.mxu0 0.0
  %4062 = vmatprep.subr.mxu0 0.0
  %4063 = vmatpush1.msra.mxu0 0.0
  %4064 = vmatprep.subr.mxu0 0.0
  %4065 = vmatpush1.msra.mxu0 0.0
  %4066 = vmatprep.subr.mxu0 0.0
  %4067 = vmatpush1.msra.mxu0 0.0
  %4068 = vmatprep.subr.mxu0 0.0
  %4069 = vmatpush1.msra.mxu0 0.0
  %4070 = vmatprep.subr.mxu0 0.0
  %4071 = vmatpush1.msra.mxu0 0.0
  %4072 = vmatprep.subr.mxu0 0.0
  %4073 = vmatpush1.msra.mxu0 0.0
  %4074 = vmatprep.subr.mxu0 0.0
  %4075 = vmatpush1.msra.mxu0 0.0
  %4076 = vmatprep.subr.mxu0 0.0
  %4077 = vmatpush1.msra.mxu0 0.0
  %4078 = vmatprep.subr.mxu0 0.0
  %4079 = vmatpush1.msra.mxu0 0.0
  %4080 = vmatprep.subr.mxu0 0.0
  %4081 = vmatpush1.msra.mxu0 0.0
  %4082 = vmatprep.subr.mxu0 0.0
  %4083 = vmatpush1.msra.mxu0 0.0
  %4084 = vmatprep.subr.mxu0 0.0
  %4085 = vmatpush1.msra.mxu0 0.0
  %4086 = vmatprep.subr.mxu0 0.0
  %4087 = vmatpush1.msra.mxu0 0.0
  %4088 = vmatprep.subr.mxu0 0.0
  %4089 = vmatpush1.msra.mxu0 0.0
  %4090 = vmatprep.subr.mxu0 0.0
  %4091 = vmatpush1.msra.mxu0 0.0
  %4092 = vmatprep.subr.mxu0 0.0
  %4093 = vmatpush1.msra.mxu0 0.0
  %4094 = vmatprep.subr.mxu0 0.0
  %4095 = vmatpush1.msra.mxu0 0.0
  %4096 = vmatprep.subr.mxu0 0.0
  %4097 = vmatpush1.msra.mxu0 0.0
  %4098 = vmatprep.subr.mxu0 0.0
  %4099 = vmatpush1.msra.mxu0 0.0
  %4100 = vmatprep.subr.mxu0 0.0
  %4101 = vmatpush1.msra.mxu0 0.0
  %4102 = vmatprep.subr.mxu0 0.0
  %4103 = vmatpush1.msra.mxu0 0.0
  %4104 = vmatprep.subr.mxu0 0.0
  %4105 = vmatpush1.msra.mxu0 0.0
  %4106 = vmatprep.subr.mxu0 0.0
  %4107 = vmatpush1.msra.mxu0 0.0
  %4108 = vmatprep.subr.mxu0 0.0
  %4109 = vmatpush1.msra.mxu0 0.0
  %4110 = vmatprep.subr.mxu0 0.0
  %4111 = vmatpush1.msra.mxu0 0.0
  %4112 = vmatprep.mubr.f32.mxu0 0.0
  %4113 = vmatmul.mubr.f32.gmra.mrb[0].mxu0 %v4044
  %v4114 = vpop.f32.mrb[0].mxu0
  %v4115 = vadd.f32 0.0, %v4114
  %v4116 = vpop.f32.mrb[0].mxu0
  %4117 = vmatprep.mubr.f32.mxu0 0.0
  %4118 = vmatmul.mubr.f32.gmra.mrb[0].mxu0 %v4046
  %v4119 = vpop.f32.mrb[0].mxu0
  %v4120 = vadd.f32 0.0, %v4119
  %v4121 = vpop.f32.mrb[0].mxu0
  %4122 = vdwg.mxu0
  %4123 = vrot.lane.b32.xlu0 %v2834, 104
  %v4124 = vpop.permute.xlu0 %4123
  %4125 = vrot.lane.b32.xlu0 %v2839, 104
  %v4126 = vpop.permute.xlu0 %4125
  %4127 = vrot.lane.b32.xlu0 %v2834, 72
  %v4128 = vpop.permute.xlu0 %4127
  %4129 = vrot.lane.b32.xlu0 %v2839, 72
  %v4130 = vpop.permute.xlu0 %4129
  %v4131 = vsel %vm465, %v4124, 0
  %v4133 = vsel %vm465, %v4126, 0
  %v4135 = vsel %vm465, %v4128, 0
  %v4137 = vsel %vm465, %v4130, 0
  %4139 = vmatprep.subr.mxu0 0.0
  %4140 = vmatpush1.xpose.msra.mxu0 %v4135
  %4141 = vmatprep.subr.mxu0 0.0
  %4142 = vmatpush1.xpose.msra.mxu0 %v4137
  %4143 = vmatprep.subr.mxu0 0.0
  %4144 = vmatpush1.xpose.msra.mxu0 0.0
  %4145 = vmatprep.subr.mxu0 0.0
  %4146 = vmatpush1.xpose.msra.mxu0 0.0
  %4147 = vmatprep.subr.mxu0 0.0
  %4148 = vmatpush1.xpose.msra.mxu0 0.0
  %4149 = vmatprep.subr.mxu0 0.0
  %4150 = vmatpush1.xpose.msra.mxu0 0.0
  %4151 = vmatprep.subr.mxu0 0.0
  %4152 = vmatpush1.xpose.msra.mxu0 0.0
  %4153 = vmatprep.subr.mxu0 0.0
  %4154 = vmatpush1.xpose.msra.mxu0 0.0
  %4155 = vmatprep.subr.mxu0 0.0
  %4156 = vmatpush1.xpose.msra.mxu0 0.0
  %4157 = vmatprep.subr.mxu0 0.0
  %4158 = vmatpush1.xpose.msra.mxu0 0.0
  %4159 = vmatprep.subr.mxu0 0.0
  %4160 = vmatpush1.xpose.msra.mxu0 0.0
  %4161 = vmatprep.subr.mxu0 0.0
  %4162 = vmatpush1.xpose.msra.mxu0 0.0
  %4163 = vmatprep.subr.mxu0 0.0
  %4164 = vmatpush1.xpose.msra.mxu0 0.0
  %4165 = vmatprep.subr.mxu0 0.0
  %4166 = vmatpush1.xpose.msra.mxu0 0.0
  %4167 = vmatprep.subr.mxu0 0.0
  %4168 = vmatpush1.xpose.msra.mxu0 0.0
  %4169 = vmatprep.subr.mxu0 0.0
  %4170 = vmatpush1.xpose.msra.mxu0 0.0
  %4171 = vmatprep.subr.mxu0 0.0
  %4172 = vmatpush1.xpose.msra.mxu0 0.0
  %4173 = vmatprep.subr.mxu0 0.0
  %4174 = vmatpush1.xpose.msra.mxu0 0.0
  %4175 = vmatprep.subr.mxu0 0.0
  %4176 = vmatpush1.xpose.msra.mxu0 0.0
  %4177 = vmatprep.subr.mxu0 0.0
  %4178 = vmatpush1.xpose.msra.mxu0 0.0
  %4179 = vmatprep.subr.mxu0 0.0
  %4180 = vmatpush1.xpose.msra.mxu0 0.0
  %4181 = vmatprep.subr.mxu0 0.0
  %4182 = vmatpush1.xpose.msra.mxu0 0.0
  %4183 = vmatprep.subr.mxu0 0.0
  %4184 = vmatpush1.xpose.msra.mxu0 0.0
  %4185 = vmatprep.subr.mxu0 0.0
  %4186 = vmatpush1.xpose.msra.mxu0 0.0
  %4187 = vmatprep.subr.mxu0 0.0
  %4188 = vmatpush1.xpose.msra.mxu0 0.0
  %4189 = vmatprep.subr.mxu0 0.0
  %4190 = vmatpush1.xpose.msra.mxu0 0.0
  %4191 = vmatprep.subr.mxu0 0.0
  %4192 = vmatpush1.xpose.msra.mxu0 0.0
  %4193 = vmatprep.subr.mxu0 0.0
  %4194 = vmatpush1.xpose.msra.mxu0 0.0
  %4195 = vmatprep.subr.mxu0 0.0
  %4196 = vmatpush1.xpose.msra.mxu0 0.0
  %4197 = vmatprep.subr.mxu0 0.0
  %4198 = vmatpush1.xpose.msra.mxu0 0.0
  %4199 = vmatprep.subr.mxu0 0.0
  %4200 = vmatpush1.xpose.msra.mxu0 0.0
  %4201 = vmatprep.subr.mxu0 0.0
  %4202 = vmatpush1.xpose.msra.mxu0 0.0
  %4203 = vmatprep.mubr.f32.mxu0 0.0
  %4204 = vmatmul.mubr.f32.gmra.mrb[0].mxu0 %v4131
  %v4205 = vpop.f32.mrb[0].mxu0
  %v4206 = vadd.f32 0.0, %v4205
  %v4207 = vpop.f32.mrb[0].mxu0
  %4208 = vmatprep.mubr.f32.mxu0 0.0
  %4209 = vmatmul.mubr.f32.gmra.mrb[0].mxu0 %v4133
  %v4210 = vpop.f32.mrb[0].mxu0
  %v4211 = vadd.f32 0.0, %v4210
  %v4212 = vpop.f32.mrb[0].mxu0
  %4213 = vdwg.mxu0
  %4214 = vrot.lane.b32.xlu0 %v2844, 104
  %v4215 = vpop.permute.xlu0 %4214
  %4216 = vrot.lane.b32.xlu0 %v2849, 104
  %v4217 = vpop.permute.xlu0 %4216
  %4218 = vrot.lane.b32.xlu0 %v2844, 72
  %v4219 = vpop.permute.xlu0 %4218
  %4220 = vrot.lane.b32.xlu0 %v2849, 72
  %v4221 = vpop.permute.xlu0 %4220
  %v4222 = vsel %vm465, %v4215, 0
  %v4224 = vsel %vm465, %v4217, 0
  %v4226 = vsel %vm465, %v4219, 0
  %v4228 = vsel %vm465, %v4221, 0
  %4230 = vmatprep.subr.mxu0 0.0
  %4231 = vmatpush1.xpose.msra.mxu0 %v4226
  %4232 = vmatprep.subr.mxu0 0.0
  %4233 = vmatpush1.xpose.msra.mxu0 %v4228
  %4234 = vmatprep.subr.mxu0 0.0
  %4235 = vmatpush1.xpose.msra.mxu0 0.0
  %4236 = vmatprep.subr.mxu0 0.0
  %4237 = vmatpush1.xpose.msra.mxu0 0.0
  %4238 = vmatprep.subr.mxu0 0.0
  %4239 = vmatpush1.xpose.msra.mxu0 0.0
  %4240 = vmatprep.subr.mxu0 0.0
  %4241 = vmatpush1.xpose.msra.mxu0 0.0
  %4242 = vmatprep.subr.mxu0 0.0
  %4243 = vmatpush1.xpose.msra.mxu0 0.0
  %4244 = vmatprep.subr.mxu0 0.0
  %4245 = vmatpush1.xpose.msra.mxu0 0.0
  %4246 = vmatprep.subr.mxu0 0.0
  %4247 = vmatpush1.xpose.msra.mxu0 0.0
  %4248 = vmatprep.subr.mxu0 0.0
  %4249 = vmatpush1.xpose.msra.mxu0 0.0
  %4250 = vmatprep.subr.mxu0 0.0
  %4251 = vmatpush1.xpose.msra.mxu0 0.0
  %4252 = vmatprep.subr.mxu0 0.0
  %4253 = vmatpush1.xpose.msra.mxu0 0.0
  %4254 = vmatprep.subr.mxu0 0.0
  %4255 = vmatpush1.xpose.msra.mxu0 0.0
  %4256 = vmatprep.subr.mxu0 0.0
  %4257 = vmatpush1.xpose.msra.mxu0 0.0
  %4258 = vmatprep.subr.mxu0 0.0
  %4259 = vmatpush1.xpose.msra.mxu0 0.0
  %4260 = vmatprep.subr.mxu0 0.0
  %4261 = vmatpush1.xpose.msra.mxu0 0.0
  %4262 = vmatprep.subr.mxu0 0.0
  %4263 = vmatpush1.xpose.msra.mxu0 0.0
  %4264 = vmatprep.subr.mxu0 0.0
  %4265 = vmatpush1.xpose.msra.mxu0 0.0
  %4266 = vmatprep.subr.mxu0 0.0
  %4267 = vmatpush1.xpose.msra.mxu0 0.0
  %4268 = vmatprep.subr.mxu0 0.0
  %4269 = vmatpush1.xpose.msra.mxu0 0.0
  %4270 = vmatprep.subr.mxu0 0.0
  %4271 = vmatpush1.xpose.msra.mxu0 0.0
  %4272 = vmatprep.subr.mxu0 0.0
  %4273 = vmatpush1.xpose.msra.mxu0 0.0
  %4274 = vmatprep.subr.mxu0 0.0
  %4275 = vmatpush1.xpose.msra.mxu0 0.0
  %4276 = vmatprep.subr.mxu0 0.0
  %4277 = vmatpush1.xpose.msra.mxu0 0.0
  %4278 = vmatprep.subr.mxu0 0.0
  %4279 = vmatpush1.xpose.msra.mxu0 0.0
  %4280 = vmatprep.subr.mxu0 0.0
  %4281 = vmatpush1.xpose.msra.mxu0 0.0
  %4282 = vmatprep.subr.mxu0 0.0
  %4283 = vmatpush1.xpose.msra.mxu0 0.0
  %4284 = vmatprep.subr.mxu0 0.0
  %4285 = vmatpush1.xpose.msra.mxu0 0.0
  %4286 = vmatprep.subr.mxu0 0.0
  %4287 = vmatpush1.xpose.msra.mxu0 0.0
  %4288 = vmatprep.subr.mxu0 0.0
  %4289 = vmatpush1.xpose.msra.mxu0 0.0
  %4290 = vmatprep.subr.mxu0 0.0
  %4291 = vmatpush1.xpose.msra.mxu0 0.0
  %4292 = vmatprep.subr.mxu0 0.0
  %4293 = vmatpush1.xpose.msra.mxu0 0.0
  %4294 = vmatprep.mubr.f32.mxu0 0.0
  %4295 = vmatmul.mubr.f32.gmra.mrb[0].mxu0 %v4222
  %v4296 = vpop.f32.mrb[0].mxu0
  %v4297 = vadd.f32 0.0, %v4296
  %v4298 = vpop.f32.mrb[0].mxu0
  %4299 = vmatprep.mubr.f32.mxu0 0.0
  %4300 = vmatmul.mubr.f32.gmra.mrb[0].mxu0 %v4224
  %v4301 = vpop.f32.mrb[0].mxu0
  %v4302 = vadd.f32 0.0, %v4301
  %v4303 = vpop.f32.mrb[0].mxu0
  %4304 = vdwg.mxu0
  %v4305 = vmul.f32 %v4206, 0.35355338
  %v4306 = vmul.f32 %v4211, 0.35355338
  %v4307 = vmul.f32 %v4297, 0.35355338
  %v4308 = vmul.f32 %v4302, 0.35355338
  %v4309 = vadd.f32 %v4305, %v347
  %v4310 = vadd.f32 %v4306, %v348
  %v4311 = vadd.f32 %v4307, %v349
  %v4312 = vadd.f32 %v4308, %v350
  %v4313 = vsel %vm85, %v4309, -inf
  %4314 = vmax.xlane.f32.xlu0 %v4313
  %v4315 = vpop.xlane.xlu0 %4314
  %v4316 = vsel %vm85, %v4310, -inf
  %4317 = vmax.xlane.f32.xlu0 %v4316
  %v4318 = vpop.xlane.xlu0 %4317
  %v4319 = vsel %vm85, %v4311, -inf
  %4320 = vmax.xlane.f32.xlu0 %v4319
  %v4321 = vpop.xlane.xlu0 %4320
  %v4322 = vsel %vm85, %v4312, -inf
  %4323 = vmax.xlane.f32.xlu0 %v4322
  %v4324 = vpop.xlane.xlu0 %4323
  %v4325 = vsub.f32 %v4309, %v4315
  %v4326 = vsub.f32 %v4310, %v4318
  %v4327 = vsub.f32 %v4311, %v4321
  %v4328 = vsub.f32 %v4312, %v4324
  %v4329 = vmul.f32 %v4325, 1.442695
  %v4330 = vpow.pop %v4329
  %v4331 = vmul.f32 %v4326, 1.442695
  %v4332 = vpow.pop %v4331
  %v4333 = vmul.f32 %v4327, 1.442695
  %v4334 = vpow.pop %v4333
  %v4335 = vmul.f32 %v4328, 1.442695
  %v4336 = vpow.pop %v4335
  %v4337 = vsel %vm85, %v4330, 0.0
  %4338 = vadd.xlane.f32.xlu0 %v4337
  %v4339 = vpop.xlane.xlu0 %4338
  %v4340 = vsel %vm85, %v4332, 0.0
  %4341 = vadd.xlane.f32.xlu0 %v4340
  %v4342 = vpop.xlane.xlu0 %4341
  %v4343 = vsel %vm85, %v4334, 0.0
  %4344 = vadd.xlane.f32.xlu0 %v4343
  %v4345 = vpop.xlane.xlu0 %4344
  %v4346 = vsel %vm85, %v4336, 0.0
  %4347 = vadd.xlane.f32.xlu0 %v4346
  %v4348 = vpop.xlane.xlu0 %4347
  %v4349 = vrcp.pop %v4339
  %v4350 = vmul.f32 %v4330, %v4349
  %v4351 = vrcp.pop %v4342
  %v4352 = vmul.f32 %v4332, %v4351
  %v4353 = vrcp.pop %v4345
  %v4354 = vmul.f32 %v4334, %v4353
  %v4355 = vrcp.pop %v4348
  %v4356 = vmul.f32 %v4336, %v4355
  %4361 = vrot.lane.b32.xlu0 %v4350, 112
  %v4362 = vpop.permute.xlu0 %4361
  %4363 = vrot.lane.b32.xlu0 %v4352, 112
  %v4364 = vpop.permute.xlu0 %4363
  %4365 = vrot.lane.b32.xlu0 %v4354, 112
  %v4366 = vpop.permute.xlu0 %4365
  %4367 = vrot.lane.b32.xlu0 %v4356, 112
  %v4368 = vpop.permute.xlu0 %4367
  %vm4373 = vcmask 1048448
  %4374 = vst.msk [vmem:[%s25] sm:$0xff] %vm4373, %v4362
  %4375 = vst.msk [vmem:[%s25 + $0x8] sm:$0xff] %vm4373, %v4364
  %4376 = vst.msk [vmem:[%s25 + $0x10] sm:$0xff] %vm4373, %v4366
  %4377 = vst.msk [vmem:[%s25 + $0x18] sm:$0xff] %vm4373, %v4368
  %4378 = vrot.lane.b32.xlu0 %v2834, 40
  %v4379 = vpop.permute.xlu0 %4378
  %4380 = vrot.lane.b32.xlu0 %v2839, 40
  %v4381 = vpop.permute.xlu0 %4380
  %v4384 = vsel %vm85, %v4350, 0
  %v4386 = vsel %vm85, %v4352, 0
  %4388 = vmatprep.subr.mxu0 0.0
  %4389 = vmatpush1.msra.mxu0 %v4379
  %4390 = vmatprep.subr.mxu0 0.0
  %4391 = vmatpush1.msra.mxu0 %v4381
  %4392 = vmatprep.subr.mxu0 0.0
  %4393 = vmatpush1.msra.mxu0 0.0
  %4394 = vmatprep.subr.mxu0 0.0
  %4395 = vmatpush1.msra.mxu0 0.0
  %4396 = vmatprep.subr.mxu0 0.0
  %4397 = vmatpush1.msra.mxu0 0.0
  %4398 = vmatprep.subr.mxu0 0.0
  %4399 = vmatpush1.msra.mxu0 0.0
  %4400 = vmatprep.subr.mxu0 0.0
  %4401 = vmatpush1.msra.mxu0 0.0
  %4402 = vmatprep.subr.mxu0 0.0
  %4403 = vmatpush1.msra.mxu0 0.0
  %4404 = vmatprep.subr.mxu0 0.0
  %4405 = vmatpush1.msra.mxu0 0.0
  %4406 = vmatprep.subr.mxu0 0.0
  %4407 = vmatpush1.msra.mxu0 0.0
  %4408 = vmatprep.subr.mxu0 0.0
  %4409 = vmatpush1.msra.mxu0 0.0
  %4410 = vmatprep.subr.mxu0 0.0
  %4411 = vmatpush1.msra.mxu0 0.0
  %4412 = vmatprep.subr.mxu0 0.0
  %4413 = vmatpush1.msra.mxu0 0.0
  %4414 = vmatprep.subr.mxu0 0.0
  %4415 = vmatpush1.msra.mxu0 0.0
  %4416 = vmatprep.subr.mxu0 0.0
  %4417 = vmatpush1.msra.mxu0 0.0
  %4418 = vmatprep.subr.mxu0 0.0
  %4419 = vmatpush1.msra.mxu0 0.0
  %4420 = vmatprep.subr.mxu0 0.0
  %4421 = vmatpush1.msra.mxu0 0.0
  %4422 = vmatprep.subr.mxu0 0.0
  %4423 = vmatpush1.msra.mxu0 0.0
  %4424 = vmatprep.subr.mxu0 0.0
  %4425 = vmatpush1.msra.mxu0 0.0
  %4426 = vmatprep.subr.mxu0 0.0
  %4427 = vmatpush1.msra.mxu0 0.0
  %4428 = vmatprep.subr.mxu0 0.0
  %4429 = vmatpush1.msra.mxu0 0.0
  %4430 = vmatprep.subr.mxu0 0.0
  %4431 = vmatpush1.msra.mxu0 0.0
  %4432 = vmatprep.subr.mxu0 0.0
  %4433 = vmatpush1.msra.mxu0 0.0
  %4434 = vmatprep.subr.mxu0 0.0
  %4435 = vmatpush1.msra.mxu0 0.0
  %4436 = vmatprep.subr.mxu0 0.0
  %4437 = vmatpush1.msra.mxu0 0.0
  %4438 = vmatprep.subr.mxu0 0.0
  %4439 = vmatpush1.msra.mxu0 0.0
  %4440 = vmatprep.subr.mxu0 0.0
  %4441 = vmatpush1.msra.mxu0 0.0
  %4442 = vmatprep.subr.mxu0 0.0
  %4443 = vmatpush1.msra.mxu0 0.0
  %4444 = vmatprep.subr.mxu0 0.0
  %4445 = vmatpush1.msra.mxu0 0.0
  %4446 = vmatprep.subr.mxu0 0.0
  %4447 = vmatpush1.msra.mxu0 0.0
  %4448 = vmatprep.subr.mxu0 0.0
  %4449 = vmatpush1.msra.mxu0 0.0
  %4450 = vmatprep.subr.mxu0 0.0
  %4451 = vmatpush1.msra.mxu0 0.0
  %4452 = vmatprep.mubr.f32.mxu0 0.0
  %4453 = vmatmul.mubr.f32.gmra.mrb[0].mxu0 %v4384
  %v4454 = vpop.f32.mrb[0].mxu0
  %v4455 = vadd.f32 0.0, %v4454
  %v4456 = vpop.f32.mrb[0].mxu0
  %4457 = vmatprep.mubr.f32.mxu0 0.0
  %4458 = vmatmul.mubr.f32.gmra.mrb[0].mxu0 %v4386
  %v4459 = vpop.f32.mrb[0].mxu0
  %v4460 = vadd.f32 0.0, %v4459
  %v4461 = vpop.f32.mrb[0].mxu0
  %4462 = vdwg.mxu0
  %4463 = vrot.lane.b32.xlu0 %v2844, 40
  %v4464 = vpop.permute.xlu0 %4463
  %4465 = vrot.lane.b32.xlu0 %v2849, 40
  %v4466 = vpop.permute.xlu0 %4465
  %v4469 = vsel %vm85, %v4354, 0
  %v4471 = vsel %vm85, %v4356, 0
  %4473 = vmatprep.subr.mxu0 0.0
  %4474 = vmatpush1.msra.mxu0 %v4464
  %4475 = vmatprep.subr.mxu0 0.0
  %4476 = vmatpush1.msra.mxu0 %v4466
  %4477 = vmatprep.subr.mxu0 0.0
  %4478 = vmatpush1.msra.mxu0 0.0
  %4479 = vmatprep.subr.mxu0 0.0
  %4480 = vmatpush1.msra.mxu0 0.0
  %4481 = vmatprep.subr.mxu0 0.0
  %4482 = vmatpush1.msra.mxu0 0.0
  %4483 = vmatprep.subr.mxu0 0.0
  %4484 = vmatpush1.msra.mxu0 0.0
  %4485 = vmatprep.subr.mxu0 0.0
  %4486 = vmatpush1.msra.mxu0 0.0
  %4487 = vmatprep.subr.mxu0 0.0
  %4488 = vmatpush1.msra.mxu0 0.0
  %4489 = vmatprep.subr.mxu0 0.0
  %4490 = vmatpush1.msra.mxu0 0.0
  %4491 = vmatprep.subr.mxu0 0.0
  %4492 = vmatpush1.msra.mxu0 0.0
  %4493 = vmatprep.subr.mxu0 0.0
  %4494 = vmatpush1.msra.mxu0 0.0
  %4495 = vmatprep.subr.mxu0 0.0
  %4496 = vmatpush1.msra.mxu0 0.0
  %4497 = vmatprep.subr.mxu0 0.0
  %4498 = vmatpush1.msra.mxu0 0.0
  %4499 = vmatprep.subr.mxu0 0.0
  %4500 = vmatpush1.msra.mxu0 0.0
  %4501 = vmatprep.subr.mxu0 0.0
  %4502 = vmatpush1.msra.mxu0 0.0
  %4503 = vmatprep.subr.mxu0 0.0
  %4504 = vmatpush1.msra.mxu0 0.0
  %4505 = vmatprep.subr.mxu0 0.0
  %4506 = vmatpush1.msra.mxu0 0.0
  %4507 = vmatprep.subr.mxu0 0.0
  %4508 = vmatpush1.msra.mxu0 0.0
  %4509 = vmatprep.subr.mxu0 0.0
  %4510 = vmatpush1.msra.mxu0 0.0
  %4511 = vmatprep.subr.mxu0 0.0
  %4512 = vmatpush1.msra.mxu0 0.0
  %4513 = vmatprep.subr.mxu0 0.0
  %4514 = vmatpush1.msra.mxu0 0.0
  %4515 = vmatprep.subr.mxu0 0.0
  %4516 = vmatpush1.msra.mxu0 0.0
  %4517 = vmatprep.subr.mxu0 0.0
  %4518 = vmatpush1.msra.mxu0 0.0
  %4519 = vmatprep.subr.mxu0 0.0
  %4520 = vmatpush1.msra.mxu0 0.0
  %4521 = vmatprep.subr.mxu0 0.0
  %4522 = vmatpush1.msra.mxu0 0.0
  %4523 = vmatprep.subr.mxu0 0.0
  %4524 = vmatpush1.msra.mxu0 0.0
  %4525 = vmatprep.subr.mxu0 0.0
  %4526 = vmatpush1.msra.mxu0 0.0
  %4527 = vmatprep.subr.mxu0 0.0
  %4528 = vmatpush1.msra.mxu0 0.0
  %4529 = vmatprep.subr.mxu0 0.0
  %4530 = vmatpush1.msra.mxu0 0.0
  %4531 = vmatprep.subr.mxu0 0.0
  %4532 = vmatpush1.msra.mxu0 0.0
  %4533 = vmatprep.subr.mxu0 0.0
  %4534 = vmatpush1.msra.mxu0 0.0
  %4535 = vmatprep.subr.mxu0 0.0
  %4536 = vmatpush1.msra.mxu0 0.0
  %4537 = vmatprep.mubr.f32.mxu0 0.0
  %4538 = vmatmul.mubr.f32.gmra.mrb[0].mxu0 %v4469
  %v4539 = vpop.f32.mrb[0].mxu0
  %v4540 = vadd.f32 0.0, %v4539
  %v4541 = vpop.f32.mrb[0].mxu0
  %4542 = vmatprep.mubr.f32.mxu0 0.0
  %4543 = vmatmul.mubr.f32.gmra.mrb[0].mxu0 %v4471
  %v4544 = vpop.f32.mrb[0].mxu0
  %v4545 = vadd.f32 0.0, %v4544
  %v4546 = vpop.f32.mrb[0].mxu0
  %4547 = vdwg.mxu0
  %4552 = vrot.lane.b32.xlu0 %v3605, 8
  %v4553 = vpop.permute.xlu0 %4552
  %4554 = vrot.lane.b32.xlu0 %v3610, 8
  %v4555 = vpop.permute.xlu0 %4554
  %4556 = vrot.lane.b32.xlu0 %v3690, 8
  %v4557 = vpop.permute.xlu0 %4556
  %4558 = vrot.lane.b32.xlu0 %v3695, 8
  %v4559 = vpop.permute.xlu0 %4558
  %4568 = vrot.lane.b32.xlu0 %v4030, 16
  %v4569 = vpop.permute.xlu0 %4568
  %4570 = vrot.lane.b32.xlu0 %v4035, 16
  %v4571 = vpop.permute.xlu0 %4570
  %4572 = vrot.lane.b32.xlu0 %v4115, 16
  %v4573 = vpop.permute.xlu0 %4572
  %4574 = vrot.lane.b32.xlu0 %v4120, 16
  %v4575 = vpop.permute.xlu0 %4574
  %4584 = vrot.lane.b32.xlu0 %v4455, 24
  %v4585 = vpop.permute.xlu0 %4584
  %4586 = vrot.lane.b32.xlu0 %v4460, 24
  %v4587 = vpop.permute.xlu0 %4586
  %4588 = vrot.lane.b32.xlu0 %v4540, 24
  %v4589 = vpop.permute.xlu0 %4588
  %4590 = vrot.lane.b32.xlu0 %v4545, 24
  %v4591 = vpop.permute.xlu0 %4590
  %v4596 = vsel %vm465, %v3180, %v4553
  %v4597 = vsel %vm465, %v3185, %v4555
  %v4598 = vsel %vm465, %v3265, %v4557
  %v4599 = vsel %vm465, %v3270, %v4559
  %v4600 = vsel %vm85, %v4596, %v4569
  %v4601 = vsel %vm85, %v4597, %v4571
  %v4602 = vsel %vm85, %v4598, %v4573
  %v4603 = vsel %vm85, %v4599, %v4575
  %v4604 = vsel %vm2199, %v4600, %v4585
  %v4605 = vsel %vm2199, %v4601, %v4587
  %v4606 = vsel %vm2199, %v4602, %v4589
  %v4607 = vsel %vm2199, %v4603, %v4591
  %s4608 = scalar_lea.vmem %s9, 32
  %v4609 = vld [vmem:[%s4608] sm:$0xff]
  %v4610 = vld [vmem:[%s4608 + $0x8] sm:$0xff]
  %v4611 = vld [vmem:[%s4608 + $0x10] sm:$0xff]
  %v4612 = vld [vmem:[%s4608 + $0x18] sm:$0xff]
  %s4613 = scalar_lea.vmem %s10, 1
  %v4614 = vld [vmem:[%s4613] sm:$0x1]
  %v4616 = vlaneseq
  %v4617 = vshrl.u32 %v4616, 7
  %v4618 = vsub.s32 0, %v4617
  %v4619 = vrot.slane %v4614, %v4618
  %v4622 = vsel %vm269, %v4604, 0
  %v4625 = vsel %vm269, %v4605, 0
  %v4628 = vsel %vm269, %v4606, 0
  %v4631 = vsel %vm269, %v4607, 0
  %4633 = vmatprep.subr.mxu0 0.0
  %4634 = vmatpush1.msra.mxu0 %v4609
  %4635 = vmatprep.subr.mxu0 0.0
  %4636 = vmatpush1.msra.mxu0 %v4610
  %4637 = vmatprep.subr.mxu0 0.0
  %4638 = vmatpush1.msra.mxu0 %v4611
  %4639 = vmatprep.subr.mxu0 0.0
  %4640 = vmatpush1.msra.mxu0 %v4612
  %4641 = vmatprep.subr.mxu0 0.0
  %4642 = vmatpush1.msra.mxu0 0.0
  %4643 = vmatprep.subr.mxu0 0.0
  %4644 = vmatpush1.msra.mxu0 0.0
  %4645 = vmatprep.subr.mxu0 0.0
  %4646 = vmatpush1.msra.mxu0 0.0
  %4647 = vmatprep.subr.mxu0 0.0
  %4648 = vmatpush1.msra.mxu0 0.0
  %4649 = vmatprep.subr.mxu0 0.0
  %4650 = vmatpush1.msra.mxu0 0.0
  %4651 = vmatprep.subr.mxu0 0.0
  %4652 = vmatpush1.msra.mxu0 0.0
  %4653 = vmatprep.subr.mxu0 0.0
  %4654 = vmatpush1.msra.mxu0 0.0
  %4655 = vmatprep.subr.mxu0 0.0
  %4656 = vmatpush1.msra.mxu0 0.0
  %4657 = vmatprep.subr.mxu0 0.0
  %4658 = vmatpush1.msra.mxu0 0.0
  %4659 = vmatprep.subr.mxu0 0.0
  %4660 = vmatpush1.msra.mxu0 0.0
  %4661 = vmatprep.subr.mxu0 0.0
  %4662 = vmatpush1.msra.mxu0 0.0
  %4663 = vmatprep.subr.mxu0 0.0
  %4664 = vmatpush1.msra.mxu0 0.0
  %4665 = vmatprep.subr.mxu0 0.0
  %4666 = vmatpush1.msra.mxu0 0.0
  %4667 = vmatprep.subr.mxu0 0.0
  %4668 = vmatpush1.msra.mxu0 0.0
  %4669 = vmatprep.subr.mxu0 0.0
  %4670 = vmatpush1.msra.mxu0 0.0
  %4671 = vmatprep.subr.mxu0 0.0
  %4672 = vmatpush1.msra.mxu0 0.0
  %4673 = vmatprep.subr.mxu0 0.0
  %4674 = vmatpush1.msra.mxu0 0.0
  %4675 = vmatprep.subr.mxu0 0.0
  %4676 = vmatpush1.msra.mxu0 0.0
  %4677 = vmatprep.subr.mxu0 0.0
  %4678 = vmatpush1.msra.mxu0 0.0
  %4679 = vmatprep.subr.mxu0 0.0
  %4680 = vmatpush1.msra.mxu0 0.0
  %4681 = vmatprep.subr.mxu0 0.0
  %4682 = vmatpush1.msra.mxu0 0.0
  %4683 = vmatprep.subr.mxu0 0.0
  %4684 = vmatpush1.msra.mxu0 0.0
  %4685 = vmatprep.subr.mxu0 0.0
  %4686 = vmatpush1.msra.mxu0 0.0
  %4687 = vmatprep.subr.mxu0 0.0
  %4688 = vmatpush1.msra.mxu0 0.0
  %4689 = vmatprep.subr.mxu0 0.0
  %4690 = vmatpush1.msra.mxu0 0.0
  %4691 = vmatprep.subr.mxu0 0.0
  %4692 = vmatpush1.msra.mxu0 0.0
  %4693 = vmatprep.subr.mxu0 0.0
  %4694 = vmatpush1.msra.mxu0 0.0
  %4695 = vmatprep.subr.mxu0 0.0
  %4696 = vmatpush1.msra.mxu0 0.0
  %4697 = vmatprep.mubr.f32.mxu0 0.0
  %4698 = vmatmul.mubr.f32.gmra.mrb[0].mxu0 %v4622
  %v4699 = vpop.f32.mrb[0].mxu0
  %v4700 = vadd.f32 %v4619, %v4699
  %v4701 = vpop.f32.mrb[0].mxu0
  %4702 = vmatprep.mubr.f32.mxu0 0.0
  %4703 = vmatmul.mubr.f32.gmra.mrb[0].mxu0 %v4625
  %v4704 = vpop.f32.mrb[0].mxu0
  %v4705 = vadd.f32 %v4619, %v4704
  %v4706 = vpop.f32.mrb[0].mxu0
  %4707 = vmatprep.mubr.f32.mxu0 0.0
  %4708 = vmatmul.mubr.f32.gmra.mrb[0].mxu0 %v4628
  %v4709 = vpop.f32.mrb[0].mxu0
  %v4710 = vadd.f32 %v4619, %v4709
  %v4711 = vpop.f32.mrb[0].mxu0
  %4712 = vmatprep.mubr.f32.mxu0 0.0
  %4713 = vmatmul.mubr.f32.gmra.mrb[0].mxu0 %v4631
  %v4714 = vpop.f32.mrb[0].mxu0
  %v4715 = vadd.f32 %v4619, %v4714
  %v4716 = vpop.f32.mrb[0].mxu0
  %4717 = vdwg.mxu0
  %v4718 = vadd.f32 %v4700, %v2721
  %v4719 = vadd.f32 %v4705, %v2722
  %v4720 = vadd.f32 %v4710, %v2723
  %v4721 = vadd.f32 %v4715, %v2724
  %s4722 = scalar_lea.vmem %s11, 1
  %v4723 = vld [vmem:[%s4722] sm:$0x1]
  %s4724 = scalar_lea.vmem %s12, 1
  %v4725 = vld [vmem:[%s4724] sm:$0x1]
  %v4726 = vsel %vm269, %v4718, 0.0
  %4727 = vadd.xlane.f32.xlu0 %v4726
  %v4728 = vpop.xlane.xlu0 %4727
  %v4729 = vsel %vm269, %v4719, 0.0
  %4730 = vadd.xlane.f32.xlu0 %v4729
  %v4731 = vpop.xlane.xlu0 %4730
  %v4732 = vsel %vm269, %v4720, 0.0
  %4733 = vadd.xlane.f32.xlu0 %v4732
  %v4734 = vpop.xlane.xlu0 %4733
  %v4735 = vsel %vm269, %v4721, 0.0
  %4736 = vadd.xlane.f32.xlu0 %v4735
  %v4737 = vpop.xlane.xlu0 %4736
  %v4738 = vmul.f32 %v4728, %v282
  %v4739 = vmul.f32 %v4731, %v282
  %v4740 = vmul.f32 %v4734, %v282
  %v4741 = vmul.f32 %v4737, %v282
  %v4742 = vsub.f32 %v4718, %v4738
  %v4743 = vsub.f32 %v4719, %v4739
  %v4744 = vsub.f32 %v4720, %v4740
  %v4745 = vsub.f32 %v4721, %v4741
  %v4746 = vmul.f32 %v4742, %v4742
  %v4747 = vmul.f32 %v4743, %v4743
  %v4748 = vmul.f32 %v4744, %v4744
  %v4749 = vmul.f32 %v4745, %v4745
  %v4750 = vsel %vm269, %v4746, 0.0
  %4751 = vadd.xlane.f32.xlu0 %v4750
  %v4752 = vpop.xlane.xlu0 %4751
  %v4753 = vsel %vm269, %v4747, 0.0
  %4754 = vadd.xlane.f32.xlu0 %v4753
  %v4755 = vpop.xlane.xlu0 %4754
  %v4756 = vsel %vm269, %v4748, 0.0
  %4757 = vadd.xlane.f32.xlu0 %v4756
  %v4758 = vpop.xlane.xlu0 %4757
  %v4759 = vsel %vm269, %v4749, 0.0
  %4760 = vadd.xlane.f32.xlu0 %v4759
  %v4761 = vpop.xlane.xlu0 %4760
  %v4762 = vmul.f32 %v4752, %v282
  %v4763 = vmul.f32 %v4755, %v282
  %v4764 = vmul.f32 %v4758, %v282
  %v4765 = vmul.f32 %v4761, %v282
  %v4766 = vadd.f32 %v4762, 1e-05
  %v4767 = vadd.f32 %v4763, 1e-05
  %v4768 = vadd.f32 %v4764, 1e-05
  %v4769 = vadd.f32 %v4765, 1e-05
  %v4770 = vrsqrt.pop %v4766
  %v4771 = vrsqrt.pop %v4767
  %v4772 = vrsqrt.pop %v4768
  %v4773 = vrsqrt.pop %v4769
  %v4774 = vmul.f32 %v4742, %v4770
  %v4775 = vmul.f32 %v4743, %v4771
  %v4776 = vmul.f32 %v4744, %v4772
  %v4777 = vmul.f32 %v4745, %v4773
  %v4779 = vlaneseq
  %v4780 = vshrl.u32 %v4779, 7
  %v4781 = vsub.s32 0, %v4780
  %v4782 = vrot.slane %v4723, %v4781
  %v4784 = vmul.f32 %v4774, %v4782
  %v4785 = vmul.f32 %v4775, %v4782
  %v4786 = vmul.f32 %v4776, %v4782
  %v4787 = vmul.f32 %v4777, %v4782
  %v4789 = vlaneseq
  %v4790 = vshrl.u32 %v4789, 7
  %v4791 = vsub.s32 0, %v4790
  %v4792 = vrot.slane %v4725, %v4791
  %v4794 = vadd.f32 %v4784, %v4792
  %v4795 = vadd.f32 %v4785, %v4792
  %v4796 = vadd.f32 %v4786, %v4792
  %v4797 = vadd.f32 %v4787, %v4792
  %s4798 = scalar_lea.vmem %s13, 32
  %v4799 = vld [vmem:[%s4798] sm:$0xff]
  %v4800 = vld [vmem:[%s4798 + $0x8] sm:$0xff]
  %v4801 = vld [vmem:[%s4798 + $0x10] sm:$0xff]
  %v4802 = vld [vmem:[%s4798 + $0x18] sm:$0xff]
  %s4803 = scalar_lea.vmem %s14, 1
  %v4804 = vld [vmem:[%s4803] sm:$0x1]
  %v4806 = vlaneseq
  %v4807 = vshrl.u32 %v4806, 7
  %v4808 = vsub.s32 0, %v4807
  %v4809 = vrot.slane %v4804, %v4808
  %v4812 = vsel %vm269, %v4794, 0
  %v4815 = vsel %vm269, %v4795, 0
  %v4818 = vsel %vm269, %v4796, 0
  %v4821 = vsel %vm269, %v4797, 0
  %4823 = vmatprep.subr.mxu0 0.0
  %4824 = vmatpush1.msra.mxu0 %v4799
  %4825 = vmatprep.subr.mxu0 0.0
  %4826 = vmatpush1.msra.mxu0 %v4800
  %4827 = vmatprep.subr.mxu0 0.0
  %4828 = vmatpush1.msra.mxu0 %v4801
  %4829 = vmatprep.subr.mxu0 0.0
  %4830 = vmatpush1.msra.mxu0 %v4802
  %4831 = vmatprep.subr.mxu0 0.0
  %4832 = vmatpush1.msra.mxu0 0.0
  %4833 = vmatprep.subr.mxu0 0.0
  %4834 = vmatpush1.msra.mxu0 0.0
  %4835 = vmatprep.subr.mxu0 0.0
  %4836 = vmatpush1.msra.mxu0 0.0
  %4837 = vmatprep.subr.mxu0 0.0
  %4838 = vmatpush1.msra.mxu0 0.0
  %4839 = vmatprep.subr.mxu0 0.0
  %4840 = vmatpush1.msra.mxu0 0.0
  %4841 = vmatprep.subr.mxu0 0.0
  %4842 = vmatpush1.msra.mxu0 0.0
  %4843 = vmatprep.subr.mxu0 0.0
  %4844 = vmatpush1.msra.mxu0 0.0
  %4845 = vmatprep.subr.mxu0 0.0
  %4846 = vmatpush1.msra.mxu0 0.0
  %4847 = vmatprep.subr.mxu0 0.0
  %4848 = vmatpush1.msra.mxu0 0.0
  %4849 = vmatprep.subr.mxu0 0.0
  %4850 = vmatpush1.msra.mxu0 0.0
  %4851 = vmatprep.subr.mxu0 0.0
  %4852 = vmatpush1.msra.mxu0 0.0
  %4853 = vmatprep.subr.mxu0 0.0
  %4854 = vmatpush1.msra.mxu0 0.0
  %4855 = vmatprep.subr.mxu0 0.0
  %4856 = vmatpush1.msra.mxu0 0.0
  %4857 = vmatprep.subr.mxu0 0.0
  %4858 = vmatpush1.msra.mxu0 0.0
  %4859 = vmatprep.subr.mxu0 0.0
  %4860 = vmatpush1.msra.mxu0 0.0
  %4861 = vmatprep.subr.mxu0 0.0
  %4862 = vmatpush1.msra.mxu0 0.0
  %4863 = vmatprep.subr.mxu0 0.0
  %4864 = vmatpush1.msra.mxu0 0.0
  %4865 = vmatprep.subr.mxu0 0.0
  %4866 = vmatpush1.msra.mxu0 0.0
  %4867 = vmatprep.subr.mxu0 0.0
  %4868 = vmatpush1.msra.mxu0 0.0
  %4869 = vmatprep.subr.mxu0 0.0
  %4870 = vmatpush1.msra.mxu0 0.0
  %4871 = vmatprep.subr.mxu0 0.0
  %4872 = vmatpush1.msra.mxu0 0.0
  %4873 = vmatprep.subr.mxu0 0.0
  %4874 = vmatpush1.msra.mxu0 0.0
  %4875 = vmatprep.subr.mxu0 0.0
  %4876 = vmatpush1.msra.mxu0 0.0
  %4877 = vmatprep.subr.mxu0 0.0
  %4878 = vmatpush1.msra.mxu0 0.0
  %4879 = vmatprep.subr.mxu0 0.0
  %4880 = vmatpush1.msra.mxu0 0.0
  %4881 = vmatprep.subr.mxu0 0.0
  %4882 = vmatpush1.msra.mxu0 0.0
  %4883 = vmatprep.subr.mxu0 0.0
  %4884 = vmatpush1.msra.mxu0 0.0
  %4885 = vmatprep.subr.mxu0 0.0
  %4886 = vmatpush1.msra.mxu0 0.0
  %4887 = vmatprep.mubr.f32.mxu0 0.0
  %4888 = vmatmul.mubr.f32.gmra.mrb[0].mxu0 %v4812
  %v4889 = vpop.f32.mrb[0].mxu0
  %v4890 = vadd.f32 %v4809, %v4889
  %v4891 = vpop.f32.mrb[0].mxu0
  %4892 = vmatprep.mubr.f32.mxu0 0.0
  %4893 = vmatmul.mubr.f32.gmra.mrb[0].mxu0 %v4815
  %v4894 = vpop.f32.mrb[0].mxu0
  %v4895 = vadd.f32 %v4809, %v4894
  %v4896 = vpop.f32.mrb[0].mxu0
  %4897 = vmatprep.mubr.f32.mxu0 0.0
  %4898 = vmatmul.mubr.f32.gmra.mrb[0].mxu0 %v4818
  %v4899 = vpop.f32.mrb[0].mxu0
  %v4900 = vadd.f32 %v4809, %v4899
  %v4901 = vpop.f32.mrb[0].mxu0
  %4902 = vmatprep.mubr.f32.mxu0 0.0
  %4903 = vmatmul.mubr.f32.gmra.mrb[0].mxu0 %v4821
  %v4904 = vpop.f32.mrb[0].mxu0
  %v4905 = vadd.f32 %v4809, %v4904
  %v4906 = vpop.f32.mrb[0].mxu0
  %4907 = vdwg.mxu0
  %v4908 = vmul.f32 %v4890, %v4890
  %v4909 = vmul.f32 %v4895, %v4895
  %v4910 = vmul.f32 %v4900, %v4900
  %v4911 = vmul.f32 %v4905, %v4905
  %v4912 = vmul.f32 %v4890, %v4908
  %v4913 = vmul.f32 %v4895, %v4909
  %v4914 = vmul.f32 %v4900, %v4910
  %v4915 = vmul.f32 %v4905, %v4911
  %v4916 = vmul.f32 %v4912, 0.044715
  %v4917 = vmul.f32 %v4913, 0.044715
  %v4918 = vmul.f32 %v4914, 0.044715
  %v4919 = vmul.f32 %v4915, 0.044715
  %v4920 = vadd.f32 %v4890, %v4916
  %v4921 = vadd.f32 %v4895, %v4917
  %v4922 = vadd.f32 %v4900, %v4918
  %v4923 = vadd.f32 %v4905, %v4919
  %v4924 = vmul.f32 %v4920, 0.7978846
  %v4925 = vmul.f32 %v4921, 0.7978846
  %v4926 = vmul.f32 %v4922, 0.7978846
  %v4927 = vmul.f32 %v4923, 0.7978846
  %v4928 = vtanh.pop %v4924
  %v4929 = vtanh.pop %v4925
  %v4930 = vtanh.pop %v4926
  %v4931 = vtanh.pop %v4927
  %v4932 = vadd.f32 %v4928, 1.0
  %v4933 = vadd.f32 %v4929, 1.0
  %v4934 = vadd.f32 %v4930, 1.0
  %v4935 = vadd.f32 %v4931, 1.0
  %v4936 = vmul.f32 %v4932, 0.5
  %v4937 = vmul.f32 %v4933, 0.5
  %v4938 = vmul.f32 %v4934, 0.5
  %v4939 = vmul.f32 %v4935, 0.5
  %v4940 = vmul.f32 %v4890, %v4936
  %v4941 = vmul.f32 %v4895, %v4937
  %v4942 = vmul.f32 %v4900, %v4938
  %v4943 = vmul.f32 %v4905, %v4939
  %s4944 = scalar_lea.vmem %s15, 64
  %v4945 = vld [vmem:[%s4944] sm:$0xff]
  %v4946 = vld [vmem:[%s4944 + $0x8] sm:$0xff]
  %v4947 = vld [vmem:[%s4944 + $0x10] sm:$0xff]
  %v4948 = vld [vmem:[%s4944 + $0x18] sm:$0xff]
  %v4949 = vld [vmem:[%s4944 + $0x20] sm:$0xff]
  %v4950 = vld [vmem:[%s4944 + $0x28] sm:$0xff]
  %v4951 = vld [vmem:[%s4944 + $0x30] sm:$0xff]
  %v4952 = vld [vmem:[%s4944 + $0x38] sm:$0xff]
  %s4953 = scalar_lea.vmem %s16, 1
  %v4954 = vld [vmem:[%s4953] sm:$0x1]
  %v4956 = vlaneseq
  %v4957 = vshrl.u32 %v4956, 7
  %v4958 = vsub.s32 0, %v4957
  %v4959 = vrot.slane %v4954, %v4958
  %v4962 = vsel %vm2549, %v4940, 0
  %v4965 = vsel %vm2549, %v4941, 0
  %v4968 = vsel %vm2549, %v4942, 0
  %v4971 = vsel %vm2549, %v4943, 0
  %4973 = vmatprep.subr.mxu0 0.0
  %4974 = vmatpush1.msra.mxu0 %v4945
  %4975 = vmatprep.subr.mxu0 0.0
  %4976 = vmatpush1.msra.mxu0 %v4946
  %4977 = vmatprep.subr.mxu0 0.0
  %4978 = vmatpush1.msra.mxu0 %v4947
  %4979 = vmatprep.subr.mxu0 0.0
  %4980 = vmatpush1.msra.mxu0 %v4948
  %4981 = vmatprep.subr.mxu0 0.0
  %4982 = vmatpush1.msra.mxu0 %v4949
  %4983 = vmatprep.subr.mxu0 0.0
  %4984 = vmatpush1.msra.mxu0 %v4950
  %4985 = vmatprep.subr.mxu0 0.0
  %4986 = vmatpush1.msra.mxu0 %v4951
  %4987 = vmatprep.subr.mxu0 0.0
  %4988 = vmatpush1.msra.mxu0 %v4952
  %4989 = vmatprep.subr.mxu0 0.0
  %4990 = vmatpush1.msra.mxu0 0.0
  %4991 = vmatprep.subr.mxu0 0.0
  %4992 = vmatpush1.msra.mxu0 0.0
  %4993 = vmatprep.subr.mxu0 0.0
  %4994 = vmatpush1.msra.mxu0 0.0
  %4995 = vmatprep.subr.mxu0 0.0
  %4996 = vmatpush1.msra.mxu0 0.0
  %4997 = vmatprep.subr.mxu0 0.0
  %4998 = vmatpush1.msra.mxu0 0.0
  %4999 = vmatprep.subr.mxu0 0.0
  %5000 = vmatpush1.msra.mxu0 0.0
  %5001 = vmatprep.subr.mxu0 0.0
  %5002 = vmatpush1.msra.mxu0 0.0
  %5003 = vmatprep.subr.mxu0 0.0
  %5004 = vmatpush1.msra.mxu0 0.0
  %5005 = vmatprep.subr.mxu0 0.0
  %5006 = vmatpush1.msra.mxu0 0.0
  %5007 = vmatprep.subr.mxu0 0.0
  %5008 = vmatpush1.msra.mxu0 0.0
  %5009 = vmatprep.subr.mxu0 0.0
  %5010 = vmatpush1.msra.mxu0 0.0
  %5011 = vmatprep.subr.mxu0 0.0
  %5012 = vmatpush1.msra.mxu0 0.0
  %5013 = vmatprep.subr.mxu0 0.0
  %5014 = vmatpush1.msra.mxu0 0.0
  %5015 = vmatprep.subr.mxu0 0.0
  %5016 = vmatpush1.msra.mxu0 0.0
  %5017 = vmatprep.subr.mxu0 0.0
  %5018 = vmatpush1.msra.mxu0 0.0
  %5019 = vmatprep.subr.mxu0 0.0
  %5020 = vmatpush1.msra.mxu0 0.0
  %5021 = vmatprep.subr.mxu0 0.0
  %5022 = vmatpush1.msra.mxu0 0.0
  %5023 = vmatprep.subr.mxu0 0.0
  %5024 = vmatpush1.msra.mxu0 0.0
  %5025 = vmatprep.subr.mxu0 0.0
  %5026 = vmatpush1.msra.mxu0 0.0
  %5027 = vmatprep.subr.mxu0 0.0
  %5028 = vmatpush1.msra.mxu0 0.0
  %5029 = vmatprep.subr.mxu0 0.0
  %5030 = vmatpush1.msra.mxu0 0.0
  %5031 = vmatprep.subr.mxu0 0.0
  %5032 = vmatpush1.msra.mxu0 0.0
  %5033 = vmatprep.subr.mxu0 0.0
  %5034 = vmatpush1.msra.mxu0 0.0
  %5035 = vmatprep.subr.mxu0 0.0
  %5036 = vmatpush1.msra.mxu0 0.0
  %5037 = vmatprep.mubr.f32.mxu0 0.0
  %5038 = vmatmul.mubr.f32.gmra.mrb[0].mxu0 %v4962
  %v5039 = vpop.f32.mrb[0].mxu0
  %v5040 = vadd.f32 %v4959, %v5039
  %v5041 = vpop.f32.mrb[0].mxu0
  %5042 = vmatprep.mubr.f32.mxu0 0.0
  %5043 = vmatmul.mubr.f32.gmra.mrb[0].mxu0 %v4965
  %v5044 = vpop.f32.mrb[0].mxu0
  %v5045 = vadd.f32 %v4959, %v5044
  %v5046 = vpop.f32.mrb[0].mxu0
  %5047 = vmatprep.mubr.f32.mxu0 0.0
  %5048 = vmatmul.mubr.f32.gmra.mrb[0].mxu0 %v4968
  %v5049 = vpop.f32.mrb[0].mxu0
  %v5050 = vadd.f32 %v4959, %v5049
  %v5051 = vpop.f32.mrb[0].mxu0
  %5052 = vmatprep.mubr.f32.mxu0 0.0
  %5053 = vmatmul.mubr.f32.gmra.mrb[0].mxu0 %v4971
  %v5054 = vpop.f32.mrb[0].mxu0
  %v5055 = vadd.f32 %v4959, %v5054
  %v5056 = vpop.f32.mrb[0].mxu0
  %5057 = vdwg.mxu0
  %v5058 = vadd.f32 %v5040, %v4794
  %v5059 = vadd.f32 %v5045, %v4795
  %v5060 = vadd.f32 %v5050, %v4796
  %v5061 = vadd.f32 %v5055, %v4797
  %s5062 = scalar_lea.vmem %s17, 1
  %v5063 = vld [vmem:[%s5062] sm:$0x1]
  %s5064 = scalar_lea.vmem %s18, 1
  %v5065 = vld [vmem:[%s5064] sm:$0x1]
  %v5066 = vsel %vm269, %v5058, 0.0
  %5067 = vadd.xlane.f32.xlu0 %v5066
  %v5068 = vpop.xlane.xlu0 %5067
  %v5069 = vsel %vm269, %v5059, 0.0
  %5070 = vadd.xlane.f32.xlu0 %v5069
  %v5071 = vpop.xlane.xlu0 %5070
  %v5072 = vsel %vm269, %v5060, 0.0
  %5073 = vadd.xlane.f32.xlu0 %v5072
  %v5074 = vpop.xlane.xlu0 %5073
  %v5075 = vsel %vm269, %v5061, 0.0
  %5076 = vadd.xlane.f32.xlu0 %v5075
  %v5077 = vpop.xlane.xlu0 %5076
  %v5078 = vmul.f32 %v5068, %v282
  %v5079 = vmul.f32 %v5071, %v282
  %v5080 = vmul.f32 %v5074, %v282
  %v5081 = vmul.f32 %v5077, %v282
  %v5082 = vsub.f32 %v5058, %v5078
  %v5083 = vsub.f32 %v5059, %v5079
  %v5084 = vsub.f32 %v5060, %v5080
  %v5085 = vsub.f32 %v5061, %v5081
  %v5086 = vmul.f32 %v5082, %v5082
  %v5087 = vmul.f32 %v5083, %v5083
  %v5088 = vmul.f32 %v5084, %v5084
  %v5089 = vmul.f32 %v5085, %v5085
  %v5090 = vsel %vm269, %v5086, 0.0
  %5091 = vadd.xlane.f32.xlu0 %v5090
  %v5092 = vpop.xlane.xlu0 %5091
  %v5093 = vsel %vm269, %v5087, 0.0
  %5094 = vadd.xlane.f32.xlu0 %v5093
  %v5095 = vpop.xlane.xlu0 %5094
  %v5096 = vsel %vm269, %v5088, 0.0
  %5097 = vadd.xlane.f32.xlu0 %v5096
  %v5098 = vpop.xlane.xlu0 %5097
  %v5099 = vsel %vm269, %v5089, 0.0
  %5100 = vadd.xlane.f32.xlu0 %v5099
  %v5101 = vpop.xlane.xlu0 %5100
  %v5102 = vmul.f32 %v5092, %v282
  %v5103 = vmul.f32 %v5095, %v282
  %v5104 = vmul.f32 %v5098, %v282
  %v5105 = vmul.f32 %v5101, %v282
  %v5106 = vadd.f32 %v5102, 1e-05
  %v5107 = vadd.f32 %v5103, 1e-05
  %v5108 = vadd.f32 %v5104, 1e-05
  %v5109 = vadd.f32 %v5105, 1e-05
  %v5110 = vrsqrt.pop %v5106
  %v5111 = vrsqrt.pop %v5107
  %v5112 = vrsqrt.pop %v5108
  %v5113 = vrsqrt.pop %v5109
  %v5114 = vmul.f32 %v5082, %v5110
  %v5115 = vmul.f32 %v5083, %v5111
  %v5116 = vmul.f32 %v5084, %v5112
  %v5117 = vmul.f32 %v5085, %v5113
  %v5119 = vlaneseq
  %v5120 = vshrl.u32 %v5119, 7
  %v5121 = vsub.s32 0, %v5120
  %v5122 = vrot.slane %v5063, %v5121
  %v5124 = vmul.f32 %v5114, %v5122
  %v5125 = vmul.f32 %v5115, %v5122
  %v5126 = vmul.f32 %v5116, %v5122
  %v5127 = vmul.f32 %v5117, %v5122
  %v5129 = vlaneseq
  %v5130 = vshrl.u32 %v5129, 7
  %v5131 = vsub.s32 0, %v5130
  %v5132 = vrot.slane %v5065, %v5131
  %v5134 = vadd.f32 %v5124, %v5132
  %v5135 = vadd.f32 %v5125, %v5132
  %v5136 = vadd.f32 %v5126, %v5132
  %v5137 = vadd.f32 %v5127, %v5132
  %5142 = vrot.lane.b32.xlu0 %v5134, 64
  %v5143 = vpop.permute.xlu0 %5142
  %5144 = vrot.lane.b32.xlu0 %v5135, 64
  %v5145 = vpop.permute.xlu0 %5144
  %5146 = vrot.lane.b32.xlu0 %v5136, 64
  %v5147 = vpop.permute.xlu0 %5146
  %5148 = vrot.lane.b32.xlu0 %v5137, 64
  %v5149 = vpop.permute.xlu0 %5148
  %vm5154 = vcmask 785920
  %5155 = vst.msk [vmem:[%s24] sm:$0xff] %vm5154, %v5143
  %5156 = vst.msk [vmem:[%s24 + $0x8] sm:$0xff] %vm5154, %v5145
  %5157 = vst.msk [vmem:[%s24 + $0x10] sm:$0xff] %vm5154, %v5147
  %5158 = vst.msk [vmem:[%s24 + $0x18] sm:$0xff] %vm5154, %v5149
  %v5159 = vrot.slane %v5136, 7
  %vm5161 = vcmask 1040384
  %v5162 = vsel %vm5161, %v5134, %v5159
  %v5163 = vld [vmem:[%s19] sm:$0xff]
  %v5164 = vld [vmem:[%s19 + $0x8] sm:$0xff]
  %v5165 = vld [vmem:[%s19 + $0x10] sm:$0xff]
  %v5166 = vld [vmem:[%s19 + $0x18] sm:$0xff]
  %v5167 = vld [vmem:[%s20] sm:$0x1]
  %v5169 = vlaneseq
  %v5170 = vshrl.u32 %v5169, 7
  %v5171 = vsub.s32 0, %v5170
  %v5172 = vrot.slane %v5167, %v5171
  %v5175 = vsel %vm269, %v5162, 0
  %5177 = vmatprep.subr.mxu0 0.0
  %5178 = vmatpush1.msra.mxu0 %v5163
  %5179 = vmatprep.subr.mxu0 0.0
  %5180 = vmatpush1.msra.mxu0 %v5164
  %5181 = vmatprep.subr.mxu0 0.0
  %5182 = vmatpush1.msra.mxu0 %v5165
  %5183 = vmatprep.subr.mxu0 0.0
  %5184 = vmatpush1.msra.mxu0 %v5166
  %5185 = vmatprep.subr.mxu0 0.0
  %5186 = vmatpush1.msra.mxu0 0.0
  %5187 = vmatprep.subr.mxu0 0.0
  %5188 = vmatpush1.msra.mxu0 0.0
  %5189 = vmatprep.subr.mxu0 0.0
  %5190 = vmatpush1.msra.mxu0 0.0
  %5191 = vmatprep.subr.mxu0 0.0
  %5192 = vmatpush1.msra.mxu0 0.0
  %5193 = vmatprep.subr.mxu0 0.0
  %5194 = vmatpush1.msra.mxu0 0.0
  %5195 = vmatprep.subr.mxu0 0.0
  %5196 = vmatpush1.msra.mxu0 0.0
  %5197 = vmatprep.subr.mxu0 0.0
  %5198 = vmatpush1.msra.mxu0 0.0
  %5199 = vmatprep.subr.mxu0 0.0
  %5200 = vmatpush1.msra.mxu0 0.0
  %5201 = vmatprep.subr.mxu0 0.0
  %5202 = vmatpush1.msra.mxu0 0.0
  %5203 = vmatprep.subr.mxu0 0.0
  %5204 = vmatpush1.msra.mxu0 0.0
  %5205 = vmatprep.subr.mxu0 0.0
  %5206 = vmatpush1.msra.mxu0 0.0
  %5207 = vmatprep.subr.mxu0 0.0
  %5208 = vmatpush1.msra.mxu0 0.0
  %5209 = vmatprep.subr.mxu0 0.0
  %5210 = vmatpush1.msra.mxu0 0.0
  %5211 = vmatprep.subr.mxu0 0.0
  %5212 = vmatpush1.msra.mxu0 0.0
  %5213 = vmatprep.subr.mxu0 0.0
  %5214 = vmatpush1.msra.mxu0 0.0
  %5215 = vmatprep.subr.mxu0 0.0
  %5216 = vmatpush1.msra.mxu0 0.0
  %5217 = vmatprep.subr.mxu0 0.0
  %5218 = vmatpush1.msra.mxu0 0.0
  %5219 = vmatprep.subr.mxu0 0.0
  %5220 = vmatpush1.msra.mxu0 0.0
  %5221 = vmatprep.subr.mxu0 0.0
  %5222 = vmatpush1.msra.mxu0 0.0
  %5223 = vmatprep.subr.mxu0 0.0
  %5224 = vmatpush1.msra.mxu0 0.0
  %5225 = vmatprep.subr.mxu0 0.0
  %5226 = vmatpush1.msra.mxu0 0.0
  %5227 = vmatprep.subr.mxu0 0.0
  %5228 = vmatpush1.msra.mxu0 0.0
  %5229 = vmatprep.subr.mxu0 0.0
  %5230 = vmatpush1.msra.mxu0 0.0
  %5231 = vmatprep.subr.mxu0 0.0
  %5232 = vmatpush1.msra.mxu0 0.0
  %5233 = vmatprep.subr.mxu0 0.0
  %5234 = vmatpush1.msra.mxu0 0.0
  %5235 = vmatprep.subr.mxu0 0.0
  %5236 = vmatpush1.msra.mxu0 0.0
  %5237 = vmatprep.subr.mxu0 0.0
  %5238 = vmatpush1.msra.mxu0 0.0
  %5239 = vmatprep.subr.mxu0 0.0
  %5240 = vmatpush1.msra.mxu0 0.0
  %5241 = vmatprep.mubr.f32.mxu0 0.0
  %5242 = vmatmul.mubr.f32.gmra.mrb[0].mxu0 %v5175
  %v5243 = vpop.f32.mrb[0].mxu0
  %v5244 = vadd.f32 %v5172, %v5243
  %v5245 = vpop.f32.mrb[0].mxu0
  %5246 = vdwg.mxu0
  %v5247 = vtanh.pop %v5244
  %v5248 = vld [vmem:[%s21] sm:$0xff]
  %v5249 = vld [vmem:[%s21 + $0x8] sm:$0xff]
  %v5250 = vld [vmem:[%s21 + $0x10] sm:$0xff]
  %v5251 = vld [vmem:[%s21 + $0x18] sm:$0xff]
  %v5252 = vld [vmem:[%s22] sm:$0x1]
  %v5254 = vlaneseq
  %v5255 = vshrl.u32 %v5254, 7
  %v5256 = vsub.s32 0, %v5255
  %v5257 = vrot.slane %v5252, %v5256
  %v5260 = vsel %vm269, %v5247, 0
  %5262 = vmatprep.subr.mxu0 0.0
  %5263 = vmatpush1.msra.mxu0 %v5248
  %5264 = vmatprep.subr.mxu0 0.0
  %5265 = vmatpush1.msra.mxu0 %v5249
  %5266 = vmatprep.subr.mxu0 0.0
  %5267 = vmatpush1.msra.mxu0 %v5250
  %5268 = vmatprep.subr.mxu0 0.0
  %5269 = vmatpush1.msra.mxu0 %v5251
  %5270 = vmatprep.subr.mxu0 0.0
  %5271 = vmatpush1.msra.mxu0 0.0
  %5272 = vmatprep.subr.mxu0 0.0
  %5273 = vmatpush1.msra.mxu0 0.0
  %5274 = vmatprep.subr.mxu0 0.0
  %5275 = vmatpush1.msra.mxu0 0.0
  %5276 = vmatprep.subr.mxu0 0.0
  %5277 = vmatpush1.msra.mxu0 0.0
  %5278 = vmatprep.subr.mxu0 0.0
  %5279 = vmatpush1.msra.mxu0 0.0
  %5280 = vmatprep.subr.mxu0 0.0
  %5281 = vmatpush1.msra.mxu0 0.0
  %5282 = vmatprep.subr.mxu0 0.0
  %5283 = vmatpush1.msra.mxu0 0.0
  %5284 = vmatprep.subr.mxu0 0.0
  %5285 = vmatpush1.msra.mxu0 0.0
  %5286 = vmatprep.subr.mxu0 0.0
  %5287 = vmatpush1.msra.mxu0 0.0
  %5288 = vmatprep.subr.mxu0 0.0
  %5289 = vmatpush1.msra.mxu0 0.0
  %5290 = vmatprep.subr.mxu0 0.0
  %5291 = vmatpush1.msra.mxu0 0.0
  %5292 = vmatprep.subr.mxu0 0.0
  %5293 = vmatpush1.msra.mxu0 0.0
  %5294 = vmatprep.subr.mxu0 0.0
  %5295 = vmatpush1.msra.mxu0 0.0
  %5296 = vmatprep.subr.mxu0 0.0
  %5297 = vmatpush1.msra.mxu0 0.0
  %5298 = vmatprep.subr.mxu0 0.0
  %5299 = vmatpush1.msra.mxu0 0.0
  %5300 = vmatprep.subr.mxu0 0.0
  %5301 = vmatpush1.msra.mxu0 0.0
  %5302 = vmatprep.subr.mxu0 0.0
  %5303 = vmatpush1.msra.mxu0 0.0
  %5304 = vmatprep.subr.mxu0 0.0
  %5305 = vmatpush1.msra.mxu0 0.0
  %5306 = vmatprep.subr.mxu0 0.0
  %5307 = vmatpush1.msra.mxu0 0.0
  %5308 = vmatprep.subr.mxu0 0.0
  %5309 = vmatpush1.msra.mxu0 0.0
  %5310 = vmatprep.subr.mxu0 0.0
  %5311 = vmatpush1.msra.mxu0 0.0
  %5312 = vmatprep.subr.mxu0 0.0
  %5313 = vmatpush1.msra.mxu0 0.0
  %5314 = vmatprep.subr.mxu0 0.0
  %5315 = vmatpush1.msra.mxu0 0.0
  %5316 = vmatprep.subr.mxu0 0.0
  %5317 = vmatpush1.msra.mxu0 0.0
  %5318 = vmatprep.subr.mxu0 0.0
  %5319 = vmatpush1.msra.mxu0 0.0
  %5320 = vmatprep.subr.mxu0 0.0
  %5321 = vmatpush1.msra.mxu0 0.0
  %5322 = vmatprep.subr.mxu0 0.0
  %5323 = vmatpush1.msra.mxu0 0.0
  %5324 = vmatprep.subr.mxu0 0.0
  %5325 = vmatpush1.msra.mxu0 0.0
  %5326 = vmatprep.mubr.f32.mxu0 0.0
  %5327 = vmatmul.mubr.f32.gmra.mrb[0].mxu0 %v5260
  %v5328 = vpop.f32.mrb[0].mxu0
  %v5329 = vadd.f32 %v5257, %v5328
  %v5330 = vpop.f32.mrb[0].mxu0
  %5331 = vdwg.mxu0
  %v5332 = vxor.u32 %v5329, 2147483648
  %v5333 = vmul.f32 %v5332, 1.442695
  %v5334 = vpow.pop %v5333
  %v5335 = vadd.f32 %v5334, 1.0
  %v5336 = vrcp.pop %v5335
  %v5337 = vmul.f32 1.0, %v5336
  %vm5338 = vcmask 9216
  %5339 = vst.msk [vmem:[%s23] sm:$0x3] %vm5338, %v5337
  // Predicated region
  $region94: #{_lambda_.1} parent=0 // pred_check
    _
  $region95: #{_lambda_.1} parent=0 // pred_check_branch
    %5341 = sbr.rel (0) target = $region97
  $region96: #{_lambda_.1} parent=0 // pred_region
    _
  $region97: #{_lambda_.1} parent=0 // pred_fallthru
    _
  // Predicated region
  $region98: #{_lambda_.1} parent=0 // pred_check
    _
  $region99: #{_lambda_.1} parent=0 // pred_check_branch
    %5343 = sbr.rel (0) target = $region101
  $region100: #{_lambda_.1} parent=0 // pred_region
    _
  $region101: #{_lambda_.1} parent=0 // pred_fallthru
    _
  // Predicated region
  $region102: #{_lambda_.1} parent=0 // pred_check
    _
  $region103: #{_lambda_.1} parent=0 // pred_check_branch
    %5345 = sbr.rel (0) target = $region105
  $region104: #{_lambda_.1} parent=0 // pred_region
    _
  $region105: #{_lambda_.1} parent=0 // pred_fallthru
    _
  // Predicated region
  $region106: #{_lambda_.1} parent=0 // pred_check
    _
  $region107: #{_lambda_.1} parent=0 // pred_check_branch
    %5347 = sbr.rel (0) target = $region109
  $region108: #{_lambda_.1} parent=0 // pred_region
    _
  $region109: #{_lambda_.1} parent=0 // pred_fallthru
    _
  // Predicated region
  $region110: #{_lambda_.1} parent=0 // pred_check
    _
  $region111: #{_lambda_.1} parent=0 // pred_check_branch
    %5349 = sbr.rel (0) target = $region113
  $region112: #{_lambda_.1} parent=0 // pred_region
    _
  $region113: #{_lambda_.1} parent=0 // pred_fallthru
    _
  // Predicated region
  $region114: #{_lambda_.1} parent=0 // pred_check
    _
  $region115: #{_lambda_.1} parent=0 // pred_check_branch
    %5351 = sbr.rel (0) target = $region117
  $region116: #{_lambda_.1} parent=0 // pred_region
    _
  $region117: #{_lambda_.1} parent=0 // pred_fallthru
    _

</llo_original>
